<compile_context>
chip_gen: v7x
topology: tpu7x:2x2x1
jax: 0.10.0
libtpu: 0.0.40
codegen_flags: <defaults>
</compile_context>

<pallas_src>
import math

import jax
import jax.numpy as jnp
from jax.experimental import pallas as pl
from jax.experimental.pallas import tpu as pltpu

# ---------------- scaled-down config (real backbone: d_model=768, depth=12) ---
B = 2                          # batch
C_IN = 3                       # image channels
IMG = 16                       # image spatial size
PATCH = 4                      # patch size
N_PATCH = (IMG // PATCH) ** 2  # 16 patches
SEQ = N_PATCH + 1              # +1 cls token = 17
SEQ_PAD = 24                   # padded to a multiple of 8 sublanes
ROWS = B * SEQ_PAD             # 48: batch folded into the row (sublane) axis
D = 64                         # d_model
HEADS = 4
HEAD_DIM = D // HEADS          # 16
MLP_HIDDEN = 4 * D             # 256
FFN_NUM = 16                   # adapter bottleneck ('ffn_num')
ADAPTER_SCALE = 0.1            # ffn_adapter_scalar='0.1'
DEPTH = 2
INIT_CLS = 10                  # proxy_fc (CosineLinear) classes = args['init_cls']
CLS_PAD = 128                  # logits padded to a full lane tile, sliced in wrapper
LN_EPS = 1e-6
K_PATCH = C_IN * PATCH * PATCH # 48
NEG_INF = -1e30

# MXU operand dtype (bf16 on v5e/v6e/v7x; set jnp.float32 for exact parity runs).
MATMUL_DTYPE = jnp.bfloat16


# ------------------------------ fused kernel ----------------------------------
def _fused_kernel(
    patches_ref, pe_w_ref, pe_b_ref, cls_ref, pos_ref, bias_ref,
    ln1g_ref, ln1b_ref, wqkv_ref, bqkv_ref, wo_ref, bo_ref,
    ln2g_ref, ln2b_ref, w1_ref, b1_ref, w2_ref, b2_ref,
    wd_ref, bd_ref, wu_ref, bu_ref,
    lnfg_ref, lnfb_ref, fcw_ref, sigma_ref,
    feat_ref, logit_ref,
    x_scr,
):
    d = pl.program_id(0)

    def mm(a, w):
        # bf16 (or f32) MXU operands, f32 accumulation.
        return jnp.dot(a.astype(MATMUL_DTYPE), w,
                       preferred_element_type=jnp.float32)

    def layernorm(v, g, bias):
        mu = jnp.mean(v, axis=-1, keepdims=True)
        vc = v - mu
        var = jnp.mean(vc * vc, axis=-1, keepdims=True)
        return vc * jax.lax.rsqrt(var + LN_EPS) * g + bias

    # ---- step 0: patch-embed + cls token + positional embedding --------------
    # Direct pl.ds stores into the scratch (no sublane concat of 1/16/7 row blocks).
    @pl.when(d == 0)
    def _():
        tok = mm(patches_ref[...], pe_w_ref[...]) + pe_b_ref[...]   # (B*N_PATCH, D)
        x_scr[...] = jnp.zeros((ROWS, D), jnp.float32)              # pad rows := 0
        for b in range(B):                                          # B=2, unrolled
            x_scr[pl.ds(b * SEQ_PAD, 1), :] = cls_ref[...] + pos_ref[0:1, :]
            x_scr[pl.ds(b * SEQ_PAD + 1, N_PATCH), :] = (
                tok[b * N_PATCH:(b + 1) * N_PATCH, :] + pos_ref[1:SEQ, :])

    # ---- transformer block d (attention + MLP + MoTE sequential adapter) -----
    x = x_scr[...]                                                  # (ROWS, D) f32

    xn = layernorm(x, ln1g_ref[...], ln1b_ref[...])

    # fused QKV projection: (ROWS, D) @ (D, 3D); columns = [Wq | Wk | Wv],
    # heads contiguous HEAD_DIM blocks within each.
    qkv = mm(xn, wqkv_ref[...]) + bqkv_ref[...]                     # (ROWS, 3D)

    scale = 1.0 / math.sqrt(HEAD_DIM)
    bias = bias_ref[...]   # (ROWS, ROWS): 0 for same-batch valid keys, -1e30 else

    heads_out = []
    for h in range(HEADS):                                          # 4x, unrolled
        q_h = (qkv[:, h * HEAD_DIM:(h + 1) * HEAD_DIM]
               * scale).astype(MATMUL_DTYPE)
        k_h = qkv[:, D + h * HEAD_DIM:D + (h + 1) * HEAD_DIM].astype(MATMUL_DTYPE)
        v_h = qkv[:, 2 * D + h * HEAD_DIM:2 * D + (h + 1) * HEAD_DIM].astype(MATMUL_DTYPE)
        # One plain 2-D NT matmul over batch-folded rows (fits a single MXU tile);
        # cross-batch / padded-key entries zeroed by the additive bias + softmax.
        s = jax.lax.dot_general(q_h, k_h, (((1,), (1,)), ((), ())),
                                preferred_element_type=jnp.float32) + bias
        s = s - jnp.max(s, axis=-1, keepdims=True)
        p = jnp.exp(s)
        p = p * pl.reciprocal(jnp.sum(p, axis=-1, keepdims=True), approx=True)
        o_h = jnp.dot(p.astype(MATMUL_DTYPE), v_h,
                      preferred_element_type=jnp.float32)           # (ROWS, HEAD_DIM)
        heads_out.append(o_h)

    attn = jnp.concatenate(heads_out, axis=-1)                      # (ROWS, D)
    attn = mm(attn, wo_ref[...]) + bo_ref[...]                      # fused out-proj
    x = x + attn

    xn2 = layernorm(x, ln2g_ref[...], ln2b_ref[...])
    # TODO(synk): timm's nn.GELU is exact erf; tanh approximation used for lowering.
    hmid = jax.nn.gelu(mm(xn2, w1_ref[...]) + b1_ref[...], approximate=True)
    m = mm(hmid, w2_ref[...]) + b2_ref[...]

    # MoTE sequential adapter: down -> ReLU -> up, scaled by 0.1, residual on m.
    ad = jnp.maximum(mm(m, wd_ref[...]) + bd_ref[...], 0.0)
    up = (mm(ad, wu_ref[...]) + bu_ref[...]) * ADAPTER_SCALE

    x_out = x + m + up
    x_scr[...] = x_out

    # ---- last step: final LayerNorm + CosineLinear proxy head ----------------
    @pl.when(d == DEPTH - 1)
    def _():
        # cls rows sit at tile-aligned offsets b*SEQ_PAD -> reshape+slice gather.
        cls_tok = x_out.reshape(B, SEQ_PAD, D)[:, 0:1, :].reshape(B, D)
        feat = layernorm(cls_tok, lnfg_ref[...], lnfb_ref[...])
        feat_ref[...] = feat

        # CosineLinear: sigma * normalize(feat) @ normalize(W).T  (f32, runs once;
        # padded class rows of W are zero -> zero logits, sliced off in wrapper).
        xhat = feat * jax.lax.rsqrt(
            jnp.maximum(jnp.sum(feat * feat, axis=-1, keepdims=True), 1e-24))
        w = fcw_ref[...]                                            # (CLS_PAD, D)
        what = w * jax.lax.rsqrt(
            jnp.maximum(jnp.sum(w * w, axis=-1, keepdims=True), 1e-24))
        logits = jax.lax.dot_general(xhat, what, (((1,), (1,)), ((), ())),
                                     preferred_element_type=jnp.float32)
        logit_ref[...] = logits * sigma_ref[...]


# ------------------------------ parameters ------------------------------------
def init_params(key):
    keys = iter(jax.random.split(key, 64))

    def nrm(shape, scale=0.02):
        return (scale * jax.random.normal(next(keys), shape)).astype(jnp.float32)

    params = {
        # patch-embed conv expressed as matmul; K flattened in (C, P, P) order.
        'pe_w': nrm((K_PATCH, D)).astype(MATMUL_DTYPE),
        'pe_b': jnp.zeros((1, D), jnp.float32),
        'cls': nrm((1, D)),
        'pos': jnp.pad(nrm((SEQ, D)), ((0, SEQ_PAD - SEQ), (0, 0))),
        'lnfg': jnp.ones((1, D), jnp.float32),
        'lnfb': jnp.zeros((1, D), jnp.float32),
        'fc_w': nrm((INIT_CLS, D)),          # CosineLinear weight (out, in), f32
        'sigma': jnp.ones((1, 1), jnp.float32),
        # per-block weights stacked on a leading DEPTH axis; matmul weights bf16.
        'ln1g': jnp.ones((DEPTH, 1, D), jnp.float32),
        'ln1b': jnp.zeros((DEPTH, 1, D), jnp.float32),
        'wqkv': nrm((DEPTH, D, 3 * D)).astype(MATMUL_DTYPE),   # [Wq | Wk | Wv]
        'bqkv': jnp.zeros((DEPTH, 1, 3 * D), jnp.float32),
        'wo': nrm((DEPTH, D, D)).astype(MATMUL_DTYPE),         # concat-heads out-proj
        'bo': jnp.zeros((DEPTH, 1, D), jnp.float32),
        'ln2g': jnp.ones((DEPTH, 1, D), jnp.float32),
        'ln2b': jnp.zeros((DEPTH, 1, D), jnp.float32),
        'w1': nrm((DEPTH, D, MLP_HIDDEN)).astype(MATMUL_DTYPE),
        'b1': jnp.zeros((DEPTH, 1, MLP_HIDDEN), jnp.float32),
        'w2': nrm((DEPTH, MLP_HIDDEN, D)).astype(MATMUL_DTYPE),
        'b2': jnp.zeros((DEPTH, 1, D), jnp.float32),
        # LoRA init zeros the up-projection; nonzero here so the path is exercised.
        'wd': nrm((DEPTH, D, FFN_NUM)).astype(MATMUL_DTYPE),
        'bd': jnp.zeros((DEPTH, 1, FFN_NUM), jnp.float32),
        'wu': nrm((DEPTH, FFN_NUM, D)).astype(MATMUL_DTYPE),
        'bu': jnp.zeros((DEPTH, 1, D), jnp.float32),
    }
    return params


_STACKED = ('ln1g', 'ln1b', 'wqkv', 'bqkv', 'wo', 'bo', 'ln2g', 'ln2b',
            'w1', 'b1', 'w2', 'b2', 'wd', 'bd', 'wu', 'bu')


def _const_spec(shape):
    n = len(shape)
    return pl.BlockSpec(shape, lambda d, n=n: (0,) * n)


def _stacked_spec(shape):
    rest = tuple(shape[1:])
    n = len(rest)
    return pl.BlockSpec((None,) + rest, lambda d, n=n: (d,) + (0,) * n)


def _attn_bias():
    # Additive attention bias for the batch-folded (ROWS, ROWS) scores:
    # 0 where key is in the same image and a real (non-pad) token, -1e30 otherwise.
    tok = jnp.arange(ROWS)
    same_batch = (tok[:, None] // SEQ_PAD) == (tok[None, :] // SEQ_PAD)
    key_valid = (tok[None, :] % SEQ_PAD) < SEQ
    return jnp.where(same_batch & key_valid, 0.0, NEG_INF).astype(jnp.float32)


# ------------------------------ full forward -----------------------------------
def mote_net_forward(x, params):
    """MoteNet.forward(x, test=False):
       features = backbone(x) (ViT-MoTE, cls token, sequential adapter),
       out = proxy_fc(features) (CosineLinear) -> {'logits', 'features'}."""
    bx, c, h, w = x.shape
    # patchify NCHW -> (B*N, C*P*P), matching Conv2d(C, D, kernel=P, stride=P).
    xp = x.reshape(bx, c, h // PATCH, PATCH, w // PATCH, PATCH)
    xp = jnp.transpose(xp, (0, 2, 4, 1, 3, 5)).reshape(bx * N_PATCH, K_PATCH)

    attn_bias = _attn_bias()
    fcw_pad = jnp.pad(params['fc_w'], ((0, CLS_PAD - INIT_CLS), (0, 0)))

    args = [xp, params['pe_w'], params['pe_b'], params['cls'], params['pos'],
            attn_bias]
    in_specs = [_const_spec(a.shape) for a in args]
    for name in _STACKED:
        a = params[name]
        args.append(a)
        in_specs.append(_stacked_spec(a.shape))
    for a in (params['lnfg'], params['lnfb'], fcw_pad, params['sigma']):
        args.append(a)
        in_specs.append(_const_spec(a.shape))

    # TODO(synk): MoTE's test-time multi-expert routing / use_init_ptm ensemble
    # needs the backbone source (vit_mote); only train-path (test=False) here.
    # TODO(synk): at real scale on v7x, add a leading "parallel" batch-tile grid
    # axis (2 TensorCores) and use selective (Buffered(1)) / fp8 weight buffering.
    feats, logits_pad = pl.pallas_call(
        _fused_kernel,
        out_shape=(jax.ShapeDtypeStruct((B, D), jnp.float32),
                   jax.ShapeDtypeStruct((B, CLS_PAD), jnp.float32)),
        grid=(DEPTH,),
        in_specs=in_specs,
        out_specs=(pl.BlockSpec((B, D), lambda d: (0, 0)),
                   pl.BlockSpec((B, CLS_PAD), lambda d: (0, 0))),
        scratch_shapes=[pltpu.VMEM((ROWS, D), jnp.float32)],
        compiler_params=pltpu.CompilerParams(
            dimension_semantics=("arbitrary",),   # depth axis is carried (x_scr)
            vmem_limit_bytes=32 * 1024 * 1024),
    )(*args)
    return {'logits': logits_pad[:, :INIT_CLS], 'features': feats}


if __name__ == "__main__":
    key = jax.random.PRNGKey(0)
    pkey, xkey = jax.random.split(key)
    params = init_params(pkey)
    x = jax.random.normal(xkey, (B, C_IN, IMG, IMG), dtype=jnp.float32)

    out = jax.jit(mote_net_forward)(x, params)
    jax.block_until_ready(out)

    assert out['logits'].shape == (B, INIT_CLS)
    assert out['features'].shape == (B, D)
    assert out['logits'].dtype == jnp.float32
    assert bool(jnp.all(jnp.isfinite(out['logits'])))
    assert bool(jnp.all(jnp.isfinite(out['features'])))
    print("KERNEL_OK")
</pallas_src>

<mosaic_0001>
module attributes {stable_mosaic.version = 11 : i64} {
  func.func @_fused_kernel(%arg0: i32, %arg1: memref<32x48xf32, #tpu.memory_space<vmem>>, %arg2: memref<48x64xbf16, #tpu.memory_space<vmem>>, %arg3: memref<1x64xf32, #tpu.memory_space<vmem>>, %arg4: memref<1x64xf32, #tpu.memory_space<vmem>>, %arg5: memref<24x64xf32, #tpu.memory_space<vmem>>, %arg6: memref<48x48xf32, #tpu.memory_space<vmem>>, %arg7: memref<1x1x64xf32, #tpu.memory_space<vmem>>, %arg8: memref<1x1x64xf32, #tpu.memory_space<vmem>>, %arg9: memref<1x64x192xbf16, #tpu.memory_space<vmem>>, %arg10: memref<1x1x192xf32, #tpu.memory_space<vmem>>, %arg11: memref<1x64x64xbf16, #tpu.memory_space<vmem>>, %arg12: memref<1x1x64xf32, #tpu.memory_space<vmem>>, %arg13: memref<1x1x64xf32, #tpu.memory_space<vmem>>, %arg14: memref<1x1x64xf32, #tpu.memory_space<vmem>>, %arg15: memref<1x64x256xbf16, #tpu.memory_space<vmem>>, %arg16: memref<1x1x256xf32, #tpu.memory_space<vmem>>, %arg17: memref<1x256x64xbf16, #tpu.memory_space<vmem>>, %arg18: memref<1x1x64xf32, #tpu.memory_space<vmem>>, %arg19: memref<1x64x16xbf16, #tpu.memory_space<vmem>>, %arg20: memref<1x1x16xf32, #tpu.memory_space<vmem>>, %arg21: memref<1x16x64xbf16, #tpu.memory_space<vmem>>, %arg22: memref<1x1x64xf32, #tpu.memory_space<vmem>>, %arg23: memref<1x64xf32, #tpu.memory_space<vmem>>, %arg24: memref<1x64xf32, #tpu.memory_space<vmem>>, %arg25: memref<128x64xf32, #tpu.memory_space<vmem>>, %arg26: memref<1x1xf32, #tpu.memory_space<vmem>>, %arg27: memref<2x64xf32, #tpu.memory_space<vmem>>, %arg28: memref<2x128xf32, #tpu.memory_space<vmem>>, %arg29: memref<48x64xf32, #tpu.memory_space<vmem>>) attributes {dimension_semantics = [#tpu.dimension_semantics<arbitrary>], iteration_bounds = array<i64: 2>, scalar_prefetch = 0 : i64, scratch_operands = 1 : i64, tpu.core_type = #tpu.core_type<tc>, window_params = [{pipeline_mode = #tpu.pipeline_mode<synchronous>, transform_indices = @transform_0, window_bounds = array<i64: 32, 48>}, {pipeline_mode = #tpu.pipeline_mode<synchronous>, transform_indices = @transform_1, window_bounds = array<i64: 48, 64>}, {pipeline_mode = #tpu.pipeline_mode<synchronous>, transform_indices = @transform_2, window_bounds = array<i64: 1, 64>}, {pipeline_mode = #tpu.pipeline_mode<synchronous>, transform_indices = @transform_3, window_bounds = array<i64: 1, 64>}, {pipeline_mode = #tpu.pipeline_mode<synchronous>, transform_indices = @transform_4, window_bounds = array<i64: 24, 64>}, {pipeline_mode = #tpu.pipeline_mode<synchronous>, transform_indices = @transform_5, window_bounds = array<i64: 48, 48>}, {transform_indices = @transform_6, window_bounds = array<i64: 1, 1, 64>}, {transform_indices = @transform_7, window_bounds = array<i64: 1, 1, 64>}, {transform_indices = @transform_8, window_bounds = array<i64: 1, 64, 192>}, {transform_indices = @transform_9, window_bounds = array<i64: 1, 1, 192>}, {transform_indices = @transform_10, window_bounds = array<i64: 1, 64, 64>}, {transform_indices = @transform_11, window_bounds = array<i64: 1, 1, 64>}, {transform_indices = @transform_12, window_bounds = array<i64: 1, 1, 64>}, {transform_indices = @transform_13, window_bounds = array<i64: 1, 1, 64>}, {transform_indices = @transform_14, window_bounds = array<i64: 1, 64, 256>}, {transform_indices = @transform_15, window_bounds = array<i64: 1, 1, 256>}, {transform_indices = @transform_16, window_bounds = array<i64: 1, 256, 64>}, {transform_indices = @transform_17, window_bounds = array<i64: 1, 1, 64>}, {transform_indices = @transform_18, window_bounds = array<i64: 1, 64, 16>}, {transform_indices = @transform_19, window_bounds = array<i64: 1, 1, 16>}, {transform_indices = @transform_20, window_bounds = array<i64: 1, 16, 64>}, {transform_indices = @transform_21, window_bounds = array<i64: 1, 1, 64>}, {pipeline_mode = #tpu.pipeline_mode<synchronous>, transform_indices = @transform_22, window_bounds = array<i64: 1, 64>}, {pipeline_mode = #tpu.pipeline_mode<synchronous>, transform_indices = @transform_23, window_bounds = array<i64: 1, 64>}, {pipeline_mode = #tpu.pipeline_mode<synchronous>, transform_indices = @transform_24, window_bounds = array<i64: 128, 64>}, {pipeline_mode = #tpu.pipeline_mode<synchronous>, transform_indices = @transform_25, window_bounds = array<i64: 1, 1>}, {pipeline_mode = #tpu.pipeline_mode<synchronous>, transform_indices = @transform_26, window_bounds = array<i64: 2, 64>}, {pipeline_mode = #tpu.pipeline_mode<synchronous>, transform_indices = @transform_27, window_bounds = array<i64: 2, 128>}]} {
    %c0_i32 = arith.constant 0 : i32
    %0 = arith.cmpi eq, %arg0, %c0_i32 : i32
    %1 = arith.extui %0 : i1 to i32
    %c0_i32_0 = arith.constant 0 : i32
    %2 = arith.cmpi ne, %1, %c0_i32_0 : i32
    scf.if %2 {
      %c0_96 = arith.constant 0 : index
      %c0_97 = arith.constant 0 : index
      %214 = vector.load %arg1[%c0_96, %c0_97] : memref<32x48xf32, #tpu.memory_space<vmem>>, vector<32x48xf32>
      %c0_98 = arith.constant 0 : index
      %c0_99 = arith.constant 0 : index
      %215 = vector.load %arg2[%c0_98, %c0_99] : memref<48x64xbf16, #tpu.memory_space<vmem>>, vector<48x64xbf16>
      %216 = arith.truncf %214 : vector<32x48xf32> to vector<32x48xbf16>
      %cst_100 = arith.constant dense<0.000000e+00> : vector<32x64xf32>
      %217 = tpu.matmul %216, %215, %cst_100 {dimension_numbers = #tpu.dot_dimension_numbers<[1], [0], [0], [1], [0, 0, 1, 1], [], []>} : vector<32x48xbf16>, vector<48x64xbf16>, vector<32x64xf32> -> vector<32x64xf32>
      %c0_101 = arith.constant 0 : index
      %c0_102 = arith.constant 0 : index
      %218 = vector.load %arg3[%c0_101, %c0_102] : memref<1x64xf32, #tpu.memory_space<vmem>>, vector<1x64xf32>
      %219 = vector.broadcast %218 : vector<1x64xf32> to vector<32x64xf32>
      %220 = arith.addf %217, %219 : vector<32x64xf32>
      %cst_103 = arith.constant 0.000000e+00 : f32
      %221 = vector.broadcast %cst_103 : f32 to vector<48x64xf32>
      %c0_104 = arith.constant 0 : index
      %c0_105 = arith.constant 0 : index
      %222 = vector.load %arg29[%c0_104, %c0_105] : memref<48x64xf32, #tpu.memory_space<vmem>>, vector<48x64xf32>
      tpu.vector_store %arg29[%c0_104, %c0_105], %221 {strides = array<i32>} : memref<48x64xf32, #tpu.memory_space<vmem>>, vector<48x64xf32>,
      %c0_106 = arith.constant 0 : index
      %c0_107 = arith.constant 0 : index
      %223 = vector.load %arg4[%c0_106, %c0_107] : memref<1x64xf32, #tpu.memory_space<vmem>>, vector<1x64xf32>
      %c0_108 = arith.constant 0 : index
      %c0_109 = arith.constant 0 : index
      %224 = vector.load %arg5[%c0_108, %c0_109] : memref<24x64xf32, #tpu.memory_space<vmem>>, vector<1x64xf32>
      %225 = arith.addf %223, %224 : vector<1x64xf32>
      %c0_110 = arith.constant 0 : index
      %c0_111 = arith.constant 0 : index
      %226 = vector.load %arg29[%c0_110, %c0_111] : memref<48x64xf32, #tpu.memory_space<vmem>>, vector<1x64xf32>
      tpu.vector_store %arg29[%c0_110, %c0_111], %225 {strides = array<i32>} : memref<48x64xf32, #tpu.memory_space<vmem>>, vector<1x64xf32>,
      %227 = vector.extract_strided_slice %220 {offsets = [0, 0], sizes = [16, 64], strides = [1, 1]} : vector<32x64xf32> to vector<16x64xf32>
      %c1 = arith.constant 1 : index
      %c0_112 = arith.constant 0 : index
      %228 = vector.load %arg5[%c1, %c0_112] : memref<24x64xf32, #tpu.memory_space<vmem>>, vector<16x64xf32>
      %229 = arith.addf %227, %228 : vector<16x64xf32>
      %c1_113 = arith.constant 1 : index
      %c0_114 = arith.constant 0 : index
      %230 = vector.load %arg29[%c1_113, %c0_114] : memref<48x64xf32, #tpu.memory_space<vmem>>, vector<16x64xf32>
      tpu.vector_store %arg29[%c1_113, %c0_114], %229 {strides = array<i32>} : memref<48x64xf32, #tpu.memory_space<vmem>>, vector<16x64xf32>,
      %c0_115 = arith.constant 0 : index
      %c0_116 = arith.constant 0 : index
      %231 = vector.load %arg4[%c0_115, %c0_116] : memref<1x64xf32, #tpu.memory_space<vmem>>, vector<1x64xf32>
      %c0_117 = arith.constant 0 : index
      %c0_118 = arith.constant 0 : index
      %232 = vector.load %arg5[%c0_117, %c0_118] : memref<24x64xf32, #tpu.memory_space<vmem>>, vector<1x64xf32>
      %233 = arith.addf %231, %232 : vector<1x64xf32>
      %c24 = arith.constant 24 : index
      %c0_119 = arith.constant 0 : index
      %234 = vector.load %arg29[%c24, %c0_119] : memref<48x64xf32, #tpu.memory_space<vmem>>, vector<1x64xf32>
      tpu.vector_store %arg29[%c24, %c0_119], %233 {strides = array<i32>} : memref<48x64xf32, #tpu.memory_space<vmem>>, vector<1x64xf32>,
      %235 = vector.extract_strided_slice %220 {offsets = [16, 0], sizes = [16, 64], strides = [1, 1]} : vector<32x64xf32> to vector<16x64xf32>
      %c1_120 = arith.constant 1 : index
      %c0_121 = arith.constant 0 : index
      %236 = vector.load %arg5[%c1_120, %c0_121] : memref<24x64xf32, #tpu.memory_space<vmem>>, vector<16x64xf32>
      %237 = arith.addf %235, %236 : vector<16x64xf32>
      %c25 = arith.constant 25 : index
      %c0_122 = arith.constant 0 : index
      %238 = vector.load %arg29[%c25, %c0_122] : memref<48x64xf32, #tpu.memory_space<vmem>>, vector<16x64xf32>
      tpu.vector_store %arg29[%c25, %c0_122], %237 {strides = array<i32>} : memref<48x64xf32, #tpu.memory_space<vmem>>, vector<16x64xf32>,
    } else {
    }
    %c0 = arith.constant 0 : index
    %c0_1 = arith.constant 0 : index
    %3 = vector.load %arg29[%c0, %c0_1] : memref<48x64xf32, #tpu.memory_space<vmem>>, vector<48x64xf32>
    %c0_2 = arith.constant 0 : index
    %c0_3 = arith.constant 0 : index
    %c0_4 = arith.constant 0 : index
    %4 = vector.load %arg7[%c0_2, %c0_3, %c0_4] : memref<1x1x64xf32, #tpu.memory_space<vmem>>, vector<1x1x64xf32>
    %5 = vector.shape_cast %4 : vector<1x1x64xf32> to vector<1x64xf32>
    %c0_5 = arith.constant 0 : index
    %c0_6 = arith.constant 0 : index
    %c0_7 = arith.constant 0 : index
    %6 = vector.load %arg8[%c0_5, %c0_6, %c0_7] : memref<1x1x64xf32, #tpu.memory_space<vmem>>, vector<1x1x64xf32>
    %7 = vector.shape_cast %6 : vector<1x1x64xf32> to vector<1x64xf32>
    %cst = arith.constant dense<0.000000e+00> : vector<48xf32>
    %8 = vector.multi_reduction <add>, %3, %cst [1] : vector<48x64xf32> to vector<48xf32>
    %9 = vector.shape_cast %8 : vector<48xf32> to vector<48x1xf32>
    %cst_8 = arith.constant 6.400000e+01 : f32
    %10 = vector.broadcast %cst_8 : f32 to vector<48x1xf32>
    %11 = arith.divf %9, %10 : vector<48x1xf32>
    %12 = vector.broadcast %11 : vector<48x1xf32> to vector<48x64xf32>
    %13 = arith.subf %3, %12 : vector<48x64xf32>
    %14 = arith.mulf %13, %13 : vector<48x64xf32>
    %cst_9 = arith.constant dense<0.000000e+00> : vector<48xf32>
    %15 = vector.multi_reduction <add>, %14, %cst_9 [1] : vector<48x64xf32> to vector<48xf32>
    %16 = vector.shape_cast %15 : vector<48xf32> to vector<48x1xf32>
    %cst_10 = arith.constant 6.400000e+01 : f32
    %17 = vector.broadcast %cst_10 : f32 to vector<48x1xf32>
    %18 = arith.divf %16, %17 : vector<48x1xf32>
    %cst_11 = arith.constant 9.99999997E-7 : f32
    %19 = vector.broadcast %cst_11 : f32 to vector<48x1xf32>
    %20 = arith.addf %18, %19 : vector<48x1xf32>
    %21 = math.rsqrt %20 : vector<48x1xf32>
    %22 = vector.broadcast %21 : vector<48x1xf32> to vector<48x64xf32>
    %23 = arith.mulf %13, %22 : vector<48x64xf32>
    %24 = vector.broadcast %5 : vector<1x64xf32> to vector<48x64xf32>
    %25 = arith.mulf %23, %24 : vector<48x64xf32>
    %26 = vector.broadcast %7 : vector<1x64xf32> to vector<48x64xf32>
    %27 = arith.addf %25, %26 : vector<48x64xf32>
    %c0_12 = arith.constant 0 : index
    %c0_13 = arith.constant 0 : index
    %c0_14 = arith.constant 0 : index
    %28 = vector.load %arg9[%c0_12, %c0_13, %c0_14] : memref<1x64x192xbf16, #tpu.memory_space<vmem>>, vector<1x64x192xbf16>
    %29 = vector.shape_cast %28 : vector<1x64x192xbf16> to vector<64x192xbf16>
    %30 = arith.truncf %27 : vector<48x64xf32> to vector<48x64xbf16>
    %cst_15 = arith.constant dense<0.000000e+00> : vector<48x192xf32>
    %31 = tpu.matmul %30, %29, %cst_15 {dimension_numbers = #tpu.dot_dimension_numbers<[1], [0], [0], [1], [0, 0, 1, 1], [], []>} : vector<48x64xbf16>, vector<64x192xbf16>, vector<48x192xf32> -> vector<48x192xf32>
    %c0_16 = arith.constant 0 : index
    %c0_17 = arith.constant 0 : index
    %c0_18 = arith.constant 0 : index
    %32 = vector.load %arg10[%c0_16, %c0_17, %c0_18] : memref<1x1x192xf32, #tpu.memory_space<vmem>>, vector<1x1x192xf32>
    %33 = vector.shape_cast %32 : vector<1x1x192xf32> to vector<1x192xf32>
    %34 = vector.broadcast %33 : vector<1x192xf32> to vector<48x192xf32>
    %35 = arith.addf %31, %34 : vector<48x192xf32>
    %c0_19 = arith.constant 0 : index
    %c0_20 = arith.constant 0 : index
    %36 = vector.load %arg6[%c0_19, %c0_20] : memref<48x48xf32, #tpu.memory_space<vmem>>, vector<48x48xf32>
    %37 = vector.extract_strided_slice %35 {offsets = [0, 0], sizes = [48, 16], strides = [1, 1]} : vector<48x192xf32> to vector<48x16xf32>
    %cst_21 = arith.constant 2.500000e-01 : f32
    %38 = vector.broadcast %cst_21 : f32 to vector<48x16xf32>
    %39 = arith.mulf %37, %38 : vector<48x16xf32>
    %40 = arith.truncf %39 : vector<48x16xf32> to vector<48x16xbf16>
    %41 = vector.extract_strided_slice %35 {offsets = [0, 64], sizes = [48, 16], strides = [1, 1]} : vector<48x192xf32> to vector<48x16xf32>
    %42 = arith.truncf %41 : vector<48x16xf32> to vector<48x16xbf16>
    %43 = vector.extract_strided_slice %35 {offsets = [0, 128], sizes = [48, 16], strides = [1, 1]} : vector<48x192xf32> to vector<48x16xf32>
    %44 = arith.truncf %43 : vector<48x16xf32> to vector<48x16xbf16>
    %cst_22 = arith.constant dense<0.000000e+00> : vector<48x48xf32>
    %45 = tpu.matmul %40, %42, %cst_22 {dimension_numbers = #tpu.dot_dimension_numbers<[1], [1], [0], [0], [0, 0, 1, 0], [], []>} : vector<48x16xbf16>, vector<48x16xbf16>, vector<48x48xf32> -> vector<48x48xf32>
    %46 = arith.addf %45, %36 : vector<48x48xf32>
    %cst_23 = arith.constant dense<0xFF800000> : vector<48xf32>
    %47 = vector.multi_reduction <maximumf>, %46, %cst_23 [1] : vector<48x48xf32> to vector<48xf32>
    %48 = vector.shape_cast %47 : vector<48xf32> to vector<48x1xf32>
    %49 = vector.broadcast %48 : vector<48x1xf32> to vector<48x48xf32>
    %50 = arith.subf %46, %49 : vector<48x48xf32>
    %51 = math.exp %50 : vector<48x48xf32>
    %cst_24 = arith.constant dense<0.000000e+00> : vector<48xf32>
    %52 = vector.multi_reduction <add>, %51, %cst_24 [1] : vector<48x48xf32> to vector<48xf32>
    %53 = vector.shape_cast %52 : vector<48xf32> to vector<48x1xf32>
    %54 = tpu.reciprocal %53 {approx = true} : vector<48x1xf32> -> vector<48x1xf32>
    %55 = vector.broadcast %54 : vector<48x1xf32> to vector<48x48xf32>
    %56 = arith.mulf %51, %55 : vector<48x48xf32>
    %57 = arith.truncf %56 : vector<48x48xf32> to vector<48x48xbf16>
    %cst_25 = arith.constant dense<0.000000e+00> : vector<48x16xf32>
    %58 = tpu.matmul %57, %44, %cst_25 {dimension_numbers = #tpu.dot_dimension_numbers<[1], [0], [0], [1], [0, 0, 1, 1], [], []>} : vector<48x48xbf16>, vector<48x16xbf16>, vector<48x16xf32> -> vector<48x16xf32>
    %59 = vector.extract_strided_slice %35 {offsets = [0, 16], sizes = [48, 16], strides = [1, 1]} : vector<48x192xf32> to vector<48x16xf32>
    %cst_26 = arith.constant 2.500000e-01 : f32
    %60 = vector.broadcast %cst_26 : f32 to vector<48x16xf32>
    %61 = arith.mulf %59, %60 : vector<48x16xf32>
    %62 = arith.truncf %61 : vector<48x16xf32> to vector<48x16xbf16>
    %63 = vector.extract_strided_slice %35 {offsets = [0, 80], sizes = [48, 16], strides = [1, 1]} : vector<48x192xf32> to vector<48x16xf32>
    %64 = arith.truncf %63 : vector<48x16xf32> to vector<48x16xbf16>
    %65 = vector.extract_strided_slice %35 {offsets = [0, 144], sizes = [48, 16], strides = [1, 1]} : vector<48x192xf32> to vector<48x16xf32>
    %66 = arith.truncf %65 : vector<48x16xf32> to vector<48x16xbf16>
    %cst_27 = arith.constant dense<0.000000e+00> : vector<48x48xf32>
    %67 = tpu.matmul %62, %64, %cst_27 {dimension_numbers = #tpu.dot_dimension_numbers<[1], [1], [0], [0], [0, 0, 1, 0], [], []>} : vector<48x16xbf16>, vector<48x16xbf16>, vector<48x48xf32> -> vector<48x48xf32>
    %68 = arith.addf %67, %36 : vector<48x48xf32>
    %cst_28 = arith.constant dense<0xFF800000> : vector<48xf32>
    %69 = vector.multi_reduction <maximumf>, %68, %cst_28 [1] : vector<48x48xf32> to vector<48xf32>
    %70 = vector.shape_cast %69 : vector<48xf32> to vector<48x1xf32>
    %71 = vector.broadcast %70 : vector<48x1xf32> to vector<48x48xf32>
    %72 = arith.subf %68, %71 : vector<48x48xf32>
    %73 = math.exp %72 : vector<48x48xf32>
    %cst_29 = arith.constant dense<0.000000e+00> : vector<48xf32>
    %74 = vector.multi_reduction <add>, %73, %cst_29 [1] : vector<48x48xf32> to vector<48xf32>
    %75 = vector.shape_cast %74 : vector<48xf32> to vector<48x1xf32>
    %76 = tpu.reciprocal %75 {approx = true} : vector<48x1xf32> -> vector<48x1xf32>
    %77 = vector.broadcast %76 : vector<48x1xf32> to vector<48x48xf32>
    %78 = arith.mulf %73, %77 : vector<48x48xf32>
    %79 = arith.truncf %78 : vector<48x48xf32> to vector<48x48xbf16>
    %cst_30 = arith.constant dense<0.000000e+00> : vector<48x16xf32>
    %80 = tpu.matmul %79, %66, %cst_30 {dimension_numbers = #tpu.dot_dimension_numbers<[1], [0], [0], [1], [0, 0, 1, 1], [], []>} : vector<48x48xbf16>, vector<48x16xbf16>, vector<48x16xf32> -> vector<48x16xf32>
    %81 = vector.extract_strided_slice %35 {offsets = [0, 32], sizes = [48, 16], strides = [1, 1]} : vector<48x192xf32> to vector<48x16xf32>
    %cst_31 = arith.constant 2.500000e-01 : f32
    %82 = vector.broadcast %cst_31 : f32 to vector<48x16xf32>
    %83 = arith.mulf %81, %82 : vector<48x16xf32>
    %84 = arith.truncf %83 : vector<48x16xf32> to vector<48x16xbf16>
    %85 = vector.extract_strided_slice %35 {offsets = [0, 96], sizes = [48, 16], strides = [1, 1]} : vector<48x192xf32> to vector<48x16xf32>
    %86 = arith.truncf %85 : vector<48x16xf32> to vector<48x16xbf16>
    %87 = vector.extract_strided_slice %35 {offsets = [0, 160], sizes = [48, 16], strides = [1, 1]} : vector<48x192xf32> to vector<48x16xf32>
    %88 = arith.truncf %87 : vector<48x16xf32> to vector<48x16xbf16>
    %cst_32 = arith.constant dense<0.000000e+00> : vector<48x48xf32>
    %89 = tpu.matmul %84, %86, %cst_32 {dimension_numbers = #tpu.dot_dimension_numbers<[1], [1], [0], [0], [0, 0, 1, 0], [], []>} : vector<48x16xbf16>, vector<48x16xbf16>, vector<48x48xf32> -> vector<48x48xf32>
    %90 = arith.addf %89, %36 : vector<48x48xf32>
    %cst_33 = arith.constant dense<0xFF800000> : vector<48xf32>
    %91 = vector.multi_reduction <maximumf>, %90, %cst_33 [1] : vector<48x48xf32> to vector<48xf32>
    %92 = vector.shape_cast %91 : vector<48xf32> to vector<48x1xf32>
    %93 = vector.broadcast %92 : vector<48x1xf32> to vector<48x48xf32>
    %94 = arith.subf %90, %93 : vector<48x48xf32>
    %95 = math.exp %94 : vector<48x48xf32>
    %cst_34 = arith.constant dense<0.000000e+00> : vector<48xf32>
    %96 = vector.multi_reduction <add>, %95, %cst_34 [1] : vector<48x48xf32> to vector<48xf32>
    %97 = vector.shape_cast %96 : vector<48xf32> to vector<48x1xf32>
    %98 = tpu.reciprocal %97 {approx = true} : vector<48x1xf32> -> vector<48x1xf32>
    %99 = vector.broadcast %98 : vector<48x1xf32> to vector<48x48xf32>
    %100 = arith.mulf %95, %99 : vector<48x48xf32>
    %101 = arith.truncf %100 : vector<48x48xf32> to vector<48x48xbf16>
    %cst_35 = arith.constant dense<0.000000e+00> : vector<48x16xf32>
    %102 = tpu.matmul %101, %88, %cst_35 {dimension_numbers = #tpu.dot_dimension_numbers<[1], [0], [0], [1], [0, 0, 1, 1], [], []>} : vector<48x48xbf16>, vector<48x16xbf16>, vector<48x16xf32> -> vector<48x16xf32>
    %103 = vector.extract_strided_slice %35 {offsets = [0, 48], sizes = [48, 16], strides = [1, 1]} : vector<48x192xf32> to vector<48x16xf32>
    %cst_36 = arith.constant 2.500000e-01 : f32
    %104 = vector.broadcast %cst_36 : f32 to vector<48x16xf32>
    %105 = arith.mulf %103, %104 : vector<48x16xf32>
    %106 = arith.truncf %105 : vector<48x16xf32> to vector<48x16xbf16>
    %107 = vector.extract_strided_slice %35 {offsets = [0, 112], sizes = [48, 16], strides = [1, 1]} : vector<48x192xf32> to vector<48x16xf32>
    %108 = arith.truncf %107 : vector<48x16xf32> to vector<48x16xbf16>
    %109 = vector.extract_strided_slice %35 {offsets = [0, 176], sizes = [48, 16], strides = [1, 1]} : vector<48x192xf32> to vector<48x16xf32>
    %110 = arith.truncf %109 : vector<48x16xf32> to vector<48x16xbf16>
    %cst_37 = arith.constant dense<0.000000e+00> : vector<48x48xf32>
    %111 = tpu.matmul %106, %108, %cst_37 {dimension_numbers = #tpu.dot_dimension_numbers<[1], [1], [0], [0], [0, 0, 1, 0], [], []>} : vector<48x16xbf16>, vector<48x16xbf16>, vector<48x48xf32> -> vector<48x48xf32>
    %112 = arith.addf %111, %36 : vector<48x48xf32>
    %cst_38 = arith.constant dense<0xFF800000> : vector<48xf32>
    %113 = vector.multi_reduction <maximumf>, %112, %cst_38 [1] : vector<48x48xf32> to vector<48xf32>
    %114 = vector.shape_cast %113 : vector<48xf32> to vector<48x1xf32>
    %115 = vector.broadcast %114 : vector<48x1xf32> to vector<48x48xf32>
    %116 = arith.subf %112, %115 : vector<48x48xf32>
    %117 = math.exp %116 : vector<48x48xf32>
    %cst_39 = arith.constant dense<0.000000e+00> : vector<48xf32>
    %118 = vector.multi_reduction <add>, %117, %cst_39 [1] : vector<48x48xf32> to vector<48xf32>
    %119 = vector.shape_cast %118 : vector<48xf32> to vector<48x1xf32>
    %120 = tpu.reciprocal %119 {approx = true} : vector<48x1xf32> -> vector<48x1xf32>
    %121 = vector.broadcast %120 : vector<48x1xf32> to vector<48x48xf32>
    %122 = arith.mulf %117, %121 : vector<48x48xf32>
    %123 = arith.truncf %122 : vector<48x48xf32> to vector<48x48xbf16>
    %cst_40 = arith.constant dense<0.000000e+00> : vector<48x16xf32>
    %124 = tpu.matmul %123, %110, %cst_40 {dimension_numbers = #tpu.dot_dimension_numbers<[1], [0], [0], [1], [0, 0, 1, 1], [], []>} : vector<48x48xbf16>, vector<48x16xbf16>, vector<48x16xf32> -> vector<48x16xf32>
    %125 = tpu.concatenate %58, %80, %102, %124 in 1 : vector<48x16xf32>, vector<48x16xf32>, vector<48x16xf32>, vector<48x16xf32> -> vector<48x64xf32>
    %c0_41 = arith.constant 0 : index
    %c0_42 = arith.constant 0 : index
    %c0_43 = arith.constant 0 : index
    %126 = vector.load %arg11[%c0_41, %c0_42, %c0_43] : memref<1x64x64xbf16, #tpu.memory_space<vmem>>, vector<1x64x64xbf16>
    %127 = vector.shape_cast %126 : vector<1x64x64xbf16> to vector<64x64xbf16>
    %128 = arith.truncf %125 : vector<48x64xf32> to vector<48x64xbf16>
    %cst_44 = arith.constant dense<0.000000e+00> : vector<48x64xf32>
    %129 = tpu.matmul %128, %127, %cst_44 {dimension_numbers = #tpu.dot_dimension_numbers<[1], [0], [0], [1], [0, 0, 1, 1], [], []>} : vector<48x64xbf16>, vector<64x64xbf16>, vector<48x64xf32> -> vector<48x64xf32>
    %c0_45 = arith.constant 0 : index
    %c0_46 = arith.constant 0 : index
    %c0_47 = arith.constant 0 : index
    %130 = vector.load %arg12[%c0_45, %c0_46, %c0_47] : memref<1x1x64xf32, #tpu.memory_space<vmem>>, vector<1x1x64xf32>
    %131 = vector.shape_cast %130 : vector<1x1x64xf32> to vector<1x64xf32>
    %132 = vector.broadcast %131 : vector<1x64xf32> to vector<48x64xf32>
    %133 = arith.addf %129, %132 : vector<48x64xf32>
    %134 = arith.addf %3, %133 : vector<48x64xf32>
    %c0_48 = arith.constant 0 : index
    %c0_49 = arith.constant 0 : index
    %c0_50 = arith.constant 0 : index
    %135 = vector.load %arg13[%c0_48, %c0_49, %c0_50] : memref<1x1x64xf32, #tpu.memory_space<vmem>>, vector<1x1x64xf32>
    %136 = vector.shape_cast %135 : vector<1x1x64xf32> to vector<1x64xf32>
    %c0_51 = arith.constant 0 : index
    %c0_52 = arith.constant 0 : index
    %c0_53 = arith.constant 0 : index
    %137 = vector.load %arg14[%c0_51, %c0_52, %c0_53] : memref<1x1x64xf32, #tpu.memory_space<vmem>>, vector<1x1x64xf32>
    %138 = vector.shape_cast %137 : vector<1x1x64xf32> to vector<1x64xf32>
    %cst_54 = arith.constant dense<0.000000e+00> : vector<48xf32>
    %139 = vector.multi_reduction <add>, %134, %cst_54 [1] : vector<48x64xf32> to vector<48xf32>
    %140 = vector.shape_cast %139 : vector<48xf32> to vector<48x1xf32>
    %cst_55 = arith.constant 6.400000e+01 : f32
    %141 = vector.broadcast %cst_55 : f32 to vector<48x1xf32>
    %142 = arith.divf %140, %141 : vector<48x1xf32>
    %143 = vector.broadcast %142 : vector<48x1xf32> to vector<48x64xf32>
    %144 = arith.subf %134, %143 : vector<48x64xf32>
    %145 = arith.mulf %144, %144 : vector<48x64xf32>
    %cst_56 = arith.constant dense<0.000000e+00> : vector<48xf32>
    %146 = vector.multi_reduction <add>, %145, %cst_56 [1] : vector<48x64xf32> to vector<48xf32>
    %147 = vector.shape_cast %146 : vector<48xf32> to vector<48x1xf32>
    %cst_57 = arith.constant 6.400000e+01 : f32
    %148 = vector.broadcast %cst_57 : f32 to vector<48x1xf32>
    %149 = arith.divf %147, %148 : vector<48x1xf32>
    %cst_58 = arith.constant 9.99999997E-7 : f32
    %150 = vector.broadcast %cst_58 : f32 to vector<48x1xf32>
    %151 = arith.addf %149, %150 : vector<48x1xf32>
    %152 = math.rsqrt %151 : vector<48x1xf32>
    %153 = vector.broadcast %152 : vector<48x1xf32> to vector<48x64xf32>
    %154 = arith.mulf %144, %153 : vector<48x64xf32>
    %155 = vector.broadcast %136 : vector<1x64xf32> to vector<48x64xf32>
    %156 = arith.mulf %154, %155 : vector<48x64xf32>
    %157 = vector.broadcast %138 : vector<1x64xf32> to vector<48x64xf32>
    %158 = arith.addf %156, %157 : vector<48x64xf32>
    %c0_59 = arith.constant 0 : index
    %c0_60 = arith.constant 0 : index
    %c0_61 = arith.constant 0 : index
    %159 = vector.load %arg15[%c0_59, %c0_60, %c0_61] : memref<1x64x256xbf16, #tpu.memory_space<vmem>>, vector<1x64x256xbf16>
    %160 = vector.shape_cast %159 : vector<1x64x256xbf16> to vector<64x256xbf16>
    %161 = arith.truncf %158 : vector<48x64xf32> to vector<48x64xbf16>
    %cst_62 = arith.constant dense<0.000000e+00> : vector<48x256xf32>
    %162 = tpu.matmul %161, %160, %cst_62 {dimension_numbers = #tpu.dot_dimension_numbers<[1], [0], [0], [1], [0, 0, 1, 1], [], []>} : vector<48x64xbf16>, vector<64x256xbf16>, vector<48x256xf32> -> vector<48x256xf32>
    %c0_63 = arith.constant 0 : index
    %c0_64 = arith.constant 0 : index
    %c0_65 = arith.constant 0 : index
    %163 = vector.load %arg16[%c0_63, %c0_64, %c0_65] : memref<1x1x256xf32, #tpu.memory_space<vmem>>, vector<1x1x256xf32>
    %164 = vector.shape_cast %163 : vector<1x1x256xf32> to vector<1x256xf32>
    %165 = vector.broadcast %164 : vector<1x256xf32> to vector<48x256xf32>
    %166 = arith.addf %162, %165 : vector<48x256xf32>
    %167 = arith.mulf %166, %166 : vector<48x256xf32>
    %168 = arith.mulf %166, %167 : vector<48x256xf32>
    %cst_66 = arith.constant 4.471500e-02 : f32
    %169 = vector.broadcast %cst_66 : f32 to vector<48x256xf32>
    %170 = arith.mulf %169, %168 : vector<48x256xf32>
    %171 = arith.addf %166, %170 : vector<48x256xf32>
    %cst_67 = arith.constant 0.797884583 : f32
    %172 = vector.broadcast %cst_67 : f32 to vector<48x256xf32>
    %173 = arith.mulf %172, %171 : vector<48x256xf32>
    %174 = math.tanh %173 : vector<48x256xf32>
    %cst_68 = arith.constant 1.000000e+00 : f32
    %175 = vector.broadcast %cst_68 : f32 to vector<48x256xf32>
    %176 = arith.addf %175, %174 : vector<48x256xf32>
    %cst_69 = arith.constant 5.000000e-01 : f32
    %177 = vector.broadcast %cst_69 : f32 to vector<48x256xf32>
    %178 = arith.mulf %177, %176 : vector<48x256xf32>
    %179 = arith.mulf %166, %178 : vector<48x256xf32>
    %c0_70 = arith.constant 0 : index
    %c0_71 = arith.constant 0 : index
    %c0_72 = arith.constant 0 : index
    %180 = vector.load %arg17[%c0_70, %c0_71, %c0_72] : memref<1x256x64xbf16, #tpu.memory_space<vmem>>, vector<1x256x64xbf16>
    %181 = vector.shape_cast %180 : vector<1x256x64xbf16> to vector<256x64xbf16>
    %182 = arith.truncf %179 : vector<48x256xf32> to vector<48x256xbf16>
    %cst_73 = arith.constant dense<0.000000e+00> : vector<48x64xf32>
    %183 = tpu.matmul %182, %181, %cst_73 {dimension_numbers = #tpu.dot_dimension_numbers<[1], [0], [0], [1], [0, 0, 1, 1], [], []>} : vector<48x256xbf16>, vector<256x64xbf16>, vector<48x64xf32> -> vector<48x64xf32>
    %c0_74 = arith.constant 0 : index
    %c0_75 = arith.constant 0 : index
    %c0_76 = arith.constant 0 : index
    %184 = vector.load %arg18[%c0_74, %c0_75, %c0_76] : memref<1x1x64xf32, #tpu.memory_space<vmem>>, vector<1x1x64xf32>
    %185 = vector.shape_cast %184 : vector<1x1x64xf32> to vector<1x64xf32>
    %186 = vector.broadcast %185 : vector<1x64xf32> to vector<48x64xf32>
    %187 = arith.addf %183, %186 : vector<48x64xf32>
    %c0_77 = arith.constant 0 : index
    %c0_78 = arith.constant 0 : index
    %c0_79 = arith.constant 0 : index
    %188 = vector.load %arg19[%c0_77, %c0_78, %c0_79] : memref<1x64x16xbf16, #tpu.memory_space<vmem>>, vector<1x64x16xbf16>
    %189 = vector.shape_cast %188 : vector<1x64x16xbf16> to vector<64x16xbf16>
    %190 = arith.truncf %187 : vector<48x64xf32> to vector<48x64xbf16>
    %cst_80 = arith.constant dense<0.000000e+00> : vector<48x16xf32>
    %191 = tpu.matmul %190, %189, %cst_80 {dimension_numbers = #tpu.dot_dimension_numbers<[1], [0], [0], [1], [0, 0, 1, 1], [], []>} : vector<48x64xbf16>, vector<64x16xbf16>, vector<48x16xf32> -> vector<48x16xf32>
    %c0_81 = arith.constant 0 : index
    %c0_82 = arith.constant 0 : index
    %c0_83 = arith.constant 0 : index
    %192 = vector.load %arg20[%c0_81, %c0_82, %c0_83] : memref<1x1x16xf32, #tpu.memory_space<vmem>>, vector<1x1x16xf32>
    %193 = vector.shape_cast %192 : vector<1x1x16xf32> to vector<1x16xf32>
    %194 = vector.broadcast %193 : vector<1x16xf32> to vector<48x16xf32>
    %195 = arith.addf %191, %194 : vector<48x16xf32>
    %cst_84 = arith.constant 0.000000e+00 : f32
    %196 = vector.broadcast %cst_84 : f32 to vector<48x16xf32>
    %197 = arith.maximumf %195, %196 : vector<48x16xf32>
    %c0_85 = arith.constant 0 : index
    %c0_86 = arith.constant 0 : index
    %c0_87 = arith.constant 0 : index
    %198 = vector.load %arg21[%c0_85, %c0_86, %c0_87] : memref<1x16x64xbf16, #tpu.memory_space<vmem>>, vector<1x16x64xbf16>
    %199 = vector.shape_cast %198 : vector<1x16x64xbf16> to vector<16x64xbf16>
    %200 = arith.truncf %197 : vector<48x16xf32> to vector<48x16xbf16>
    %cst_88 = arith.constant dense<0.000000e+00> : vector<48x64xf32>
    %201 = tpu.matmul %200, %199, %cst_88 {dimension_numbers = #tpu.dot_dimension_numbers<[1], [0], [0], [1], [0, 0, 1, 1], [], []>} : vector<48x16xbf16>, vector<16x64xbf16>, vector<48x64xf32> -> vector<48x64xf32>
    %c0_89 = arith.constant 0 : index
    %c0_90 = arith.constant 0 : index
    %c0_91 = arith.constant 0 : index
    %202 = vector.load %arg22[%c0_89, %c0_90, %c0_91] : memref<1x1x64xf32, #tpu.memory_space<vmem>>, vector<1x1x64xf32>
    %203 = vector.shape_cast %202 : vector<1x1x64xf32> to vector<1x64xf32>
    %204 = vector.broadcast %203 : vector<1x64xf32> to vector<48x64xf32>
    %205 = arith.addf %201, %204 : vector<48x64xf32>
    %cst_92 = arith.constant 1.000000e-01 : f32
    %206 = vector.broadcast %cst_92 : f32 to vector<48x64xf32>
    %207 = arith.mulf %205, %206 : vector<48x64xf32>
    %208 = arith.addf %134, %187 : vector<48x64xf32>
    %209 = arith.addf %208, %207 : vector<48x64xf32>
    %c0_93 = arith.constant 0 : index
    %c0_94 = arith.constant 0 : index
    %210 = vector.load %arg29[%c0_93, %c0_94] : memref<48x64xf32, #tpu.memory_space<vmem>>, vector<48x64xf32>
    tpu.vector_store %arg29[%c0_93, %c0_94], %209 {strides = array<i32>} : memref<48x64xf32, #tpu.memory_space<vmem>>, vector<48x64xf32>,
    %c1_i32 = arith.constant 1 : i32
    %211 = arith.cmpi eq, %arg0, %c1_i32 : i32
    %212 = arith.extui %211 : i1 to i32
    %c0_i32_95 = arith.constant 0 : i32
    %213 = arith.cmpi ne, %212, %c0_i32_95 : i32
    scf.if %213 {
      %214 = vector.shape_cast %209 : vector<48x64xf32> to vector<2x24x64xf32>
      %215 = vector.extract_strided_slice %214 {offsets = [0, 0, 0], sizes = [2, 1, 64], strides = [1, 1, 1]} : vector<2x24x64xf32> to vector<2x1x64xf32>
      %216 = vector.shape_cast %215 : vector<2x1x64xf32> to vector<2x64xf32>
      %c0_96 = arith.constant 0 : index
      %c0_97 = arith.constant 0 : index
      %217 = vector.load %arg23[%c0_96, %c0_97] : memref<1x64xf32, #tpu.memory_space<vmem>>, vector<1x64xf32>
      %c0_98 = arith.constant 0 : index
      %c0_99 = arith.constant 0 : index
      %218 = vector.load %arg24[%c0_98, %c0_99] : memref<1x64xf32, #tpu.memory_space<vmem>>, vector<1x64xf32>
      %cst_100 = arith.constant dense<0.000000e+00> : vector<2xf32>
      %219 = vector.multi_reduction <add>, %216, %cst_100 [1] : vector<2x64xf32> to vector<2xf32>
      %220 = vector.shape_cast %219 : vector<2xf32> to vector<2x1xf32>
      %cst_101 = arith.constant 6.400000e+01 : f32
      %221 = vector.broadcast %cst_101 : f32 to vector<2x1xf32>
      %222 = arith.divf %220, %221 : vector<2x1xf32>
      %223 = vector.broadcast %222 : vector<2x1xf32> to vector<2x64xf32>
      %224 = arith.subf %216, %223 : vector<2x64xf32>
      %225 = arith.mulf %224, %224 : vector<2x64xf32>
      %cst_102 = arith.constant dense<0.000000e+00> : vector<2xf32>
      %226 = vector.multi_reduction <add>, %225, %cst_102 [1] : vector<2x64xf32> to vector<2xf32>
      %227 = vector.shape_cast %226 : vector<2xf32> to vector<2x1xf32>
      %cst_103 = arith.constant 6.400000e+01 : f32
      %228 = vector.broadcast %cst_103 : f32 to vector<2x1xf32>
      %229 = arith.divf %227, %228 : vector<2x1xf32>
      %cst_104 = arith.constant 9.99999997E-7 : f32
      %230 = vector.broadcast %cst_104 : f32 to vector<2x1xf32>
      %231 = arith.addf %229, %230 : vector<2x1xf32>
      %232 = math.rsqrt %231 : vector<2x1xf32>
      %233 = vector.broadcast %232 : vector<2x1xf32> to vector<2x64xf32>
      %234 = arith.mulf %224, %233 : vector<2x64xf32>
      %235 = vector.broadcast %217 : vector<1x64xf32> to vector<2x64xf32>
      %236 = arith.mulf %234, %235 : vector<2x64xf32>
      %237 = vector.broadcast %218 : vector<1x64xf32> to vector<2x64xf32>
      %238 = arith.addf %236, %237 : vector<2x64xf32>
      %c0_105 = arith.constant 0 : index
      %c0_106 = arith.constant 0 : index
      %239 = vector.load %arg27[%c0_105, %c0_106] : memref<2x64xf32, #tpu.memory_space<vmem>>, vector<2x64xf32>
      tpu.vector_store %arg27[%c0_105, %c0_106], %238 {strides = array<i32>} : memref<2x64xf32, #tpu.memory_space<vmem>>, vector<2x64xf32>,
      %240 = arith.mulf %238, %238 : vector<2x64xf32>
      %cst_107 = arith.constant dense<0.000000e+00> : vector<2xf32>
      %241 = vector.multi_reduction <add>, %240, %cst_107 [1] : vector<2x64xf32> to vector<2xf32>
      %242 = vector.shape_cast %241 : vector<2xf32> to vector<2x1xf32>
      %cst_108 = arith.constant 1.000000e-24 : f32
      %243 = vector.broadcast %cst_108 : f32 to vector<2x1xf32>
      %244 = arith.maximumf %242, %243 : vector<2x1xf32>
      %245 = math.rsqrt %244 : vector<2x1xf32>
      %246 = vector.broadcast %245 : vector<2x1xf32> to vector<2x64xf32>
      %247 = arith.mulf %238, %246 : vector<2x64xf32>
      %c0_109 = arith.constant 0 : index
      %c0_110 = arith.constant 0 : index
      %248 = vector.load %arg25[%c0_109, %c0_110] : memref<128x64xf32, #tpu.memory_space<vmem>>, vector<128x64xf32>
      %249 = arith.mulf %248, %248 : vector<128x64xf32>
      %cst_111 = arith.constant dense<0.000000e+00> : vector<128xf32>
      %250 = vector.multi_reduction <add>, %249, %cst_111 [1] : vector<128x64xf32> to vector<128xf32>
      %251 = vector.shape_cast %250 : vector<128xf32> to vector<128x1xf32>
      %cst_112 = arith.constant 1.000000e-24 : f32
      %252 = vector.broadcast %cst_112 : f32 to vector<128x1xf32>
      %253 = arith.maximumf %251, %252 : vector<128x1xf32>
      %254 = math.rsqrt %253 : vector<128x1xf32>
      %255 = vector.broadcast %254 : vector<128x1xf32> to vector<128x64xf32>
      %256 = arith.mulf %248, %255 : vector<128x64xf32>
      %cst_113 = arith.constant dense<0.000000e+00> : vector<2x128xf32>
      %257 = tpu.matmul %247, %256, %cst_113 {dimension_numbers = #tpu.dot_dimension_numbers<[1], [1], [0], [0], [0, 0, 1, 0], [], []>} : vector<2x64xf32>, vector<128x64xf32>, vector<2x128xf32> -> vector<2x128xf32>
      %c0_114 = arith.constant 0 : index
      %c0_115 = arith.constant 0 : index
      %258 = vector.load %arg26[%c0_114, %c0_115] : memref<1x1xf32, #tpu.memory_space<vmem>>, vector<1x1xf32>
      %259 = vector.broadcast %258 : vector<1x1xf32> to vector<2x128xf32>
      %260 = arith.mulf %257, %259 : vector<2x128xf32>
      %c0_116 = arith.constant 0 : index
      %c0_117 = arith.constant 0 : index
      %261 = vector.load %arg28[%c0_116, %c0_117] : memref<2x128xf32, #tpu.memory_space<vmem>>, vector<2x128xf32>
      tpu.vector_store %arg28[%c0_116, %c0_117], %260 {strides = array<i32>} : memref<2x128xf32, #tpu.memory_space<vmem>>, vector<2x128xf32>,
    } else {
    }
    return
  }
  func.func @transform_0(%arg0: i32) -> (i32, i32) {
    %c0_i32 = arith.constant 0 : i32
    %c0_i32_0 = arith.constant 0 : i32
    %c0_i32_1 = arith.constant 0 : i32
    return %c0_i32, %c0_i32_0 : i32, i32
  }
  func.func @transform_1(%arg0: i32) -> (i32, i32) {
    %c0_i32 = arith.constant 0 : i32
    %c0_i32_0 = arith.constant 0 : i32
    %c0_i32_1 = arith.constant 0 : i32
    return %c0_i32, %c0_i32_0 : i32, i32
  }
  func.func @transform_2(%arg0: i32) -> (i32, i32) {
    %c0_i32 = arith.constant 0 : i32
    %c0_i32_0 = arith.constant 0 : i32
    %c0_i32_1 = arith.constant 0 : i32
    return %c0_i32, %c0_i32_0 : i32, i32
  }
  func.func @transform_3(%arg0: i32) -> (i32, i32) {
    %c0_i32 = arith.constant 0 : i32
    %c0_i32_0 = arith.constant 0 : i32
    %c0_i32_1 = arith.constant 0 : i32
    return %c0_i32, %c0_i32_0 : i32, i32
  }
  func.func @transform_4(%arg0: i32) -> (i32, i32) {
    %c0_i32 = arith.constant 0 : i32
    %c0_i32_0 = arith.constant 0 : i32
    %c0_i32_1 = arith.constant 0 : i32
    return %c0_i32, %c0_i32_0 : i32, i32
  }
  func.func @transform_5(%arg0: i32) -> (i32, i32) {
    %c0_i32 = arith.constant 0 : i32
    %c0_i32_0 = arith.constant 0 : i32
    %c0_i32_1 = arith.constant 0 : i32
    return %c0_i32, %c0_i32_0 : i32, i32
  }
  func.func @transform_6(%arg0: i32) -> (i32, i32, i32) {
    %c0_i32 = arith.constant 0 : i32
    %c0_i32_0 = arith.constant 0 : i32
    %c0_i32_1 = arith.constant 0 : i32
    return %arg0, %c0_i32, %c0_i32_0 : i32, i32, i32
  }
  func.func @transform_7(%arg0: i32) -> (i32, i32, i32) {
    %c0_i32 = arith.constant 0 : i32
    %c0_i32_0 = arith.constant 0 : i32
    %c0_i32_1 = arith.constant 0 : i32
    return %arg0, %c0_i32, %c0_i32_0 : i32, i32, i32
  }
  func.func @transform_8(%arg0: i32) -> (i32, i32, i32) {
    %c0_i32 = arith.constant 0 : i32
    %c0_i32_0 = arith.constant 0 : i32
    %c0_i32_1 = arith.constant 0 : i32
    return %arg0, %c0_i32, %c0_i32_0 : i32, i32, i32
  }
  func.func @transform_9(%arg0: i32) -> (i32, i32, i32) {
    %c0_i32 = arith.constant 0 : i32
    %c0_i32_0 = arith.constant 0 : i32
    %c0_i32_1 = arith.constant 0 : i32
    return %arg0, %c0_i32, %c0_i32_0 : i32, i32, i32
  }
  func.func @transform_10(%arg0: i32) -> (i32, i32, i32) {
    %c0_i32 = arith.constant 0 : i32
    %c0_i32_0 = arith.constant 0 : i32
    %c0_i32_1 = arith.constant 0 : i32
    return %arg0, %c0_i32, %c0_i32_0 : i32, i32, i32
  }
  func.func @transform_11(%arg0: i32) -> (i32, i32, i32) {
    %c0_i32 = arith.constant 0 : i32
    %c0_i32_0 = arith.constant 0 : i32
    %c0_i32_1 = arith.constant 0 : i32
    return %arg0, %c0_i32, %c0_i32_0 : i32, i32, i32
  }
  func.func @transform_12(%arg0: i32) -> (i32, i32, i32) {
    %c0_i32 = arith.constant 0 : i32
    %c0_i32_0 = arith.constant 0 : i32
    %c0_i32_1 = arith.constant 0 : i32
    return %arg0, %c0_i32, %c0_i32_0 : i32, i32, i32
  }
  func.func @transform_13(%arg0: i32) -> (i32, i32, i32) {
    %c0_i32 = arith.constant 0 : i32
    %c0_i32_0 = arith.constant 0 : i32
    %c0_i32_1 = arith.constant 0 : i32
    return %arg0, %c0_i32, %c0_i32_0 : i32, i32, i32
  }
  func.func @transform_14(%arg0: i32) -> (i32, i32, i32) {
    %c0_i32 = arith.constant 0 : i32
    %c0_i32_0 = arith.constant 0 : i32
    %c0_i32_1 = arith.constant 0 : i32
    return %arg0, %c0_i32, %c0_i32_0 : i32, i32, i32
  }
  func.func @transform_15(%arg0: i32) -> (i32, i32, i32) {
    %c0_i32 = arith.constant 0 : i32
    %c0_i32_0 = arith.constant 0 : i32
    %c0_i32_1 = arith.constant 0 : i32
    return %arg0, %c0_i32, %c0_i32_0 : i32, i32, i32
  }
  func.func @transform_16(%arg0: i32) -> (i32, i32, i32) {
    %c0_i32 = arith.constant 0 : i32
    %c0_i32_0 = arith.constant 0 : i32
    %c0_i32_1 = arith.constant 0 : i32
    return %arg0, %c0_i32, %c0_i32_0 : i32, i32, i32
  }
  func.func @transform_17(%arg0: i32) -> (i32, i32, i32) {
    %c0_i32 = arith.constant 0 : i32
    %c0_i32_0 = arith.constant 0 : i32
    %c0_i32_1 = arith.constant 0 : i32
    return %arg0, %c0_i32, %c0_i32_0 : i32, i32, i32
  }
  func.func @transform_18(%arg0: i32) -> (i32, i32, i32) {
    %c0_i32 = arith.constant 0 : i32
    %c0_i32_0 = arith.constant 0 : i32
    %c0_i32_1 = arith.constant 0 : i32
    return %arg0, %c0_i32, %c0_i32_0 : i32, i32, i32
  }
  func.func @transform_19(%arg0: i32) -> (i32, i32, i32) {
    %c0_i32 = arith.constant 0 : i32
    %c0_i32_0 = arith.constant 0 : i32
    %c0_i32_1 = arith.constant 0 : i32
    return %arg0, %c0_i32, %c0_i32_0 : i32, i32, i32
  }
  func.func @transform_20(%arg0: i32) -> (i32, i32, i32) {
    %c0_i32 = arith.constant 0 : i32
    %c0_i32_0 = arith.constant 0 : i32
    %c0_i32_1 = arith.constant 0 : i32
    return %arg0, %c0_i32, %c0_i32_0 : i32, i32, i32
  }
  func.func @transform_21(%arg0: i32) -> (i32, i32, i32) {
    %c0_i32 = arith.constant 0 : i32
    %c0_i32_0 = arith.constant 0 : i32
    %c0_i32_1 = arith.constant 0 : i32
    return %arg0, %c0_i32, %c0_i32_0 : i32, i32, i32
  }
  func.func @transform_22(%arg0: i32) -> (i32, i32) {
    %c0_i32 = arith.constant 0 : i32
    %c0_i32_0 = arith.constant 0 : i32
    %c0_i32_1 = arith.constant 0 : i32
    return %c0_i32, %c0_i32_0 : i32, i32
  }
  func.func @transform_23(%arg0: i32) -> (i32, i32) {
    %c0_i32 = arith.constant 0 : i32
    %c0_i32_0 = arith.constant 0 : i32
    %c0_i32_1 = arith.constant 0 : i32
    return %c0_i32, %c0_i32_0 : i32, i32
  }
  func.func @transform_24(%arg0: i32) -> (i32, i32) {
    %c0_i32 = arith.constant 0 : i32
    %c0_i32_0 = arith.constant 0 : i32
    %c0_i32_1 = arith.constant 0 : i32
    return %c0_i32, %c0_i32_0 : i32, i32
  }
  func.func @transform_25(%arg0: i32) -> (i32, i32) {
    %c0_i32 = arith.constant 0 : i32
    %c0_i32_0 = arith.constant 0 : i32
    %c0_i32_1 = arith.constant 0 : i32
    return %c0_i32, %c0_i32_0 : i32, i32
  }
  func.func @transform_26(%arg0: i32) -> (i32, i32) {
    %c0_i32 = arith.constant 0 : i32
    %c0_i32_0 = arith.constant 0 : i32
    %c0_i32_1 = arith.constant 0 : i32
    return %c0_i32, %c0_i32_0 : i32, i32
  }
  func.func @transform_27(%arg0: i32) -> (i32, i32) {
    %c0_i32 = arith.constant 0 : i32
    %c0_i32_0 = arith.constant 0 : i32
    %c0_i32_1 = arith.constant 0 : i32
    return %c0_i32, %c0_i32_0 : i32, i32
  }
}

</mosaic_0001>

<llo_original>
// kernel: mote_net_forward.1
$region0: #{mote_net_forward.1}
  #allocation0 [shape = 'u32[]', space=smem, size = 0x4, offset = 0x4, fixed_abs, tag = 'smem constant byte address 0x4 - core index']
  #allocation1 [shape = 'u32[144,128]{1,0:T(1,128)}', space=vmem, size = 0x12000, scoped, tag = 'internal scratch']
  #allocation2 [shape = 'f32[48,64]{1,0:T(8,128)}', space=vmem, size = 0x6000, scoped, tag = 'scratch operand']
  #allocation3 [shape = 'f32[1,1]{1,0:T(1,128)S(1)}', space=vmem, size = 0x200, scoped, tag = 'scoped memory for mote_net_forward.1']
  %s0 = inlined_call_operand.vmem [shape: f32[32,48], index: 0, kind: input, shape index: {}]
  %s1 = inlined_call_operand.vmem [shape: bf16[48,64], index: 1, kind: input, shape index: {}]
  %s2 = inlined_call_operand.vmem [shape: f32[1,64], index: 2, kind: input, shape index: {}]
  %s3 = inlined_call_operand.vmem [shape: f32[1,64], index: 3, kind: input, shape index: {}]
  %s4 = inlined_call_operand.vmem [shape: f32[24,64], index: 4, kind: input, shape index: {}]
  %s5 = inlined_call_operand.vmem [shape: f32[48,48], index: 5, kind: input, shape index: {}]
  %s6 = inlined_call_operand.vmem [shape: f32[2,1,64], index: 6, kind: input, shape index: {}]
  %s7 = inlined_call_operand.vmem [shape: f32[2,1,64], index: 7, kind: input, shape index: {}]
  %s8 = inlined_call_operand.vmem [shape: bf16[2,64,192], index: 8, kind: input, shape index: {}]
  %s9 = inlined_call_operand.vmem [shape: f32[2,1,192], index: 9, kind: input, shape index: {}]
  %s10 = inlined_call_operand.vmem [shape: bf16[2,64,64], index: 10, kind: input, shape index: {}]
  %s11 = inlined_call_operand.vmem [shape: f32[2,1,64], index: 11, kind: input, shape index: {}]
  %s12 = inlined_call_operand.vmem [shape: f32[2,1,64], index: 12, kind: input, shape index: {}]
  %s13 = inlined_call_operand.vmem [shape: f32[2,1,64], index: 13, kind: input, shape index: {}]
  %s14 = inlined_call_operand.vmem [shape: bf16[2,64,256], index: 14, kind: input, shape index: {}]
  %s15 = inlined_call_operand.vmem [shape: f32[2,1,256], index: 15, kind: input, shape index: {}]
  %s16 = inlined_call_operand.vmem [shape: bf16[2,256,64], index: 16, kind: input, shape index: {}]
  %s17 = inlined_call_operand.vmem [shape: f32[2,1,64], index: 17, kind: input, shape index: {}]
  %s18 = inlined_call_operand.vmem [shape: bf16[2,64,16], index: 18, kind: input, shape index: {}]
  %s19 = inlined_call_operand.vmem [shape: f32[2,1,16], index: 19, kind: input, shape index: {}]
  %s20 = inlined_call_operand.vmem [shape: bf16[2,16,64], index: 20, kind: input, shape index: {}]
  %s21 = inlined_call_operand.vmem [shape: f32[2,1,64], index: 21, kind: input, shape index: {}]
  %s22 = inlined_call_operand.vmem [shape: f32[1,64], index: 22, kind: input, shape index: {}]
  %s23 = inlined_call_operand.vmem [shape: f32[1,64], index: 23, kind: input, shape index: {}]
  %s24 = inlined_call_operand.vmem [shape: f32[128,64], index: 24, kind: input, shape index: {}]
  %s25 = inlined_call_operand.<no memory space> [shape: f32[1,1], index: 25, kind: input, shape index: {}]
  %s26 = inlined_call_operand.hbm [shape: f32[2,64], index: 26, kind: output, shape index: {0}]
  %s27 = inlined_call_operand.hbm [shape: f32[2,128], index: 27, kind: output, shape index: {1}]
  %28 = xla_tuple %s26, %s27
  %s29 = sld [smem:[#allocation0]]
  $region153: #{mote_net_forward.1} parent=0
    _
  %s31 = ssub.s32 1, %s29
  %s32 = scalar_select 0, %s31, %s29
  %v33 = vstv %s25
  %34 = vst [vmem:[#allocation3] sm:$0x1] %v33
  $region1: #{mote_net_forward.1} parent=0
    #allocation4 [shape = 'u8[1024]{0}', space=vmem, size = 0x400, scoped, tag = 'output window, operand 0, single buffered']
    #allocation5 [shape = 's32[2]{0}', space=sflag, size = 0x8, scoped, tag = 'scoped memory for mote_net_forward.1']
    #allocation6 [shape = 'u8[1024]{0}', space=vmem, size = 0x400, scoped, tag = 'output window, operand 1, single buffered']
    #allocation7 [shape = 's32[1]{0}', space=sflag, size = 0x4, scoped, tag = 'scoped memory for mote_net_forward.1']
    %35 = vsyncpa [#allocation5], 0
    %36 = vsyncpa [#allocation7], 0
    loop: start=0, step=1, limit=4
    $region2: #{mote_net_forward.1} parent=1 // loop_pre_header
      _
    $region3: #{mote_net_forward.1} parent=1 // loop_header
      %s38 = sphi 0, %s42
      %p39 = scmp.ge.s32.totalorder %s38, 4
      %s46 = sphi 0, %s46
      %s48 = sphi 0, %s46
      %s49 = sphi 0, %s48
      %s63 = sphi 0, %s49
      %s67 = sphi 0, %s67
      %s69 = sphi 0, %s67
      %s70 = sphi 0, %s69
      %s84 = sphi 0, %s70
      %s88 = sphi 0, %s88
      %s90 = sphi 0, %s88
      %s91 = sphi 0, %s90
      %s105 = sphi 0, %s91
      %s109 = sphi 0, %s109
      %s111 = sphi 0, %s109
      %s112 = sphi 0, %s111
      %s126 = sphi 0, %s112
      %s130 = sphi 0, %s130
      %s132 = sphi 0, %s130
      %s133 = sphi 0, %s132
      %s147 = sphi 0, %s133
      %s151 = sphi 0, %s151
      %s153 = sphi 0, %s151
      %s154 = sphi 0, %s153
      %s168 = sphi 0, %s154
      %s174 = sphi 0, %s176
      %s177 = sphi 0, %s174
      %s178 = sphi 0, %s177
      %s194 = sphi 0, %s178
      %s200 = sphi 0, %s202
      %s203 = sphi 0, %s200
      %s204 = sphi 0, %s203
      %s220 = sphi 0, %s204
      %s226 = sphi 0, %s228
      %s229 = sphi 0, %s226
      %s230 = sphi 0, %s229
      %s246 = sphi 0, %s230
      %s252 = sphi 0, %s254
      %s255 = sphi 0, %s252
      %s256 = sphi 0, %s255
      %s272 = sphi 0, %s256
      %s278 = sphi 0, %s280
      %s281 = sphi 0, %s278
      %s282 = sphi 0, %s281
      %s298 = sphi 0, %s282
      %s304 = sphi 0, %s306
      %s307 = sphi 0, %s304
      %s308 = sphi 0, %s307
      %s324 = sphi 0, %s308
      %s330 = sphi 0, %s332
      %s333 = sphi 0, %s330
      %s334 = sphi 0, %s333
      %s350 = sphi 0, %s334
      %s356 = sphi 0, %s358
      %s359 = sphi 0, %s356
      %s360 = sphi 0, %s359
      %s376 = sphi 0, %s360
      %s382 = sphi 0, %s384
      %s385 = sphi 0, %s382
      %s386 = sphi 0, %s385
      %s402 = sphi 0, %s386
      %s408 = sphi 0, %s410
      %s411 = sphi 0, %s408
      %s412 = sphi 0, %s411
      %s428 = sphi 0, %s412
      %s434 = sphi 0, %s436
      %s437 = sphi 0, %s434
      %s438 = sphi 0, %s437
      %s454 = sphi 0, %s438
      %s460 = sphi 0, %s462
      %s463 = sphi 0, %s460
      %s464 = sphi 0, %s463
      %s480 = sphi 0, %s464
      %s486 = sphi 0, %s488
      %s489 = sphi 0, %s486
      %s490 = sphi 0, %s489
      %s506 = sphi 0, %s490
      %s512 = sphi 0, %s514
      %s515 = sphi 0, %s512
      %s516 = sphi 0, %s515
      %s532 = sphi 0, %s516
      %s538 = sphi 0, %s540
      %s541 = sphi 0, %s538
      %s542 = sphi 0, %s541
      %s558 = sphi 0, %s542
      %s564 = sphi 0, %s566
      %s567 = sphi 0, %s564
      %s568 = sphi 0, %s567
      %s584 = sphi 0, %s568
      %s588 = sphi 0, %s588
      %s590 = sphi 0, %s588
      %s591 = sphi 0, %s590
      %s605 = sphi 0, %s591
      %s609 = sphi 0, %s609
      %s611 = sphi 0, %s609
      %s612 = sphi 0, %s611
      %s626 = sphi 0, %s612
      %s630 = sphi 0, %s630
      %s632 = sphi 0, %s630
      %s633 = sphi 0, %s632
      %s647 = sphi 0, %s633
      %s651 = sphi 0, %s651
      %s653 = sphi 0, %s651
      %s654 = sphi 0, %s653
      %s668 = sphi 0, %s654
      %s672 = sphi 0, %s672
      %s674 = sphi 0, %s672
      %s675 = sphi 0, %s674
      %s689 = sphi 0, %s675
      %s693 = sphi 0, %s693
      %s695 = sphi 0, %s693
      %s696 = sphi 0, %s695
      %s710 = sphi 0, %s696
    $region4: #{mote_net_forward.1} parent=1 // loop_header_branch
      %41 = sbr.rel (%p39) target = $region8
    $region5: #{mote_net_forward.1} parent=1 // loop_body
      %s43 = ssub.s32 %s38, 1
      %s44 = ssub.s32 %s38, 2
      %s45 = sadd.s32 %s38, 1
      %s47 = sadd.s32 %s46, 1
      %p50 = scmp.eq.s32.totalorder %s38, 1
      %p51 = scmp.ne.s32.totalorder %s46, %s48
      %p52 = scmp.eq.s32.totalorder %s38, 0
      %p53 = por %p51, %p52
      %p54 = scmp.ne.s32.totalorder %s46, %s48
      %p55 = scmp.eq.s32.totalorder %s43, 1
      %p56 = por %p54, %p55
      %p57 = scmp.ne.s32.totalorder %s48, %s49
      %p58 = scmp.eq.s32.totalorder %s43, 0
      %p59 = por %p57, %p58
      %p60 = scmp.ne.s32.totalorder %s48, %s49
      %p61 = scmp.eq.s32.totalorder %s44, 1
      %p62 = por %p60, %p61
      %p64 = scmp.ne.s32.totalorder %s49, %s63
      %p65 = scmp.eq.s32.totalorder %s44, 0
      %p66 = por %p64, %p65
      %s68 = sadd.s32 %s67, 1
      %p71 = scmp.eq.s32.totalorder %s38, 1
      %p72 = scmp.ne.s32.totalorder %s67, %s69
      %p73 = scmp.eq.s32.totalorder %s38, 0
      %p74 = por %p72, %p73
      %p75 = scmp.ne.s32.totalorder %s67, %s69
      %p76 = scmp.eq.s32.totalorder %s43, 1
      %p77 = por %p75, %p76
      %p78 = scmp.ne.s32.totalorder %s69, %s70
      %p79 = scmp.eq.s32.totalorder %s43, 0
      %p80 = por %p78, %p79
      %p81 = scmp.ne.s32.totalorder %s69, %s70
      %p82 = scmp.eq.s32.totalorder %s44, 1
      %p83 = por %p81, %p82
      %p85 = scmp.ne.s32.totalorder %s70, %s84
      %p86 = scmp.eq.s32.totalorder %s44, 0
      %p87 = por %p85, %p86
      %s89 = sadd.s32 %s88, 1
      %p92 = scmp.eq.s32.totalorder %s38, 1
      %p93 = scmp.ne.s32.totalorder %s88, %s90
      %p94 = scmp.eq.s32.totalorder %s38, 0
      %p95 = por %p93, %p94
      %p96 = scmp.ne.s32.totalorder %s88, %s90
      %p97 = scmp.eq.s32.totalorder %s43, 1
      %p98 = por %p96, %p97
      %p99 = scmp.ne.s32.totalorder %s90, %s91
      %p100 = scmp.eq.s32.totalorder %s43, 0
      %p101 = por %p99, %p100
      %p102 = scmp.ne.s32.totalorder %s90, %s91
      %p103 = scmp.eq.s32.totalorder %s44, 1
      %p104 = por %p102, %p103
      %p106 = scmp.ne.s32.totalorder %s91, %s105
      %p107 = scmp.eq.s32.totalorder %s44, 0
      %p108 = por %p106, %p107
      %s110 = sadd.s32 %s109, 1
      %p113 = scmp.eq.s32.totalorder %s38, 1
      %p114 = scmp.ne.s32.totalorder %s109, %s111
      %p115 = scmp.eq.s32.totalorder %s38, 0
      %p116 = por %p114, %p115
      %p117 = scmp.ne.s32.totalorder %s109, %s111
      %p118 = scmp.eq.s32.totalorder %s43, 1
      %p119 = por %p117, %p118
      %p120 = scmp.ne.s32.totalorder %s111, %s112
      %p121 = scmp.eq.s32.totalorder %s43, 0
      %p122 = por %p120, %p121
      %p123 = scmp.ne.s32.totalorder %s111, %s112
      %p124 = scmp.eq.s32.totalorder %s44, 1
      %p125 = por %p123, %p124
      %p127 = scmp.ne.s32.totalorder %s112, %s126
      %p128 = scmp.eq.s32.totalorder %s44, 0
      %p129 = por %p127, %p128
      %s131 = sadd.s32 %s130, 1
      %p134 = scmp.eq.s32.totalorder %s38, 1
      %p135 = scmp.ne.s32.totalorder %s130, %s132
      %p136 = scmp.eq.s32.totalorder %s38, 0
      %p137 = por %p135, %p136
      %p138 = scmp.ne.s32.totalorder %s130, %s132
      %p139 = scmp.eq.s32.totalorder %s43, 1
      %p140 = por %p138, %p139
      %p141 = scmp.ne.s32.totalorder %s132, %s133
      %p142 = scmp.eq.s32.totalorder %s43, 0
      %p143 = por %p141, %p142
      %p144 = scmp.ne.s32.totalorder %s132, %s133
      %p145 = scmp.eq.s32.totalorder %s44, 1
      %p146 = por %p144, %p145
      %p148 = scmp.ne.s32.totalorder %s133, %s147
      %p149 = scmp.eq.s32.totalorder %s44, 0
      %p150 = por %p148, %p149
      %s152 = sadd.s32 %s151, 1
      %p155 = scmp.eq.s32.totalorder %s38, 1
      %p156 = scmp.ne.s32.totalorder %s151, %s153
      %p157 = scmp.eq.s32.totalorder %s38, 0
      %p158 = por %p156, %p157
      %p159 = scmp.ne.s32.totalorder %s151, %s153
      %p160 = scmp.eq.s32.totalorder %s43, 1
      %p161 = por %p159, %p160
      %p162 = scmp.ne.s32.totalorder %s153, %s154
      %p163 = scmp.eq.s32.totalorder %s43, 0
      %p164 = por %p162, %p163
      %p165 = scmp.ne.s32.totalorder %s153, %s154
      %p166 = scmp.eq.s32.totalorder %s44, 1
      %p167 = por %p165, %p166
      %p169 = scmp.ne.s32.totalorder %s154, %s168
      %p170 = scmp.eq.s32.totalorder %s44, 0
      %p171 = por %p169, %p170
      %s172 = ssub.s32 %s38, %s45
      %p173 = scmp.eq.s32.totalorder %s172, 0
      %s175 = sadd.s32 %s174, 1
      %s176 = scalar_select %p173, %s174, %s175
      %p179 = pneg %p173
      %p180 = scmp.eq.s32.totalorder %s38, 1
      %p181 = por %p179, %p180
      %p182 = scmp.ne.s32.totalorder %s174, %s177
      %p183 = scmp.eq.s32.totalorder %s38, 0
      %p184 = por %p182, %p183
      %p185 = scmp.ne.s32.totalorder %s174, %s177
      %p186 = scmp.eq.s32.totalorder %s43, 1
      %p187 = por %p185, %p186
      %p188 = scmp.ne.s32.totalorder %s177, %s178
      %p189 = scmp.eq.s32.totalorder %s43, 0
      %p190 = por %p188, %p189
      %p191 = scmp.ne.s32.totalorder %s177, %s178
      %p192 = scmp.eq.s32.totalorder %s44, 1
      %p193 = por %p191, %p192
      %p195 = scmp.ne.s32.totalorder %s178, %s194
      %p196 = scmp.eq.s32.totalorder %s44, 0
      %p197 = por %p195, %p196
      %s198 = ssub.s32 %s38, %s45
      %p199 = scmp.eq.s32.totalorder %s198, 0
      %s201 = sadd.s32 %s200, 1
      %s202 = scalar_select %p199, %s200, %s201
      %p205 = pneg %p199
      %p206 = scmp.eq.s32.totalorder %s38, 1
      %p207 = por %p205, %p206
      %p208 = scmp.ne.s32.totalorder %s200, %s203
      %p209 = scmp.eq.s32.totalorder %s38, 0
      %p210 = por %p208, %p209
      %p211 = scmp.ne.s32.totalorder %s200, %s203
      %p212 = scmp.eq.s32.totalorder %s43, 1
      %p213 = por %p211, %p212
      %p214 = scmp.ne.s32.totalorder %s203, %s204
      %p215 = scmp.eq.s32.totalorder %s43, 0
      %p216 = por %p214, %p215
      %p217 = scmp.ne.s32.totalorder %s203, %s204
      %p218 = scmp.eq.s32.totalorder %s44, 1
      %p219 = por %p217, %p218
      %p221 = scmp.ne.s32.totalorder %s204, %s220
      %p222 = scmp.eq.s32.totalorder %s44, 0
      %p223 = por %p221, %p222
      %s224 = ssub.s32 %s38, %s45
      %p225 = scmp.eq.s32.totalorder %s224, 0
      %s227 = sadd.s32 %s226, 1
      %s228 = scalar_select %p225, %s226, %s227
      %p231 = pneg %p225
      %p232 = scmp.eq.s32.totalorder %s38, 1
      %p233 = por %p231, %p232
      %p234 = scmp.ne.s32.totalorder %s226, %s229
      %p235 = scmp.eq.s32.totalorder %s38, 0
      %p236 = por %p234, %p235
      %p237 = scmp.ne.s32.totalorder %s226, %s229
      %p238 = scmp.eq.s32.totalorder %s43, 1
      %p239 = por %p237, %p238
      %p240 = scmp.ne.s32.totalorder %s229, %s230
      %p241 = scmp.eq.s32.totalorder %s43, 0
      %p242 = por %p240, %p241
      %p243 = scmp.ne.s32.totalorder %s229, %s230
      %p244 = scmp.eq.s32.totalorder %s44, 1
      %p245 = por %p243, %p244
      %p247 = scmp.ne.s32.totalorder %s230, %s246
      %p248 = scmp.eq.s32.totalorder %s44, 0
      %p249 = por %p247, %p248
      %s250 = ssub.s32 %s38, %s45
      %p251 = scmp.eq.s32.totalorder %s250, 0
      %s253 = sadd.s32 %s252, 1
      %s254 = scalar_select %p251, %s252, %s253
      %p257 = pneg %p251
      %p258 = scmp.eq.s32.totalorder %s38, 1
      %p259 = por %p257, %p258
      %p260 = scmp.ne.s32.totalorder %s252, %s255
      %p261 = scmp.eq.s32.totalorder %s38, 0
      %p262 = por %p260, %p261
      %p263 = scmp.ne.s32.totalorder %s252, %s255
      %p264 = scmp.eq.s32.totalorder %s43, 1
      %p265 = por %p263, %p264
      %p266 = scmp.ne.s32.totalorder %s255, %s256
      %p267 = scmp.eq.s32.totalorder %s43, 0
      %p268 = por %p266, %p267
      %p269 = scmp.ne.s32.totalorder %s255, %s256
      %p270 = scmp.eq.s32.totalorder %s44, 1
      %p271 = por %p269, %p270
      %p273 = scmp.ne.s32.totalorder %s256, %s272
      %p274 = scmp.eq.s32.totalorder %s44, 0
      %p275 = por %p273, %p274
      %s276 = ssub.s32 %s38, %s45
      %p277 = scmp.eq.s32.totalorder %s276, 0
      %s279 = sadd.s32 %s278, 1
      %s280 = scalar_select %p277, %s278, %s279
      %p283 = pneg %p277
      %p284 = scmp.eq.s32.totalorder %s38, 1
      %p285 = por %p283, %p284
      %p286 = scmp.ne.s32.totalorder %s278, %s281
      %p287 = scmp.eq.s32.totalorder %s38, 0
      %p288 = por %p286, %p287
      %p289 = scmp.ne.s32.totalorder %s278, %s281
      %p290 = scmp.eq.s32.totalorder %s43, 1
      %p291 = por %p289, %p290
      %p292 = scmp.ne.s32.totalorder %s281, %s282
      %p293 = scmp.eq.s32.totalorder %s43, 0
      %p294 = por %p292, %p293
      %p295 = scmp.ne.s32.totalorder %s281, %s282
      %p296 = scmp.eq.s32.totalorder %s44, 1
      %p297 = por %p295, %p296
      %p299 = scmp.ne.s32.totalorder %s282, %s298
      %p300 = scmp.eq.s32.totalorder %s44, 0
      %p301 = por %p299, %p300
      %s302 = ssub.s32 %s38, %s45
      %p303 = scmp.eq.s32.totalorder %s302, 0
      %s305 = sadd.s32 %s304, 1
      %s306 = scalar_select %p303, %s304, %s305
      %p309 = pneg %p303
      %p310 = scmp.eq.s32.totalorder %s38, 1
      %p311 = por %p309, %p310
      %p312 = scmp.ne.s32.totalorder %s304, %s307
      %p313 = scmp.eq.s32.totalorder %s38, 0
      %p314 = por %p312, %p313
      %p315 = scmp.ne.s32.totalorder %s304, %s307
      %p316 = scmp.eq.s32.totalorder %s43, 1
      %p317 = por %p315, %p316
      %p318 = scmp.ne.s32.totalorder %s307, %s308
      %p319 = scmp.eq.s32.totalorder %s43, 0
      %p320 = por %p318, %p319
      %p321 = scmp.ne.s32.totalorder %s307, %s308
      %p322 = scmp.eq.s32.totalorder %s44, 1
      %p323 = por %p321, %p322
      %p325 = scmp.ne.s32.totalorder %s308, %s324
      %p326 = scmp.eq.s32.totalorder %s44, 0
      %p327 = por %p325, %p326
      %s328 = ssub.s32 %s38, %s45
      %p329 = scmp.eq.s32.totalorder %s328, 0
      %s331 = sadd.s32 %s330, 1
      %s332 = scalar_select %p329, %s330, %s331
      %p335 = pneg %p329
      %p336 = scmp.eq.s32.totalorder %s38, 1
      %p337 = por %p335, %p336
      %p338 = scmp.ne.s32.totalorder %s330, %s333
      %p339 = scmp.eq.s32.totalorder %s38, 0
      %p340 = por %p338, %p339
      %p341 = scmp.ne.s32.totalorder %s330, %s333
      %p342 = scmp.eq.s32.totalorder %s43, 1
      %p343 = por %p341, %p342
      %p344 = scmp.ne.s32.totalorder %s333, %s334
      %p345 = scmp.eq.s32.totalorder %s43, 0
      %p346 = por %p344, %p345
      %p347 = scmp.ne.s32.totalorder %s333, %s334
      %p348 = scmp.eq.s32.totalorder %s44, 1
      %p349 = por %p347, %p348
      %p351 = scmp.ne.s32.totalorder %s334, %s350
      %p352 = scmp.eq.s32.totalorder %s44, 0
      %p353 = por %p351, %p352
      %s354 = ssub.s32 %s38, %s45
      %p355 = scmp.eq.s32.totalorder %s354, 0
      %s357 = sadd.s32 %s356, 1
      %s358 = scalar_select %p355, %s356, %s357
      %p361 = pneg %p355
      %p362 = scmp.eq.s32.totalorder %s38, 1
      %p363 = por %p361, %p362
      %p364 = scmp.ne.s32.totalorder %s356, %s359
      %p365 = scmp.eq.s32.totalorder %s38, 0
      %p366 = por %p364, %p365
      %p367 = scmp.ne.s32.totalorder %s356, %s359
      %p368 = scmp.eq.s32.totalorder %s43, 1
      %p369 = por %p367, %p368
      %p370 = scmp.ne.s32.totalorder %s359, %s360
      %p371 = scmp.eq.s32.totalorder %s43, 0
      %p372 = por %p370, %p371
      %p373 = scmp.ne.s32.totalorder %s359, %s360
      %p374 = scmp.eq.s32.totalorder %s44, 1
      %p375 = por %p373, %p374
      %p377 = scmp.ne.s32.totalorder %s360, %s376
      %p378 = scmp.eq.s32.totalorder %s44, 0
      %p379 = por %p377, %p378
      %s380 = ssub.s32 %s38, %s45
      %p381 = scmp.eq.s32.totalorder %s380, 0
      %s383 = sadd.s32 %s382, 1
      %s384 = scalar_select %p381, %s382, %s383
      %p387 = pneg %p381
      %p388 = scmp.eq.s32.totalorder %s38, 1
      %p389 = por %p387, %p388
      %p390 = scmp.ne.s32.totalorder %s382, %s385
      %p391 = scmp.eq.s32.totalorder %s38, 0
      %p392 = por %p390, %p391
      %p393 = scmp.ne.s32.totalorder %s382, %s385
      %p394 = scmp.eq.s32.totalorder %s43, 1
      %p395 = por %p393, %p394
      %p396 = scmp.ne.s32.totalorder %s385, %s386
      %p397 = scmp.eq.s32.totalorder %s43, 0
      %p398 = por %p396, %p397
      %p399 = scmp.ne.s32.totalorder %s385, %s386
      %p400 = scmp.eq.s32.totalorder %s44, 1
      %p401 = por %p399, %p400
      %p403 = scmp.ne.s32.totalorder %s386, %s402
      %p404 = scmp.eq.s32.totalorder %s44, 0
      %p405 = por %p403, %p404
      %s406 = ssub.s32 %s38, %s45
      %p407 = scmp.eq.s32.totalorder %s406, 0
      %s409 = sadd.s32 %s408, 1
      %s410 = scalar_select %p407, %s408, %s409
      %p413 = pneg %p407
      %p414 = scmp.eq.s32.totalorder %s38, 1
      %p415 = por %p413, %p414
      %p416 = scmp.ne.s32.totalorder %s408, %s411
      %p417 = scmp.eq.s32.totalorder %s38, 0
      %p418 = por %p416, %p417
      %p419 = scmp.ne.s32.totalorder %s408, %s411
      %p420 = scmp.eq.s32.totalorder %s43, 1
      %p421 = por %p419, %p420
      %p422 = scmp.ne.s32.totalorder %s411, %s412
      %p423 = scmp.eq.s32.totalorder %s43, 0
      %p424 = por %p422, %p423
      %p425 = scmp.ne.s32.totalorder %s411, %s412
      %p426 = scmp.eq.s32.totalorder %s44, 1
      %p427 = por %p425, %p426
      %p429 = scmp.ne.s32.totalorder %s412, %s428
      %p430 = scmp.eq.s32.totalorder %s44, 0
      %p431 = por %p429, %p430
      %s432 = ssub.s32 %s38, %s45
      %p433 = scmp.eq.s32.totalorder %s432, 0
      %s435 = sadd.s32 %s434, 1
      %s436 = scalar_select %p433, %s434, %s435
      %p439 = pneg %p433
      %p440 = scmp.eq.s32.totalorder %s38, 1
      %p441 = por %p439, %p440
      %p442 = scmp.ne.s32.totalorder %s434, %s437
      %p443 = scmp.eq.s32.totalorder %s38, 0
      %p444 = por %p442, %p443
      %p445 = scmp.ne.s32.totalorder %s434, %s437
      %p446 = scmp.eq.s32.totalorder %s43, 1
      %p447 = por %p445, %p446
      %p448 = scmp.ne.s32.totalorder %s437, %s438
      %p449 = scmp.eq.s32.totalorder %s43, 0
      %p450 = por %p448, %p449
      %p451 = scmp.ne.s32.totalorder %s437, %s438
      %p452 = scmp.eq.s32.totalorder %s44, 1
      %p453 = por %p451, %p452
      %p455 = scmp.ne.s32.totalorder %s438, %s454
      %p456 = scmp.eq.s32.totalorder %s44, 0
      %p457 = por %p455, %p456
      %s458 = ssub.s32 %s38, %s45
      %p459 = scmp.eq.s32.totalorder %s458, 0
      %s461 = sadd.s32 %s460, 1
      %s462 = scalar_select %p459, %s460, %s461
      %p465 = pneg %p459
      %p466 = scmp.eq.s32.totalorder %s38, 1
      %p467 = por %p465, %p466
      %p468 = scmp.ne.s32.totalorder %s460, %s463
      %p469 = scmp.eq.s32.totalorder %s38, 0
      %p470 = por %p468, %p469
      %p471 = scmp.ne.s32.totalorder %s460, %s463
      %p472 = scmp.eq.s32.totalorder %s43, 1
      %p473 = por %p471, %p472
      %p474 = scmp.ne.s32.totalorder %s463, %s464
      %p475 = scmp.eq.s32.totalorder %s43, 0
      %p476 = por %p474, %p475
      %p477 = scmp.ne.s32.totalorder %s463, %s464
      %p478 = scmp.eq.s32.totalorder %s44, 1
      %p479 = por %p477, %p478
      %p481 = scmp.ne.s32.totalorder %s464, %s480
      %p482 = scmp.eq.s32.totalorder %s44, 0
      %p483 = por %p481, %p482
      %s484 = ssub.s32 %s38, %s45
      %p485 = scmp.eq.s32.totalorder %s484, 0
      %s487 = sadd.s32 %s486, 1
      %s488 = scalar_select %p485, %s486, %s487
      %p491 = pneg %p485
      %p492 = scmp.eq.s32.totalorder %s38, 1
      %p493 = por %p491, %p492
      %p494 = scmp.ne.s32.totalorder %s486, %s489
      %p495 = scmp.eq.s32.totalorder %s38, 0
      %p496 = por %p494, %p495
      %p497 = scmp.ne.s32.totalorder %s486, %s489
      %p498 = scmp.eq.s32.totalorder %s43, 1
      %p499 = por %p497, %p498
      %p500 = scmp.ne.s32.totalorder %s489, %s490
      %p501 = scmp.eq.s32.totalorder %s43, 0
      %p502 = por %p500, %p501
      %p503 = scmp.ne.s32.totalorder %s489, %s490
      %p504 = scmp.eq.s32.totalorder %s44, 1
      %p505 = por %p503, %p504
      %p507 = scmp.ne.s32.totalorder %s490, %s506
      %p508 = scmp.eq.s32.totalorder %s44, 0
      %p509 = por %p507, %p508
      %s510 = ssub.s32 %s38, %s45
      %p511 = scmp.eq.s32.totalorder %s510, 0
      %s513 = sadd.s32 %s512, 1
      %s514 = scalar_select %p511, %s512, %s513
      %p517 = pneg %p511
      %p518 = scmp.eq.s32.totalorder %s38, 1
      %p519 = por %p517, %p518
      %p520 = scmp.ne.s32.totalorder %s512, %s515
      %p521 = scmp.eq.s32.totalorder %s38, 0
      %p522 = por %p520, %p521
      %p523 = scmp.ne.s32.totalorder %s512, %s515
      %p524 = scmp.eq.s32.totalorder %s43, 1
      %p525 = por %p523, %p524
      %p526 = scmp.ne.s32.totalorder %s515, %s516
      %p527 = scmp.eq.s32.totalorder %s43, 0
      %p528 = por %p526, %p527
      %p529 = scmp.ne.s32.totalorder %s515, %s516
      %p530 = scmp.eq.s32.totalorder %s44, 1
      %p531 = por %p529, %p530
      %p533 = scmp.ne.s32.totalorder %s516, %s532
      %p534 = scmp.eq.s32.totalorder %s44, 0
      %p535 = por %p533, %p534
      %s536 = ssub.s32 %s38, %s45
      %p537 = scmp.eq.s32.totalorder %s536, 0
      %s539 = sadd.s32 %s538, 1
      %s540 = scalar_select %p537, %s538, %s539
      %p543 = pneg %p537
      %p544 = scmp.eq.s32.totalorder %s38, 1
      %p545 = por %p543, %p544
      %p546 = scmp.ne.s32.totalorder %s538, %s541
      %p547 = scmp.eq.s32.totalorder %s38, 0
      %p548 = por %p546, %p547
      %p549 = scmp.ne.s32.totalorder %s538, %s541
      %p550 = scmp.eq.s32.totalorder %s43, 1
      %p551 = por %p549, %p550
      %p552 = scmp.ne.s32.totalorder %s541, %s542
      %p553 = scmp.eq.s32.totalorder %s43, 0
      %p554 = por %p552, %p553
      %p555 = scmp.ne.s32.totalorder %s541, %s542
      %p556 = scmp.eq.s32.totalorder %s44, 1
      %p557 = por %p555, %p556
      %p559 = scmp.ne.s32.totalorder %s542, %s558
      %p560 = scmp.eq.s32.totalorder %s44, 0
      %p561 = por %p559, %p560
      %s562 = ssub.s32 %s38, %s45
      %p563 = scmp.eq.s32.totalorder %s562, 0
      %s565 = sadd.s32 %s564, 1
      %s566 = scalar_select %p563, %s564, %s565
      %p569 = pneg %p563
      %p570 = scmp.eq.s32.totalorder %s38, 1
      %p571 = por %p569, %p570
      %p572 = scmp.ne.s32.totalorder %s564, %s567
      %p573 = scmp.eq.s32.totalorder %s38, 0
      %p574 = por %p572, %p573
      %p575 = scmp.ne.s32.totalorder %s564, %s567
      %p576 = scmp.eq.s32.totalorder %s43, 1
      %p577 = por %p575, %p576
      %p578 = scmp.ne.s32.totalorder %s567, %s568
      %p579 = scmp.eq.s32.totalorder %s43, 0
      %p580 = por %p578, %p579
      %p581 = scmp.ne.s32.totalorder %s567, %s568
      %p582 = scmp.eq.s32.totalorder %s44, 1
      %p583 = por %p581, %p582
      %p585 = scmp.ne.s32.totalorder %s568, %s584
      %p586 = scmp.eq.s32.totalorder %s44, 0
      %p587 = por %p585, %p586
      %s589 = sadd.s32 %s588, 1
      %p592 = scmp.eq.s32.totalorder %s38, 1
      %p593 = scmp.ne.s32.totalorder %s588, %s590
      %p594 = scmp.eq.s32.totalorder %s38, 0
      %p595 = por %p593, %p594
      %p596 = scmp.ne.s32.totalorder %s588, %s590
      %p597 = scmp.eq.s32.totalorder %s43, 1
      %p598 = por %p596, %p597
      %p599 = scmp.ne.s32.totalorder %s590, %s591
      %p600 = scmp.eq.s32.totalorder %s43, 0
      %p601 = por %p599, %p600
      %p602 = scmp.ne.s32.totalorder %s590, %s591
      %p603 = scmp.eq.s32.totalorder %s44, 1
      %p604 = por %p602, %p603
      %p606 = scmp.ne.s32.totalorder %s591, %s605
      %p607 = scmp.eq.s32.totalorder %s44, 0
      %p608 = por %p606, %p607
      %s610 = sadd.s32 %s609, 1
      %p613 = scmp.eq.s32.totalorder %s38, 1
      %p614 = scmp.ne.s32.totalorder %s609, %s611
      %p615 = scmp.eq.s32.totalorder %s38, 0
      %p616 = por %p614, %p615
      %p617 = scmp.ne.s32.totalorder %s609, %s611
      %p618 = scmp.eq.s32.totalorder %s43, 1
      %p619 = por %p617, %p618
      %p620 = scmp.ne.s32.totalorder %s611, %s612
      %p621 = scmp.eq.s32.totalorder %s43, 0
      %p622 = por %p620, %p621
      %p623 = scmp.ne.s32.totalorder %s611, %s612
      %p624 = scmp.eq.s32.totalorder %s44, 1
      %p625 = por %p623, %p624
      %p627 = scmp.ne.s32.totalorder %s612, %s626
      %p628 = scmp.eq.s32.totalorder %s44, 0
      %p629 = por %p627, %p628
      %s631 = sadd.s32 %s630, 1
      %p634 = scmp.eq.s32.totalorder %s38, 1
      %p635 = scmp.ne.s32.totalorder %s630, %s632
      %p636 = scmp.eq.s32.totalorder %s38, 0
      %p637 = por %p635, %p636
      %p638 = scmp.ne.s32.totalorder %s630, %s632
      %p639 = scmp.eq.s32.totalorder %s43, 1
      %p640 = por %p638, %p639
      %p641 = scmp.ne.s32.totalorder %s632, %s633
      %p642 = scmp.eq.s32.totalorder %s43, 0
      %p643 = por %p641, %p642
      %p644 = scmp.ne.s32.totalorder %s632, %s633
      %p645 = scmp.eq.s32.totalorder %s44, 1
      %p646 = por %p644, %p645
      %p648 = scmp.ne.s32.totalorder %s633, %s647
      %p649 = scmp.eq.s32.totalorder %s44, 0
      %p650 = por %p648, %p649
      %s652 = sadd.s32 %s651, 1
      %p655 = scmp.eq.s32.totalorder %s38, 1
      %p656 = scmp.ne.s32.totalorder %s651, %s653
      %p657 = scmp.eq.s32.totalorder %s38, 0
      %p658 = por %p656, %p657
      %p659 = scmp.ne.s32.totalorder %s651, %s653
      %p660 = scmp.eq.s32.totalorder %s43, 1
      %p661 = por %p659, %p660
      %p662 = scmp.ne.s32.totalorder %s653, %s654
      %p663 = scmp.eq.s32.totalorder %s43, 0
      %p664 = por %p662, %p663
      %p665 = scmp.ne.s32.totalorder %s653, %s654
      %p666 = scmp.eq.s32.totalorder %s44, 1
      %p667 = por %p665, %p666
      %p669 = scmp.ne.s32.totalorder %s654, %s668
      %p670 = scmp.eq.s32.totalorder %s44, 0
      %p671 = por %p669, %p670
      %s673 = sadd.s32 %s672, 1
      %p676 = scmp.eq.s32.totalorder %s38, 1
      %p677 = scmp.ne.s32.totalorder %s672, %s674
      %p678 = scmp.eq.s32.totalorder %s38, 0
      %p679 = por %p677, %p678
      %p680 = scmp.ne.s32.totalorder %s672, %s674
      %p681 = scmp.eq.s32.totalorder %s43, 1
      %p682 = por %p680, %p681
      %p683 = scmp.ne.s32.totalorder %s674, %s675
      %p684 = scmp.eq.s32.totalorder %s43, 0
      %p685 = por %p683, %p684
      %p686 = scmp.ne.s32.totalorder %s674, %s675
      %p687 = scmp.eq.s32.totalorder %s44, 1
      %p688 = por %p686, %p687
      %p690 = scmp.ne.s32.totalorder %s675, %s689
      %p691 = scmp.eq.s32.totalorder %s44, 0
      %p692 = por %p690, %p691
      %s694 = sadd.s32 %s693, 1
      %p697 = scmp.eq.s32.totalorder %s38, 1
      %p698 = scmp.ne.s32.totalorder %s693, %s695
      %p699 = scmp.eq.s32.totalorder %s38, 0
      %p700 = por %p698, %p699
      %p701 = scmp.ne.s32.totalorder %s693, %s695
      %p702 = scmp.eq.s32.totalorder %s43, 1
      %p703 = por %p701, %p702
      %p704 = scmp.ne.s32.totalorder %s695, %s696
      %p705 = scmp.eq.s32.totalorder %s43, 0
      %p706 = por %p704, %p705
      %p707 = scmp.ne.s32.totalorder %s695, %s696
      %p708 = scmp.eq.s32.totalorder %s44, 1
      %p709 = por %p707, %p708
      %p711 = scmp.ne.s32.totalorder %s696, %s710
      %p712 = scmp.eq.s32.totalorder %s44, 0
      %p713 = por %p711, %p712
      %p714 = scmp.le.s32.totalorder 1, %s38
      %p715 = scmp.lt.s32.totalorder %s38, 3
      %p716 = pnand %p714, %p715
      %p717 = pneg %p716
      // Predicated region
      $region9: #{mote_net_forward.1} parent=5 // pred_check
        _
      $region10: #{mote_net_forward.1} parent=5 // pred_check_branch
        %719 = sbr.rel (%p716) target = $region12
      $region11: #{mote_net_forward.1} parent=5 // pred_region
        %s720 = ssub.s32 %s38, 1
        // Predicated region
        $region13: #{mote_net_forward.1} parent=11 // pred_check
          %p721 = pneg %p59
        $region14: #{mote_net_forward.1} parent=11 // pred_check_branch
          %723 = sbr.rel (%p721) target = $region16
        $region15: #{mote_net_forward.1} parent=11 // pred_region
          _
        $region16: #{mote_net_forward.1} parent=11 // pred_fallthru
          _
        // Predicated region
        $region17: #{mote_net_forward.1} parent=11 // pred_check
          %p724 = pneg %p80
        $region18: #{mote_net_forward.1} parent=11 // pred_check_branch
          %726 = sbr.rel (%p724) target = $region20
        $region19: #{mote_net_forward.1} parent=11 // pred_region
          _
        $region20: #{mote_net_forward.1} parent=11 // pred_fallthru
          _
        // Predicated region
        $region21: #{mote_net_forward.1} parent=11 // pred_check
          %p727 = pneg %p101
        $region22: #{mote_net_forward.1} parent=11 // pred_check_branch
          %729 = sbr.rel (%p727) target = $region24
        $region23: #{mote_net_forward.1} parent=11 // pred_region
          _
        $region24: #{mote_net_forward.1} parent=11 // pred_fallthru
          _
        // Predicated region
        $region25: #{mote_net_forward.1} parent=11 // pred_check
          %p730 = pneg %p122
        $region26: #{mote_net_forward.1} parent=11 // pred_check_branch
          %732 = sbr.rel (%p730) target = $region28
        $region27: #{mote_net_forward.1} parent=11 // pred_region
          _
        $region28: #{mote_net_forward.1} parent=11 // pred_fallthru
          _
        // Predicated region
        $region29: #{mote_net_forward.1} parent=11 // pred_check
          %p733 = pneg %p143
        $region30: #{mote_net_forward.1} parent=11 // pred_check_branch
          %735 = sbr.rel (%p733) target = $region32
        $region31: #{mote_net_forward.1} parent=11 // pred_region
          _
        $region32: #{mote_net_forward.1} parent=11 // pred_fallthru
          _
        // Predicated region
        $region33: #{mote_net_forward.1} parent=11 // pred_check
          %p736 = pneg %p164
        $region34: #{mote_net_forward.1} parent=11 // pred_check_branch
          %738 = sbr.rel (%p736) target = $region36
        $region35: #{mote_net_forward.1} parent=11 // pred_region
          _
        $region36: #{mote_net_forward.1} parent=11 // pred_fallthru
          _
        // Predicated region
        $region37: #{mote_net_forward.1} parent=11 // pred_check
          %p739 = pneg %p601
        $region38: #{mote_net_forward.1} parent=11 // pred_check_branch
          %741 = sbr.rel (%p739) target = $region40
        $region39: #{mote_net_forward.1} parent=11 // pred_region
          _
        $region40: #{mote_net_forward.1} parent=11 // pred_fallthru
          _
        // Predicated region
        $region41: #{mote_net_forward.1} parent=11 // pred_check
          %p742 = pneg %p622
        $region42: #{mote_net_forward.1} parent=11 // pred_check_branch
          %744 = sbr.rel (%p742) target = $region44
        $region43: #{mote_net_forward.1} parent=11 // pred_region
          _
        $region44: #{mote_net_forward.1} parent=11 // pred_fallthru
          _
        // Predicated region
        $region45: #{mote_net_forward.1} parent=11 // pred_check
          %p745 = pneg %p643
        $region46: #{mote_net_forward.1} parent=11 // pred_check_branch
          %747 = sbr.rel (%p745) target = $region48
        $region47: #{mote_net_forward.1} parent=11 // pred_region
          _
        $region48: #{mote_net_forward.1} parent=11 // pred_fallthru
          _
        // Predicated region
        $region49: #{mote_net_forward.1} parent=11 // pred_check
          %p748 = pneg %p664
        $region50: #{mote_net_forward.1} parent=11 // pred_check_branch
          %750 = sbr.rel (%p748) target = $region52
        $region51: #{mote_net_forward.1} parent=11 // pred_region
          _
        $region52: #{mote_net_forward.1} parent=11 // pred_fallthru
          _
      $region12: #{mote_net_forward.1} parent=5 // pred_fallthru
        _
      %p751 = scmp.lt.s32.totalorder %s38, 2
      // Predicated region
      $region53: #{mote_net_forward.1} parent=5 // pred_check
        %p752 = pneg %p751
      $region54: #{mote_net_forward.1} parent=5 // pred_check_branch
        %754 = sbr.rel (%p752) target = $region56
      $region55: #{mote_net_forward.1} parent=5 // pred_region
        // Predicated region
        $region57: #{mote_net_forward.1} parent=55 // pred_check
          %p755 = pneg %p184
        $region58: #{mote_net_forward.1} parent=55 // pred_check_branch
          %757 = sbr.rel (%p755) target = $region60
        $region59: #{mote_net_forward.1} parent=55 // pred_region
          %p758 = scmp.lt.s32.totalorder %s38, 1
          %s759 = scalar_select %p758, %s38, 1
          %s760 = scalar_lea.vmem %s6, %s759
        $region60: #{mote_net_forward.1} parent=55 // pred_fallthru
          _
        // Predicated region
        $region61: #{mote_net_forward.1} parent=55 // pred_check
          %p761 = pneg %p210
        $region62: #{mote_net_forward.1} parent=55 // pred_check_branch
          %763 = sbr.rel (%p761) target = $region64
        $region63: #{mote_net_forward.1} parent=55 // pred_region
          %p764 = scmp.lt.s32.totalorder %s38, 1
          %s765 = scalar_select %p764, %s38, 1
          %s766 = scalar_lea.vmem %s7, %s765
        $region64: #{mote_net_forward.1} parent=55 // pred_fallthru
          _
        // Predicated region
        $region65: #{mote_net_forward.1} parent=55 // pred_check
          %p767 = pneg %p236
        $region66: #{mote_net_forward.1} parent=55 // pred_check_branch
          %769 = sbr.rel (%p767) target = $region68
        $region67: #{mote_net_forward.1} parent=55 // pred_region
          %p770 = scmp.lt.s32.totalorder %s38, 1
          %s771 = scalar_select %p770, %s38, 1
          %s772 = smul.addr %s771, 16
          %s773 = smul.addr %s772, 4
          %s774 = scalar_lea.vmem %s8, %s773
        $region68: #{mote_net_forward.1} parent=55 // pred_fallthru
          _
        // Predicated region
        $region69: #{mote_net_forward.1} parent=55 // pred_check
          %p775 = pneg %p262
        $region70: #{mote_net_forward.1} parent=55 // pred_check_branch
          %777 = sbr.rel (%p775) target = $region72
        $region71: #{mote_net_forward.1} parent=55 // pred_region
          %p778 = scmp.lt.s32.totalorder %s38, 1
          %s779 = scalar_select %p778, %s38, 1
          %s780 = smul.addr %s779, 2
          %s781 = scalar_lea.vmem %s9, %s780
        $region72: #{mote_net_forward.1} parent=55 // pred_fallthru
          _
        // Predicated region
        $region73: #{mote_net_forward.1} parent=55 // pred_check
          %p782 = pneg %p288
        $region74: #{mote_net_forward.1} parent=55 // pred_check_branch
          %784 = sbr.rel (%p782) target = $region76
        $region75: #{mote_net_forward.1} parent=55 // pred_region
          %p785 = scmp.lt.s32.totalorder %s38, 1
          %s786 = scalar_select %p785, %s38, 1
          %s787 = smul.addr %s786, 8
          %s788 = smul.addr %s787, 4
          %s789 = scalar_lea.vmem %s10, %s788
        $region76: #{mote_net_forward.1} parent=55 // pred_fallthru
          _
        // Predicated region
        $region77: #{mote_net_forward.1} parent=55 // pred_check
          %p790 = pneg %p314
        $region78: #{mote_net_forward.1} parent=55 // pred_check_branch
          %792 = sbr.rel (%p790) target = $region80
        $region79: #{mote_net_forward.1} parent=55 // pred_region
          %p793 = scmp.lt.s32.totalorder %s38, 1
          %s794 = scalar_select %p793, %s38, 1
          %s795 = scalar_lea.vmem %s11, %s794
        $region80: #{mote_net_forward.1} parent=55 // pred_fallthru
          _
        // Predicated region
        $region81: #{mote_net_forward.1} parent=55 // pred_check
          %p796 = pneg %p340
        $region82: #{mote_net_forward.1} parent=55 // pred_check_branch
          %798 = sbr.rel (%p796) target = $region84
        $region83: #{mote_net_forward.1} parent=55 // pred_region
          %p799 = scmp.lt.s32.totalorder %s38, 1
          %s800 = scalar_select %p799, %s38, 1
          %s801 = scalar_lea.vmem %s12, %s800
        $region84: #{mote_net_forward.1} parent=55 // pred_fallthru
          _
        // Predicated region
        $region85: #{mote_net_forward.1} parent=55 // pred_check
          %p802 = pneg %p366
        $region86: #{mote_net_forward.1} parent=55 // pred_check_branch
          %804 = sbr.rel (%p802) target = $region88
        $region87: #{mote_net_forward.1} parent=55 // pred_region
          %p805 = scmp.lt.s32.totalorder %s38, 1
          %s806 = scalar_select %p805, %s38, 1
          %s807 = scalar_lea.vmem %s13, %s806
        $region88: #{mote_net_forward.1} parent=55 // pred_fallthru
          _
        // Predicated region
        $region89: #{mote_net_forward.1} parent=55 // pred_check
          %p808 = pneg %p392
        $region90: #{mote_net_forward.1} parent=55 // pred_check_branch
          %810 = sbr.rel (%p808) target = $region92
        $region91: #{mote_net_forward.1} parent=55 // pred_region
          %p811 = scmp.lt.s32.totalorder %s38, 1
          %s812 = scalar_select %p811, %s38, 1
          %s813 = smul.addr %s812, 16
          %s814 = smul.addr %s813, 4
          %s815 = scalar_lea.vmem %s14, %s814
        $region92: #{mote_net_forward.1} parent=55 // pred_fallthru
          _
        // Predicated region
        $region93: #{mote_net_forward.1} parent=55 // pred_check
          %p816 = pneg %p418
        $region94: #{mote_net_forward.1} parent=55 // pred_check_branch
          %818 = sbr.rel (%p816) target = $region96
        $region95: #{mote_net_forward.1} parent=55 // pred_region
          %p819 = scmp.lt.s32.totalorder %s38, 1
          %s820 = scalar_select %p819, %s38, 1
          %s821 = smul.addr %s820, 2
          %s822 = scalar_lea.vmem %s15, %s821
        $region96: #{mote_net_forward.1} parent=55 // pred_fallthru
          _
        // Predicated region
        $region97: #{mote_net_forward.1} parent=55 // pred_check
          %p823 = pneg %p444
        $region98: #{mote_net_forward.1} parent=55 // pred_check_branch
          %825 = sbr.rel (%p823) target = $region100
        $region99: #{mote_net_forward.1} parent=55 // pred_region
          %p826 = scmp.lt.s32.totalorder %s38, 1
          %s827 = scalar_select %p826, %s38, 1
          %s828 = smul.addr %s827, 32
          %s829 = smul.addr %s828, 4
          %s830 = scalar_lea.vmem %s16, %s829
        $region100: #{mote_net_forward.1} parent=55 // pred_fallthru
          _
        // Predicated region
        $region101: #{mote_net_forward.1} parent=55 // pred_check
          %p831 = pneg %p470
        $region102: #{mote_net_forward.1} parent=55 // pred_check_branch
          %833 = sbr.rel (%p831) target = $region104
        $region103: #{mote_net_forward.1} parent=55 // pred_region
          %p834 = scmp.lt.s32.totalorder %s38, 1
          %s835 = scalar_select %p834, %s38, 1
          %s836 = scalar_lea.vmem %s17, %s835
        $region104: #{mote_net_forward.1} parent=55 // pred_fallthru
          _
        // Predicated region
        $region105: #{mote_net_forward.1} parent=55 // pred_check
          %p837 = pneg %p496
        $region106: #{mote_net_forward.1} parent=55 // pred_check_branch
          %839 = sbr.rel (%p837) target = $region108
        $region107: #{mote_net_forward.1} parent=55 // pred_region
          %p840 = scmp.lt.s32.totalorder %s38, 1
          %s841 = scalar_select %p840, %s38, 1
          %s842 = smul.addr %s841, 8
          %s843 = smul.addr %s842, 4
          %s844 = scalar_lea.vmem %s18, %s843
        $region108: #{mote_net_forward.1} parent=55 // pred_fallthru
          _
        // Predicated region
        $region109: #{mote_net_forward.1} parent=55 // pred_check
          %p845 = pneg %p522
        $region110: #{mote_net_forward.1} parent=55 // pred_check_branch
          %847 = sbr.rel (%p845) target = $region112
        $region111: #{mote_net_forward.1} parent=55 // pred_region
          %p848 = scmp.lt.s32.totalorder %s38, 1
          %s849 = scalar_select %p848, %s38, 1
          %s850 = scalar_lea.vmem %s19, %s849
        $region112: #{mote_net_forward.1} parent=55 // pred_fallthru
          _
        // Predicated region
        $region113: #{mote_net_forward.1} parent=55 // pred_check
          %p851 = pneg %p548
        $region114: #{mote_net_forward.1} parent=55 // pred_check_branch
          %853 = sbr.rel (%p851) target = $region116
        $region115: #{mote_net_forward.1} parent=55 // pred_region
          %p854 = scmp.lt.s32.totalorder %s38, 1
          %s855 = scalar_select %p854, %s38, 1
          %s856 = smul.addr %s855, 2
          %s857 = smul.addr %s856, 4
          %s858 = scalar_lea.vmem %s20, %s857
        $region116: #{mote_net_forward.1} parent=55 // pred_fallthru
          _
        // Predicated region
        $region117: #{mote_net_forward.1} parent=55 // pred_check
          %p859 = pneg %p574
        $region118: #{mote_net_forward.1} parent=55 // pred_check_branch
          %861 = sbr.rel (%p859) target = $region120
        $region119: #{mote_net_forward.1} parent=55 // pred_region
          %p862 = scmp.lt.s32.totalorder %s38, 1
          %s863 = scalar_select %p862, %s38, 1
          %s864 = scalar_lea.vmem %s21, %s863
        $region120: #{mote_net_forward.1} parent=55 // pred_fallthru
          _
      $region56: #{mote_net_forward.1} parent=5 // pred_fallthru
        _
      %p865 = scmp.le.s32.totalorder 1, %s38
      %p866 = scmp.lt.s32.totalorder %s38, 3
      %p867 = pnand %p865, %p866
      %p868 = pneg %p867
      // Predicated region
      $region121: #{mote_net_forward.1} parent=5 // pred_check
        _
      $region122: #{mote_net_forward.1} parent=5 // pred_check_branch
        %870 = sbr.rel (%p867) target = $region124
      $region123: #{mote_net_forward.1} parent=5 // pred_region
        %s871 = ssub.s32 %s38, 1
        %p872 = pneg %p59
        %p873 = pneg %p56
        %p874 = pneg %p80
        %p875 = pneg %p77
        %p876 = pneg %p101
        %p877 = pneg %p98
        %p878 = pneg %p122
        %p879 = pneg %p119
        %p880 = pneg %p143
        %p881 = pneg %p140
        %p882 = pneg %p164
        %p883 = pneg %p161
        %p884 = scmp.lt.s32.totalorder %s43, 1
        %s885 = scalar_select %p884, %s43, 1
        %s886 = scalar_lea.vmem %s6, %s885
        %p887 = pneg %p190
        %p888 = pneg %p187
        %p889 = scmp.lt.s32.totalorder %s43, 1
        %s890 = scalar_select %p889, %s43, 1
        %s891 = scalar_lea.vmem %s7, %s890
        %p892 = pneg %p216
        %p893 = pneg %p213
        %p894 = scmp.lt.s32.totalorder %s43, 1
        %s895 = scalar_select %p894, %s43, 1
        %s896 = smul.addr %s895, 16
        %s897 = smul.addr %s896, 4
        %s898 = scalar_lea.vmem %s8, %s897
        %p899 = pneg %p242
        %p900 = pneg %p239
        %p901 = scmp.lt.s32.totalorder %s43, 1
        %s902 = scalar_select %p901, %s43, 1
        %s903 = smul.addr %s902, 2
        %s904 = scalar_lea.vmem %s9, %s903
        %p905 = pneg %p268
        %p906 = pneg %p265
        %p907 = scmp.lt.s32.totalorder %s43, 1
        %s908 = scalar_select %p907, %s43, 1
        %s909 = smul.addr %s908, 8
        %s910 = smul.addr %s909, 4
        %s911 = scalar_lea.vmem %s10, %s910
        %p912 = pneg %p294
        %p913 = pneg %p291
        %p914 = scmp.lt.s32.totalorder %s43, 1
        %s915 = scalar_select %p914, %s43, 1
        %s916 = scalar_lea.vmem %s11, %s915
        %p917 = pneg %p320
        %p918 = pneg %p317
        %p919 = scmp.lt.s32.totalorder %s43, 1
        %s920 = scalar_select %p919, %s43, 1
        %s921 = scalar_lea.vmem %s12, %s920
        %p922 = pneg %p346
        %p923 = pneg %p343
        %p924 = scmp.lt.s32.totalorder %s43, 1
        %s925 = scalar_select %p924, %s43, 1
        %s926 = scalar_lea.vmem %s13, %s925
        %p927 = pneg %p372
        %p928 = pneg %p369
        %p929 = scmp.lt.s32.totalorder %s43, 1
        %s930 = scalar_select %p929, %s43, 1
        %s931 = smul.addr %s930, 16
        %s932 = smul.addr %s931, 4
        %s933 = scalar_lea.vmem %s14, %s932
        %p934 = pneg %p398
        %p935 = pneg %p395
        %p936 = scmp.lt.s32.totalorder %s43, 1
        %s937 = scalar_select %p936, %s43, 1
        %s938 = smul.addr %s937, 2
        %s939 = scalar_lea.vmem %s15, %s938
        %p940 = pneg %p424
        %p941 = pneg %p421
        %p942 = scmp.lt.s32.totalorder %s43, 1
        %s943 = scalar_select %p942, %s43, 1
        %s944 = smul.addr %s943, 32
        %s945 = smul.addr %s944, 4
        %s946 = scalar_lea.vmem %s16, %s945
        %p947 = pneg %p450
        %p948 = pneg %p447
        %p949 = scmp.lt.s32.totalorder %s43, 1
        %s950 = scalar_select %p949, %s43, 1
        %s951 = scalar_lea.vmem %s17, %s950
        %p952 = pneg %p476
        %p953 = pneg %p473
        %p954 = scmp.lt.s32.totalorder %s43, 1
        %s955 = scalar_select %p954, %s43, 1
        %s956 = smul.addr %s955, 8
        %s957 = smul.addr %s956, 4
        %s958 = scalar_lea.vmem %s18, %s957
        %p959 = pneg %p502
        %p960 = pneg %p499
        %p961 = scmp.lt.s32.totalorder %s43, 1
        %s962 = scalar_select %p961, %s43, 1
        %s963 = scalar_lea.vmem %s19, %s962
        %p964 = pneg %p528
        %p965 = pneg %p525
        %p966 = scmp.lt.s32.totalorder %s43, 1
        %s967 = scalar_select %p966, %s43, 1
        %s968 = smul.addr %s967, 2
        %s969 = smul.addr %s968, 4
        %s970 = scalar_lea.vmem %s20, %s969
        %p971 = pneg %p554
        %p972 = pneg %p551
        %p973 = scmp.lt.s32.totalorder %s43, 1
        %s974 = scalar_select %p973, %s43, 1
        %s975 = scalar_lea.vmem %s21, %s974
        %p976 = pneg %p580
        %p977 = pneg %p577
        %p978 = pneg %p601
        %p979 = pneg %p598
        %p980 = pneg %p622
        %p981 = pneg %p619
        %p982 = pneg %p643
        %p983 = pneg %p640
        %p984 = pneg %p664
        %p985 = pneg %p661
        %p986 = pneg %p685
        %p987 = pneg %p682
        %p988 = pneg %p706
        %p989 = pneg %p703
        %p990 = scmp.lt.s32.totalorder %s43, 1
        %s991 = scalar_select %p990, %s43, 1
        %s992 = scalar_lea.vmem %s6, %s991
        %p993 = scmp.lt.s32.totalorder %s43, 1
        %s994 = scalar_select %p993, %s43, 1
        %s995 = scalar_lea.vmem %s7, %s994
        %p996 = scmp.lt.s32.totalorder %s43, 1
        %s997 = scalar_select %p996, %s43, 1
        %s998 = smul.addr %s997, 16
        %s999 = smul.addr %s998, 4
        %s1000 = scalar_lea.vmem %s8, %s999
        %p1001 = scmp.lt.s32.totalorder %s43, 1
        %s1002 = scalar_select %p1001, %s43, 1
        %s1003 = smul.addr %s1002, 2
        %s1004 = scalar_lea.vmem %s9, %s1003
        %p1005 = scmp.lt.s32.totalorder %s43, 1
        %s1006 = scalar_select %p1005, %s43, 1
        %s1007 = smul.addr %s1006, 8
        %s1008 = smul.addr %s1007, 4
        %s1009 = scalar_lea.vmem %s10, %s1008
        %p1010 = scmp.lt.s32.totalorder %s43, 1
        %s1011 = scalar_select %p1010, %s43, 1
        %s1012 = scalar_lea.vmem %s11, %s1011
        %p1013 = scmp.lt.s32.totalorder %s43, 1
        %s1014 = scalar_select %p1013, %s43, 1
        %s1015 = scalar_lea.vmem %s12, %s1014
        %p1016 = scmp.lt.s32.totalorder %s43, 1
        %s1017 = scalar_select %p1016, %s43, 1
        %s1018 = scalar_lea.vmem %s13, %s1017
        %p1019 = scmp.lt.s32.totalorder %s43, 1
        %s1020 = scalar_select %p1019, %s43, 1
        %s1021 = smul.addr %s1020, 16
        %s1022 = smul.addr %s1021, 4
        %s1023 = scalar_lea.vmem %s14, %s1022
        %p1024 = scmp.lt.s32.totalorder %s43, 1
        %s1025 = scalar_select %p1024, %s43, 1
        %s1026 = smul.addr %s1025, 2
        %s1027 = scalar_lea.vmem %s15, %s1026
        %p1028 = scmp.lt.s32.totalorder %s43, 1
        %s1029 = scalar_select %p1028, %s43, 1
        %s1030 = smul.addr %s1029, 32
        %s1031 = smul.addr %s1030, 4
        %s1032 = scalar_lea.vmem %s16, %s1031
        %p1033 = scmp.lt.s32.totalorder %s43, 1
        %s1034 = scalar_select %p1033, %s43, 1
        %s1035 = scalar_lea.vmem %s17, %s1034
        %p1036 = scmp.lt.s32.totalorder %s43, 1
        %s1037 = scalar_select %p1036, %s43, 1
        %s1038 = smul.addr %s1037, 8
        %s1039 = smul.addr %s1038, 4
        %s1040 = scalar_lea.vmem %s18, %s1039
        %p1041 = scmp.lt.s32.totalorder %s43, 1
        %s1042 = scalar_select %p1041, %s43, 1
        %s1043 = scalar_lea.vmem %s19, %s1042
        %p1044 = scmp.lt.s32.totalorder %s43, 1
        %s1045 = scalar_select %p1044, %s43, 1
        %s1046 = smul.addr %s1045, 2
        %s1047 = smul.addr %s1046, 4
        %s1048 = scalar_lea.vmem %s20, %s1047
        %p1049 = scmp.lt.s32.totalorder %s43, 1
        %s1050 = scalar_select %p1049, %s43, 1
        %s1051 = scalar_lea.vmem %s21, %s1050
        %p1053 = scmp.eq.s32.totalorder %s43, 0
        // Predicated region
        $region125: #{mote_net_forward.1} parent=123 // pred_check
          %p1054 = pneg %p1053
        $region126: #{mote_net_forward.1} parent=123 // pred_check_branch
          %1056 = sbr.rel (%p1054) target = $region128
        $region127: #{mote_net_forward.1} parent=123 // pred_region
          %v1057 = vld [vmem:[%s0] sm:$0xff]
          %v1058 = vld [vmem:[%s0 + $0x8] sm:$0xff]
          %v1059 = vld [vmem:[%s0 + $0x10] sm:$0xff]
          %v1060 = vld [vmem:[%s0 + $0x18] sm:$0xff]
          %v1061 = vld [vmem:[%s1] sm:$0xf]
          %v1062 = vld [vmem:[%s1 + $0x4] sm:$0xf]
          %v1063 = vld [vmem:[%s1 + $0x8] sm:$0xf]
          %v1064 = vld [vmem:[%s1 + $0xc] sm:$0xf]
          %v1065 = vld [vmem:[%s1 + $0x10] sm:$0xf]
          %v1066 = vld [vmem:[%s1 + $0x14] sm:$0xf]
          %v1067 = vpack.c.bf16 %v1058, %v1057
          %v1068 = vpack.c.bf16 %v1060, %v1059
          %v1069 = vld [vmem:[%s2] sm:$0x1]
          %v1071 = vlaneseq
          %v1072 = vshrl.u32 %v1071, 7
          %v1073 = vsub.s32 0, %v1072
          %v1074 = vrot.slane %v1069, %v1073
          %v1082 = vunpack.c.l.b16 %v1061
          %v1083 = vunpack.c.l.b16 %v1062
          %v1084 = vunpack.c.l.b16 %v1063
          %v1085 = vunpack.c.l.b16 %v1064
          %v1086 = vunpack.c.l.b16 %v1065
          %v1087 = vunpack.c.l.b16 %v1066
          %v1088 = vpack.c.b16 %v1083, %v1082
          %v1089 = vpack.c.b16 %v1085, %v1084
          %v1090 = vpack.c.b16 %v1087, %v1086
          %vm1094 = vcmask 392192
          %v1096 = vsel %vm1094, %v1067, 0
          %v1099 = vsel %vm1094, %v1068, 0
          %1101 = vmatprep.subr.bf16.mxu0 0
          %1102 = vmatpush1.bf16.msra.mxu0 %v1088
          %1103 = vmatprep.subr.bf16.mxu0 0
          %1104 = vmatpush1.bf16.msra.mxu0 %v1089
          %1105 = vmatprep.subr.bf16.mxu0 0
          %1106 = vmatpush1.bf16.msra.mxu0 %v1090
          %1107 = vmatprep.subr.bf16.mxu0 0
          %1108 = vmatpush1.bf16.msra.mxu0 0
          %1109 = vmatprep.subr.bf16.mxu0 0
          %1110 = vmatpush1.bf16.msra.mxu0 0
          %1111 = vmatprep.subr.bf16.mxu0 0
          %1112 = vmatpush1.bf16.msra.mxu0 0
          %1113 = vmatprep.subr.bf16.mxu0 0
          %1114 = vmatpush1.bf16.msra.mxu0 0
          %1115 = vmatprep.subr.bf16.mxu0 0
          %1116 = vmatpush1.bf16.msra.mxu0 0
          %1117 = vmatprep.subr.bf16.mxu0 0
          %1118 = vmatpush1.bf16.msra.mxu0 0
          %1119 = vmatprep.subr.bf16.mxu0 0
          %1120 = vmatpush1.bf16.msra.mxu0 0
          %1121 = vmatprep.subr.bf16.mxu0 0
          %1122 = vmatpush1.bf16.msra.mxu0 0
          %1123 = vmatprep.subr.bf16.mxu0 0
          %1124 = vmatpush1.bf16.msra.mxu0 0
          %1125 = vmatprep.subr.bf16.mxu0 0
          %1126 = vmatpush1.bf16.msra.mxu0 0
          %1127 = vmatprep.subr.bf16.mxu0 0
          %1128 = vmatpush1.bf16.msra.mxu0 0
          %1129 = vmatprep.subr.bf16.mxu0 0
          %1130 = vmatpush1.bf16.msra.mxu0 0
          %1131 = vmatprep.subr.bf16.mxu0 0
          %1132 = vmatpush1.bf16.msra.mxu0 0
          %1133 = vmatprep.mubr.bf16.mxu0 0
          %1134 = vmatmul.mubr.bf16.gmra.mrb[0].mxu0 %v1096
          %v1135 = vpop.f32.mrb[0].mxu0
          %v1136 = vadd.f32 %v1074, %v1135
          %v1137 = vpop.f32.mrb[0].mxu0
          %v1138 = vpop.f32.mrb[0].mxu0
          %v1139 = vadd.f32 %v1074, %v1138
          %v1140 = vpop.f32.mrb[0].mxu0
          %1141 = vmatprep.mubr.bf16.mxu0 0
          %1142 = vmatmul.mubr.bf16.gmra.mrb[0].mxu0 %v1099
          %v1143 = vpop.f32.mrb[0].mxu0
          %v1144 = vadd.f32 %v1074, %v1143
          %v1145 = vpop.f32.mrb[0].mxu0
          %v1146 = vpop.f32.mrb[0].mxu0
          %v1147 = vadd.f32 %v1074, %v1146
          %v1148 = vpop.f32.mrb[0].mxu0
          %1149 = vdwg.mxu0
          %vm1150 = vcmask 523264
          %1151 = vst.msk [vmem:[#allocation2] sm:$0xff] %vm1150, 0.0
          %1152 = vst.msk [vmem:[#allocation2 + $0x8] sm:$0xff] %vm1150, 0.0
          %1153 = vst.msk [vmem:[#allocation2 + $0x10] sm:$0xff] %vm1150, 0.0
          %1154 = vst.msk [vmem:[#allocation2 + $0x18] sm:$0xff] %vm1150, 0.0
          %1155 = vst.msk [vmem:[#allocation2 + $0x20] sm:$0xff] %vm1150, 0.0
          %1156 = vst.msk [vmem:[#allocation2 + $0x28] sm:$0xff] %vm1150, 0.0
          %v1157 = vld [vmem:[%s3] sm:$0x1]
          %v1158 = vld [vmem:[%s4] sm:$0x1]
          %v1159 = vadd.f32 %v1157, %v1158
          %vm1160 = vcmask 516096
          %1161 = vst.msk [vmem:[#allocation2] sm:$0x1] %vm1160, %v1159
          %v1162 = vld [vmem:[%s4 + $0x1] sm:$0xff]
          %v1163 = vld [vmem:[%s4 + $0x9] sm:$0xff]
          %v1164 = vadd.f32 %v1136, %v1162
          %v1165 = vadd.f32 %v1139, %v1163
          %1166 = vst.msk [vmem:[#allocation2 + $0x1] sm:$0xff] %vm1150, %v1164
          %1167 = vst.msk [vmem:[#allocation2 + $0x9] sm:$0xff] %vm1150, %v1165
          %v1168 = vld [vmem:[%s3] sm:$0x1]
          %v1169 = vld [vmem:[%s4] sm:$0x1]
          %v1170 = vadd.f32 %v1168, %v1169
          %1171 = vst.msk [vmem:[#allocation2 + $0x18] sm:$0x1] %vm1160, %v1170
          %v1172 = vld [vmem:[%s4 + $0x1] sm:$0xff]
          %v1173 = vld [vmem:[%s4 + $0x9] sm:$0xff]
          %v1174 = vadd.f32 %v1144, %v1172
          %v1175 = vadd.f32 %v1147, %v1173
          %1176 = vst.msk [vmem:[#allocation2 + $0x19] sm:$0xff] %vm1150, %v1174
          %1177 = vst.msk [vmem:[#allocation2 + $0x21] sm:$0xff] %vm1150, %v1175
        $region128: #{mote_net_forward.1} parent=123 // pred_fallthru
          _
        %v1178 = vld [vmem:[#allocation2] sm:$0xff]
        %v1179 = vld [vmem:[#allocation2 + $0x8] sm:$0xff]
        %v1180 = vld [vmem:[#allocation2 + $0x10] sm:$0xff]
        %v1181 = vld [vmem:[#allocation2 + $0x18] sm:$0xff]
        %v1182 = vld [vmem:[#allocation2 + $0x20] sm:$0xff]
        %v1183 = vld [vmem:[#allocation2 + $0x28] sm:$0xff]
        %v1184 = vld [vmem:[%s992] sm:$0x1]
        %v1185 = vld [vmem:[%s995] sm:$0x1]
        %vm1186 = vcmask 523264
        %v1187 = vsel %vm1186, %v1178, 0.0
        %1188 = vadd.xlane.f32.xlu0 %v1187
        %v1189 = vpop.xlane.xlu0 %1188
        %v1190 = vsel %vm1186, %v1179, 0.0
        %1191 = vadd.xlane.f32.xlu0 %v1190
        %v1192 = vpop.xlane.xlu0 %1191
        %v1193 = vsel %vm1186, %v1180, 0.0
        %1194 = vadd.xlane.f32.xlu0 %v1193
        %v1195 = vpop.xlane.xlu0 %1194
        %v1196 = vsel %vm1186, %v1181, 0.0
        %1197 = vadd.xlane.f32.xlu0 %v1196
        %v1198 = vpop.xlane.xlu0 %1197
        %v1199 = vsel %vm1186, %v1182, 0.0
        %1200 = vadd.xlane.f32.xlu0 %v1199
        %v1201 = vpop.xlane.xlu0 %1200
        %v1202 = vsel %vm1186, %v1183, 0.0
        %1203 = vadd.xlane.f32.xlu0 %v1202
        %v1204 = vpop.xlane.xlu0 %1203
        %v1205 = vrcp.pop 64.0
        %v1206 = vmul.f32 %v1189, %v1205
        %v1207 = vmul.f32 %v1192, %v1205
        %v1208 = vmul.f32 %v1195, %v1205
        %v1209 = vmul.f32 %v1198, %v1205
        %v1210 = vmul.f32 %v1201, %v1205
        %v1211 = vmul.f32 %v1204, %v1205
        %v1212 = vsub.f32 %v1178, %v1206
        %v1213 = vsub.f32 %v1179, %v1207
        %v1214 = vsub.f32 %v1180, %v1208
        %v1215 = vsub.f32 %v1181, %v1209
        %v1216 = vsub.f32 %v1182, %v1210
        %v1217 = vsub.f32 %v1183, %v1211
        %v1218 = vmul.f32 %v1212, %v1212
        %v1219 = vmul.f32 %v1213, %v1213
        %v1220 = vmul.f32 %v1214, %v1214
        %v1221 = vmul.f32 %v1215, %v1215
        %v1222 = vmul.f32 %v1216, %v1216
        %v1223 = vmul.f32 %v1217, %v1217
        %v1224 = vsel %vm1186, %v1218, 0.0
        %1225 = vadd.xlane.f32.xlu0 %v1224
        %v1226 = vpop.xlane.xlu0 %1225
        %v1227 = vsel %vm1186, %v1219, 0.0
        %1228 = vadd.xlane.f32.xlu0 %v1227
        %v1229 = vpop.xlane.xlu0 %1228
        %v1230 = vsel %vm1186, %v1220, 0.0
        %1231 = vadd.xlane.f32.xlu0 %v1230
        %v1232 = vpop.xlane.xlu0 %1231
        %v1233 = vsel %vm1186, %v1221, 0.0
        %1234 = vadd.xlane.f32.xlu0 %v1233
        %v1235 = vpop.xlane.xlu0 %1234
        %v1236 = vsel %vm1186, %v1222, 0.0
        %1237 = vadd.xlane.f32.xlu0 %v1236
        %v1238 = vpop.xlane.xlu0 %1237
        %v1239 = vsel %vm1186, %v1223, 0.0
        %1240 = vadd.xlane.f32.xlu0 %v1239
        %v1241 = vpop.xlane.xlu0 %1240
        %v1242 = vmul.f32 %v1226, %v1205
        %v1243 = vmul.f32 %v1229, %v1205
        %v1244 = vmul.f32 %v1232, %v1205
        %v1245 = vmul.f32 %v1235, %v1205
        %v1246 = vmul.f32 %v1238, %v1205
        %v1247 = vmul.f32 %v1241, %v1205
        %v1248 = vadd.f32 %v1242, 1e-06
        %v1249 = vadd.f32 %v1243, 1e-06
        %v1250 = vadd.f32 %v1244, 1e-06
        %v1251 = vadd.f32 %v1245, 1e-06
        %v1252 = vadd.f32 %v1246, 1e-06
        %v1253 = vadd.f32 %v1247, 1e-06
        %v1254 = vrsqrt.pop %v1248
        %v1255 = vrsqrt.pop %v1249
        %v1256 = vrsqrt.pop %v1250
        %v1257 = vrsqrt.pop %v1251
        %v1258 = vrsqrt.pop %v1252
        %v1259 = vrsqrt.pop %v1253
        %v1260 = vmul.f32 %v1212, %v1254
        %v1261 = vmul.f32 %v1213, %v1255
        %v1262 = vmul.f32 %v1214, %v1256
        %v1263 = vmul.f32 %v1215, %v1257
        %v1264 = vmul.f32 %v1216, %v1258
        %v1265 = vmul.f32 %v1217, %v1259
        %v1267 = vlaneseq
        %v1268 = vshrl.u32 %v1267, 7
        %v1269 = vsub.s32 0, %v1268
        %v1270 = vrot.slane %v1184, %v1269
        %v1272 = vmul.f32 %v1260, %v1270
        %v1273 = vmul.f32 %v1261, %v1270
        %v1274 = vmul.f32 %v1262, %v1270
        %v1275 = vmul.f32 %v1263, %v1270
        %v1276 = vmul.f32 %v1264, %v1270
        %v1277 = vmul.f32 %v1265, %v1270
        %v1279 = vlaneseq
        %v1280 = vshrl.u32 %v1279, 7
        %v1281 = vsub.s32 0, %v1280
        %v1282 = vrot.slane %v1185, %v1281
        %v1284 = vadd.f32 %v1272, %v1282
        %v1285 = vadd.f32 %v1273, %v1282
        %v1286 = vadd.f32 %v1274, %v1282
        %v1287 = vadd.f32 %v1275, %v1282
        %v1288 = vadd.f32 %v1276, %v1282
        %v1289 = vadd.f32 %v1277, %v1282
        %v1290 = vld [vmem:[%s1000] sm:$0xff]
        %v1291 = vld [vmem:[%s1000 + $0x8] sm:$0xff]
        %v1292 = vld [vmem:[%s1000 + $0x10] sm:$0xff]
        %v1293 = vld [vmem:[%s1000 + $0x18] sm:$0xff]
        %v1294 = vld [vmem:[%s1000 + $0x20] sm:$0xff]
        %v1295 = vld [vmem:[%s1000 + $0x28] sm:$0xff]
        %v1296 = vld [vmem:[%s1000 + $0x30] sm:$0xff]
        %v1297 = vld [vmem:[%s1000 + $0x38] sm:$0xff]
        %v1298 = vpack.c.bf16 %v1285, %v1284
        %v1299 = vpack.c.bf16 %v1287, %v1286
        %v1300 = vpack.c.bf16 %v1289, %v1288
        %v1301 = vld [vmem:[%s1004] sm:$0x3]
        %v1303 = vlaneseq
        %v1304 = vshrl.u32 %v1303, 7
        %v1305 = vsub.s32 0, %v1304
        %v1306 = vrot.slane %v1301, %v1305
        %v1307 = vlaneseq
        %v1308 = vshrl.u32 %v1307, 7
        %v1309 = vsub.s32 1, %v1308
        %v1310 = vrot.slane %v1301, %v1309
        %v1321 = vunpack.c.l.b16 %v1290
        %v1322 = vunpack.c.h.b16 %v1290
        %v1323 = vunpack.c.l.b16 %v1291
        %v1324 = vunpack.c.h.b16 %v1291
        %v1325 = vunpack.c.l.b16 %v1292
        %v1326 = vunpack.c.h.b16 %v1292
        %v1327 = vunpack.c.l.b16 %v1293
        %v1328 = vunpack.c.h.b16 %v1293
        %v1329 = vunpack.c.l.b16 %v1294
        %v1330 = vunpack.c.h.b16 %v1294
        %v1331 = vunpack.c.l.b16 %v1295
        %v1332 = vunpack.c.h.b16 %v1295
        %v1333 = vunpack.c.l.b16 %v1296
        %v1334 = vunpack.c.h.b16 %v1296
        %v1335 = vunpack.c.l.b16 %v1297
        %v1336 = vunpack.c.h.b16 %v1297
        %v1337 = vpack.c.b16 %v1323, %v1321
        %v1338 = vpack.c.b16 %v1324, %v1322
        %v1339 = vpack.c.b16 %v1327, %v1325
        %v1340 = vpack.c.b16 %v1328, %v1326
        %v1341 = vpack.c.b16 %v1331, %v1329
        %v1342 = vpack.c.b16 %v1332, %v1330
        %v1343 = vpack.c.b16 %v1335, %v1333
        %v1344 = vpack.c.b16 %v1336, %v1334
        %v1354 = vsel %vm1186, %v1298, 0
        %v1357 = vsel %vm1186, %v1299, 0
        %v1360 = vsel %vm1186, %v1300, 0
        %1362 = vmatprep.subr.bf16.mxu0 %v1338
        %1363 = vmatpush1.bf16.msra.mxu0 %v1337
        %1364 = vmatprep.subr.bf16.mxu0 %v1340
        %1365 = vmatpush1.bf16.msra.mxu0 %v1339
        %1366 = vmatprep.subr.bf16.mxu0 %v1342
        %1367 = vmatpush1.bf16.msra.mxu0 %v1341
        %1368 = vmatprep.subr.bf16.mxu0 %v1344
        %1369 = vmatpush1.bf16.msra.mxu0 %v1343
        %1370 = vmatprep.subr.bf16.mxu0 0
        %1371 = vmatpush1.bf16.msra.mxu0 0
        %1372 = vmatprep.subr.bf16.mxu0 0
        %1373 = vmatpush1.bf16.msra.mxu0 0
        %1374 = vmatprep.subr.bf16.mxu0 0
        %1375 = vmatpush1.bf16.msra.mxu0 0
        %1376 = vmatprep.subr.bf16.mxu0 0
        %1377 = vmatpush1.bf16.msra.mxu0 0
        %1378 = vmatprep.subr.bf16.mxu0 0
        %1379 = vmatpush1.bf16.msra.mxu0 0
        %1380 = vmatprep.subr.bf16.mxu0 0
        %1381 = vmatpush1.bf16.msra.mxu0 0
        %1382 = vmatprep.subr.bf16.mxu0 0
        %1383 = vmatpush1.bf16.msra.mxu0 0
        %1384 = vmatprep.subr.bf16.mxu0 0
        %1385 = vmatpush1.bf16.msra.mxu0 0
        %1386 = vmatprep.subr.bf16.mxu0 0
        %1387 = vmatpush1.bf16.msra.mxu0 0
        %1388 = vmatprep.subr.bf16.mxu0 0
        %1389 = vmatpush1.bf16.msra.mxu0 0
        %1390 = vmatprep.subr.bf16.mxu0 0
        %1391 = vmatpush1.bf16.msra.mxu0 0
        %1392 = vmatprep.subr.bf16.mxu0 0
        %1393 = vmatpush1.bf16.msra.mxu0 0
        %1394 = vmatprep.mubr.bf16.mxu0 0
        %1395 = vmatmul.mubr.bf16.gmra.mrb[0].mxu0 %v1354
        %v1396 = vpop.f32.mrb[0].mxu0
        %v1397 = vadd.f32 %v1306, %v1396
        %v1398 = vpop.f32.mrb[0].mxu0
        %v1399 = vadd.f32 %v1310, %v1398
        %v1400 = vpop.f32.mrb[0].mxu0
        %v1401 = vadd.f32 %v1306, %v1400
        %v1402 = vpop.f32.mrb[0].mxu0
        %v1403 = vadd.f32 %v1310, %v1402
        %1404 = vmatprep.mubr.bf16.mxu0 0
        %1405 = vmatmul.mubr.bf16.gmra.mrb[0].mxu0 %v1357
        %v1406 = vpop.f32.mrb[0].mxu0
        %v1407 = vadd.f32 %v1306, %v1406
        %v1408 = vpop.f32.mrb[0].mxu0
        %v1409 = vadd.f32 %v1310, %v1408
        %v1410 = vpop.f32.mrb[0].mxu0
        %v1411 = vadd.f32 %v1306, %v1410
        %v1412 = vpop.f32.mrb[0].mxu0
        %v1413 = vadd.f32 %v1310, %v1412
        %1414 = vmatprep.mubr.bf16.mxu0 0
        %1415 = vmatmul.mubr.bf16.gmra.mrb[0].mxu0 %v1360
        %v1416 = vpop.f32.mrb[0].mxu0
        %v1417 = vadd.f32 %v1306, %v1416
        %v1418 = vpop.f32.mrb[0].mxu0
        %v1419 = vadd.f32 %v1310, %v1418
        %v1420 = vpop.f32.mrb[0].mxu0
        %v1421 = vadd.f32 %v1306, %v1420
        %v1422 = vpop.f32.mrb[0].mxu0
        %v1423 = vadd.f32 %v1310, %v1422
        %1424 = vdwg.mxu0
        %v1425 = vld [vmem:[%s5] sm:$0xff]
        %v1426 = vld [vmem:[%s5 + $0x8] sm:$0xff]
        %v1427 = vld [vmem:[%s5 + $0x10] sm:$0xff]
        %v1428 = vld [vmem:[%s5 + $0x18] sm:$0xff]
        %v1429 = vld [vmem:[%s5 + $0x20] sm:$0xff]
        %v1430 = vld [vmem:[%s5 + $0x28] sm:$0xff]
        %v1431 = vmul.f32 %v1397, 0.25
        %v1432 = vmul.f32 %v1401, 0.25
        %v1433 = vmul.f32 %v1407, 0.25
        %v1434 = vmul.f32 %v1411, 0.25
        %v1435 = vmul.f32 %v1417, 0.25
        %v1436 = vmul.f32 %v1421, 0.25
        %v1437 = vpack.c.bf16 %v1432, %v1431
        %v1438 = vpack.c.bf16 %v1434, %v1433
        %v1439 = vpack.c.bf16 %v1436, %v1435
        %v1440 = vpack.c.bf16 %v1401, %v1397
        %v1441 = vpack.c.bf16 %v1411, %v1407
        %v1442 = vpack.c.bf16 %v1421, %v1417
        %v1443 = vpack.c.bf16 %v1403, %v1399
        %v1444 = vpack.c.bf16 %v1413, %v1409
        %v1445 = vpack.c.bf16 %v1423, %v1419
        %1449 = vrot.lane.b32.xlu0 %v1440, 64
        %v1450 = vpop.permute.xlu0 %1449
        %1451 = vrot.lane.b32.xlu0 %v1441, 64
        %v1452 = vpop.permute.xlu0 %1451
        %1453 = vrot.lane.b32.xlu0 %v1442, 64
        %v1454 = vpop.permute.xlu0 %1453
        %vm1455 = vcmask 130048
        %v1457 = vsel %vm1455, %v1437, 0
        %v1460 = vsel %vm1455, %v1438, 0
        %v1463 = vsel %vm1455, %v1439, 0
        %v1466 = vsel %vm1455, %v1450, 0
        %v1469 = vsel %vm1455, %v1452, 0
        %v1472 = vsel %vm1455, %v1454, 0
        %1474 = vmatprep.subr.bf16.mxu0 0
        %1475 = vmatpush1.bf16.xpose.msra.mxu0 %v1466
        %1476 = vmatprep.subr.bf16.mxu0 0
        %1477 = vmatpush1.bf16.xpose.msra.mxu0 %v1469
        %1478 = vmatprep.subr.bf16.mxu0 0
        %1479 = vmatpush1.bf16.xpose.msra.mxu0 %v1472
        %1480 = vmatprep.subr.bf16.mxu0 0
        %1481 = vmatpush1.bf16.xpose.msra.mxu0 0
        %1482 = vmatprep.subr.bf16.mxu0 0
        %1483 = vmatpush1.bf16.xpose.msra.mxu0 0
        %1484 = vmatprep.subr.bf16.mxu0 0
        %1485 = vmatpush1.bf16.xpose.msra.mxu0 0
        %1486 = vmatprep.subr.bf16.mxu0 0
        %1487 = vmatpush1.bf16.xpose.msra.mxu0 0
        %1488 = vmatprep.subr.bf16.mxu0 0
        %1489 = vmatpush1.bf16.xpose.msra.mxu0 0
        %1490 = vmatprep.subr.bf16.mxu0 0
        %1491 = vmatpush1.bf16.xpose.msra.mxu0 0
        %1492 = vmatprep.subr.bf16.mxu0 0
        %1493 = vmatpush1.bf16.xpose.msra.mxu0 0
        %1494 = vmatprep.subr.bf16.mxu0 0
        %1495 = vmatpush1.bf16.xpose.msra.mxu0 0
        %1496 = vmatprep.subr.bf16.mxu0 0
        %1497 = vmatpush1.bf16.xpose.msra.mxu0 0
        %1498 = vmatprep.subr.bf16.mxu0 0
        %1499 = vmatpush1.bf16.xpose.msra.mxu0 0
        %1500 = vmatprep.subr.bf16.mxu0 0
        %1501 = vmatpush1.bf16.xpose.msra.mxu0 0
        %1502 = vmatprep.subr.bf16.mxu0 0
        %1503 = vmatpush1.bf16.xpose.msra.mxu0 0
        %1504 = vmatprep.subr.bf16.mxu0 0
        %1505 = vmatpush1.bf16.xpose.msra.mxu0 0
        %1506 = vmatprep.mubr.bf16.mxu0 0
        %1507 = vmatmul.mubr.bf16.gmra.mrb[0].mxu0 %v1457
        %v1508 = vpop.f32.mrb[0].mxu0
        %v1509 = vadd.f32 %v1425, %v1508
        %v1510 = vpop.f32.mrb[0].mxu0
        %v1511 = vpop.f32.mrb[0].mxu0
        %v1512 = vadd.f32 %v1426, %v1511
        %v1513 = vpop.f32.mrb[0].mxu0
        %1514 = vmatprep.mubr.bf16.mxu0 0
        %1515 = vmatmul.mubr.bf16.gmra.mrb[0].mxu0 %v1460
        %v1516 = vpop.f32.mrb[0].mxu0
        %v1517 = vadd.f32 %v1427, %v1516
        %v1518 = vpop.f32.mrb[0].mxu0
        %v1519 = vpop.f32.mrb[0].mxu0
        %v1520 = vadd.f32 %v1428, %v1519
        %v1521 = vpop.f32.mrb[0].mxu0
        %1522 = vmatprep.mubr.bf16.mxu0 0
        %1523 = vmatmul.mubr.bf16.gmra.mrb[0].mxu0 %v1463
        %v1524 = vpop.f32.mrb[0].mxu0
        %v1525 = vadd.f32 %v1429, %v1524
        %v1526 = vpop.f32.mrb[0].mxu0
        %v1527 = vpop.f32.mrb[0].mxu0
        %v1528 = vadd.f32 %v1430, %v1527
        %v1529 = vpop.f32.mrb[0].mxu0
        %1530 = vdwg.mxu0
        %vm1531 = vcmask 392192
        %v1532 = vsel %vm1531, %v1509, -inf
        %1533 = vmax.xlane.f32.xlu0 %v1532
        %v1534 = vpop.xlane.xlu0 %1533
        %v1535 = vsel %vm1531, %v1512, -inf
        %1536 = vmax.xlane.f32.xlu0 %v1535
        %v1537 = vpop.xlane.xlu0 %1536
        %v1538 = vsel %vm1531, %v1517, -inf
        %1539 = vmax.xlane.f32.xlu0 %v1538
        %v1540 = vpop.xlane.xlu0 %1539
        %v1541 = vsel %vm1531, %v1520, -inf
        %1542 = vmax.xlane.f32.xlu0 %v1541
        %v1543 = vpop.xlane.xlu0 %1542
        %v1544 = vsel %vm1531, %v1525, -inf
        %1545 = vmax.xlane.f32.xlu0 %v1544
        %v1546 = vpop.xlane.xlu0 %1545
        %v1547 = vsel %vm1531, %v1528, -inf
        %1548 = vmax.xlane.f32.xlu0 %v1547
        %v1549 = vpop.xlane.xlu0 %1548
        %v1550 = vsub.f32 %v1509, %v1534
        %v1551 = vsub.f32 %v1512, %v1537
        %v1552 = vsub.f32 %v1517, %v1540
        %v1553 = vsub.f32 %v1520, %v1543
        %v1554 = vsub.f32 %v1525, %v1546
        %v1555 = vsub.f32 %v1528, %v1549
        %v1556 = vmul.f32 %v1550, 1.442695
        %v1557 = vpow.pop %v1556
        %v1558 = vmul.f32 %v1551, 1.442695
        %v1559 = vpow.pop %v1558
        %v1560 = vmul.f32 %v1552, 1.442695
        %v1561 = vpow.pop %v1560
        %v1562 = vmul.f32 %v1553, 1.442695
        %v1563 = vpow.pop %v1562
        %v1564 = vmul.f32 %v1554, 1.442695
        %v1565 = vpow.pop %v1564
        %v1566 = vmul.f32 %v1555, 1.442695
        %v1567 = vpow.pop %v1566
        %v1568 = vsel %vm1531, %v1557, 0.0
        %1569 = vadd.xlane.f32.xlu0 %v1568
        %v1570 = vpop.xlane.xlu0 %1569
        %v1571 = vsel %vm1531, %v1559, 0.0
        %1572 = vadd.xlane.f32.xlu0 %v1571
        %v1573 = vpop.xlane.xlu0 %1572
        %v1574 = vsel %vm1531, %v1561, 0.0
        %1575 = vadd.xlane.f32.xlu0 %v1574
        %v1576 = vpop.xlane.xlu0 %1575
        %v1577 = vsel %vm1531, %v1563, 0.0
        %1578 = vadd.xlane.f32.xlu0 %v1577
        %v1579 = vpop.xlane.xlu0 %1578
        %v1580 = vsel %vm1531, %v1565, 0.0
        %1581 = vadd.xlane.f32.xlu0 %v1580
        %v1582 = vpop.xlane.xlu0 %1581
        %v1583 = vsel %vm1531, %v1567, 0.0
        %1584 = vadd.xlane.f32.xlu0 %v1583
        %v1585 = vpop.xlane.xlu0 %1584
        %v1586 = vrcp.pop %v1570
        %v1587 = vrcp.pop %v1573
        %v1588 = vrcp.pop %v1576
        %v1589 = vrcp.pop %v1579
        %v1590 = vrcp.pop %v1582
        %v1591 = vrcp.pop %v1585
        %v1592 = vmul.f32 %v1557, %v1586
        %v1593 = vmul.f32 %v1559, %v1587
        %v1594 = vmul.f32 %v1561, %v1588
        %v1595 = vmul.f32 %v1563, %v1589
        %v1596 = vmul.f32 %v1565, %v1590
        %v1597 = vmul.f32 %v1567, %v1591
        %v1598 = vpack.c.bf16 %v1593, %v1592
        %v1599 = vpack.c.bf16 %v1595, %v1594
        %v1600 = vpack.c.bf16 %v1597, %v1596
        %v1602 = vsel %vm1531, %v1598, 0
        %v1605 = vsel %vm1531, %v1599, 0
        %v1608 = vsel %vm1531, %v1600, 0
        %1610 = vmatprep.subr.bf16.mxu0 0
        %1611 = vmatpush1.bf16.msra.mxu0 %v1443
        %1612 = vmatprep.subr.bf16.mxu0 0
        %1613 = vmatpush1.bf16.msra.mxu0 %v1444
        %1614 = vmatprep.subr.bf16.mxu0 0
        %1615 = vmatpush1.bf16.msra.mxu0 %v1445
        %1616 = vmatprep.subr.bf16.mxu0 0
        %1617 = vmatpush1.bf16.msra.mxu0 0
        %1618 = vmatprep.subr.bf16.mxu0 0
        %1619 = vmatpush1.bf16.msra.mxu0 0
        %1620 = vmatprep.subr.bf16.mxu0 0
        %1621 = vmatpush1.bf16.msra.mxu0 0
        %1622 = vmatprep.subr.bf16.mxu0 0
        %1623 = vmatpush1.bf16.msra.mxu0 0
        %1624 = vmatprep.subr.bf16.mxu0 0
        %1625 = vmatpush1.bf16.msra.mxu0 0
        %1626 = vmatprep.subr.bf16.mxu0 0
        %1627 = vmatpush1.bf16.msra.mxu0 0
        %1628 = vmatprep.subr.bf16.mxu0 0
        %1629 = vmatpush1.bf16.msra.mxu0 0
        %1630 = vmatprep.subr.bf16.mxu0 0
        %1631 = vmatpush1.bf16.msra.mxu0 0
        %1632 = vmatprep.subr.bf16.mxu0 0
        %1633 = vmatpush1.bf16.msra.mxu0 0
        %1634 = vmatprep.subr.bf16.mxu0 0
        %1635 = vmatpush1.bf16.msra.mxu0 0
        %1636 = vmatprep.subr.bf16.mxu0 0
        %1637 = vmatpush1.bf16.msra.mxu0 0
        %1638 = vmatprep.subr.bf16.mxu0 0
        %1639 = vmatpush1.bf16.msra.mxu0 0
        %1640 = vmatprep.subr.bf16.mxu0 0
        %1641 = vmatpush1.bf16.msra.mxu0 0
        %1642 = vmatprep.mubr.bf16.mxu0 0
        %1643 = vmatmul.mubr.bf16.gmra.mrb[0].mxu0 %v1602
        %v1644 = vpop.f32.mrb[0].mxu0
        %v1645 = vadd.f32 0.0, %v1644
        %v1646 = vpop.f32.mrb[0].mxu0
        %v1647 = vpop.f32.mrb[0].mxu0
        %v1648 = vadd.f32 0.0, %v1647
        %v1649 = vpop.f32.mrb[0].mxu0
        %1650 = vmatprep.mubr.bf16.mxu0 0
        %1651 = vmatmul.mubr.bf16.gmra.mrb[0].mxu0 %v1605
        %v1652 = vpop.f32.mrb[0].mxu0
        %v1653 = vadd.f32 0.0, %v1652
        %v1654 = vpop.f32.mrb[0].mxu0
        %v1655 = vpop.f32.mrb[0].mxu0
        %v1656 = vadd.f32 0.0, %v1655
        %v1657 = vpop.f32.mrb[0].mxu0
        %1658 = vmatprep.mubr.bf16.mxu0 0
        %1659 = vmatmul.mubr.bf16.gmra.mrb[0].mxu0 %v1608
        %v1660 = vpop.f32.mrb[0].mxu0
        %v1661 = vadd.f32 0.0, %v1660
        %v1662 = vpop.f32.mrb[0].mxu0
        %v1663 = vpop.f32.mrb[0].mxu0
        %v1664 = vadd.f32 0.0, %v1663
        %v1665 = vpop.f32.mrb[0].mxu0
        %1666 = vdwg.mxu0
        %1670 = vrot.lane.b32.xlu0 %v1437, 112
        %v1671 = vpop.permute.xlu0 %1670
        %1672 = vrot.lane.b32.xlu0 %v1438, 112
        %v1673 = vpop.permute.xlu0 %1672
        %1674 = vrot.lane.b32.xlu0 %v1439, 112
        %v1675 = vpop.permute.xlu0 %1674
        %1676 = vrot.lane.b32.xlu0 %v1440, 48
        %v1677 = vpop.permute.xlu0 %1676
        %1678 = vrot.lane.b32.xlu0 %v1441, 48
        %v1679 = vpop.permute.xlu0 %1678
        %1680 = vrot.lane.b32.xlu0 %v1442, 48
        %v1681 = vpop.permute.xlu0 %1680
        %v1683 = vsel %vm1455, %v1671, 0
        %v1686 = vsel %vm1455, %v1673, 0
        %v1689 = vsel %vm1455, %v1675, 0
        %v1692 = vsel %vm1455, %v1677, 0
        %v1695 = vsel %vm1455, %v1679, 0
        %v1698 = vsel %vm1455, %v1681, 0
        %1700 = vmatprep.subr.bf16.mxu0 0
        %1701 = vmatpush1.bf16.xpose.msra.mxu0 %v1692
        %1702 = vmatprep.subr.bf16.mxu0 0
        %1703 = vmatpush1.bf16.xpose.msra.mxu0 %v1695
        %1704 = vmatprep.subr.bf16.mxu0 0
        %1705 = vmatpush1.bf16.xpose.msra.mxu0 %v1698
        %1706 = vmatprep.subr.bf16.mxu0 0
        %1707 = vmatpush1.bf16.xpose.msra.mxu0 0
        %1708 = vmatprep.subr.bf16.mxu0 0
        %1709 = vmatpush1.bf16.xpose.msra.mxu0 0
        %1710 = vmatprep.subr.bf16.mxu0 0
        %1711 = vmatpush1.bf16.xpose.msra.mxu0 0
        %1712 = vmatprep.subr.bf16.mxu0 0
        %1713 = vmatpush1.bf16.xpose.msra.mxu0 0
        %1714 = vmatprep.subr.bf16.mxu0 0
        %1715 = vmatpush1.bf16.xpose.msra.mxu0 0
        %1716 = vmatprep.subr.bf16.mxu0 0
        %1717 = vmatpush1.bf16.xpose.msra.mxu0 0
        %1718 = vmatprep.subr.bf16.mxu0 0
        %1719 = vmatpush1.bf16.xpose.msra.mxu0 0
        %1720 = vmatprep.subr.bf16.mxu0 0
        %1721 = vmatpush1.bf16.xpose.msra.mxu0 0
        %1722 = vmatprep.subr.bf16.mxu0 0
        %1723 = vmatpush1.bf16.xpose.msra.mxu0 0
        %1724 = vmatprep.subr.bf16.mxu0 0
        %1725 = vmatpush1.bf16.xpose.msra.mxu0 0
        %1726 = vmatprep.subr.bf16.mxu0 0
        %1727 = vmatpush1.bf16.xpose.msra.mxu0 0
        %1728 = vmatprep.subr.bf16.mxu0 0
        %1729 = vmatpush1.bf16.xpose.msra.mxu0 0
        %1730 = vmatprep.subr.bf16.mxu0 0
        %1731 = vmatpush1.bf16.xpose.msra.mxu0 0
        %1732 = vmatprep.mubr.bf16.mxu0 0
        %1733 = vmatmul.mubr.bf16.gmra.mrb[0].mxu0 %v1683
        %v1734 = vpop.f32.mrb[0].mxu0
        %v1735 = vadd.f32 %v1425, %v1734
        %v1736 = vpop.f32.mrb[0].mxu0
        %v1737 = vpop.f32.mrb[0].mxu0
        %v1738 = vadd.f32 %v1426, %v1737
        %v1739 = vpop.f32.mrb[0].mxu0
        %1740 = vmatprep.mubr.bf16.mxu0 0
        %1741 = vmatmul.mubr.bf16.gmra.mrb[0].mxu0 %v1686
        %v1742 = vpop.f32.mrb[0].mxu0
        %v1743 = vadd.f32 %v1427, %v1742
        %v1744 = vpop.f32.mrb[0].mxu0
        %v1745 = vpop.f32.mrb[0].mxu0
        %v1746 = vadd.f32 %v1428, %v1745
        %v1747 = vpop.f32.mrb[0].mxu0
        %1748 = vmatprep.mubr.bf16.mxu0 0
        %1749 = vmatmul.mubr.bf16.gmra.mrb[0].mxu0 %v1689
        %v1750 = vpop.f32.mrb[0].mxu0
        %v1751 = vadd.f32 %v1429, %v1750
        %v1752 = vpop.f32.mrb[0].mxu0
        %v1753 = vpop.f32.mrb[0].mxu0
        %v1754 = vadd.f32 %v1430, %v1753
        %v1755 = vpop.f32.mrb[0].mxu0
        %1756 = vdwg.mxu0
        %v1757 = vsel %vm1531, %v1735, -inf
        %1758 = vmax.xlane.f32.xlu0 %v1757
        %v1759 = vpop.xlane.xlu0 %1758
        %v1760 = vsel %vm1531, %v1738, -inf
        %1761 = vmax.xlane.f32.xlu0 %v1760
        %v1762 = vpop.xlane.xlu0 %1761
        %v1763 = vsel %vm1531, %v1743, -inf
        %1764 = vmax.xlane.f32.xlu0 %v1763
        %v1765 = vpop.xlane.xlu0 %1764
        %v1766 = vsel %vm1531, %v1746, -inf
        %1767 = vmax.xlane.f32.xlu0 %v1766
        %v1768 = vpop.xlane.xlu0 %1767
        %v1769 = vsel %vm1531, %v1751, -inf
        %1770 = vmax.xlane.f32.xlu0 %v1769
        %v1771 = vpop.xlane.xlu0 %1770
        %v1772 = vsel %vm1531, %v1754, -inf
        %1773 = vmax.xlane.f32.xlu0 %v1772
        %v1774 = vpop.xlane.xlu0 %1773
        %v1775 = vsub.f32 %v1735, %v1759
        %v1776 = vsub.f32 %v1738, %v1762
        %v1777 = vsub.f32 %v1743, %v1765
        %v1778 = vsub.f32 %v1746, %v1768
        %v1779 = vsub.f32 %v1751, %v1771
        %v1780 = vsub.f32 %v1754, %v1774
        %v1781 = vmul.f32 %v1775, 1.442695
        %v1782 = vpow.pop %v1781
        %v1783 = vmul.f32 %v1776, 1.442695
        %v1784 = vpow.pop %v1783
        %v1785 = vmul.f32 %v1777, 1.442695
        %v1786 = vpow.pop %v1785
        %v1787 = vmul.f32 %v1778, 1.442695
        %v1788 = vpow.pop %v1787
        %v1789 = vmul.f32 %v1779, 1.442695
        %v1790 = vpow.pop %v1789
        %v1791 = vmul.f32 %v1780, 1.442695
        %v1792 = vpow.pop %v1791
        %v1793 = vsel %vm1531, %v1782, 0.0
        %1794 = vadd.xlane.f32.xlu0 %v1793
        %v1795 = vpop.xlane.xlu0 %1794
        %v1796 = vsel %vm1531, %v1784, 0.0
        %1797 = vadd.xlane.f32.xlu0 %v1796
        %v1798 = vpop.xlane.xlu0 %1797
        %v1799 = vsel %vm1531, %v1786, 0.0
        %1800 = vadd.xlane.f32.xlu0 %v1799
        %v1801 = vpop.xlane.xlu0 %1800
        %v1802 = vsel %vm1531, %v1788, 0.0
        %1803 = vadd.xlane.f32.xlu0 %v1802
        %v1804 = vpop.xlane.xlu0 %1803
        %v1805 = vsel %vm1531, %v1790, 0.0
        %1806 = vadd.xlane.f32.xlu0 %v1805
        %v1807 = vpop.xlane.xlu0 %1806
        %v1808 = vsel %vm1531, %v1792, 0.0
        %1809 = vadd.xlane.f32.xlu0 %v1808
        %v1810 = vpop.xlane.xlu0 %1809
        %v1811 = vrcp.pop %v1795
        %v1812 = vrcp.pop %v1798
        %v1813 = vrcp.pop %v1801
        %v1814 = vrcp.pop %v1804
        %v1815 = vrcp.pop %v1807
        %v1816 = vrcp.pop %v1810
        %v1817 = vmul.f32 %v1782, %v1811
        %v1818 = vmul.f32 %v1784, %v1812
        %v1819 = vmul.f32 %v1786, %v1813
        %v1820 = vmul.f32 %v1788, %v1814
        %v1821 = vmul.f32 %v1790, %v1815
        %v1822 = vmul.f32 %v1792, %v1816
        %v1823 = vpack.c.bf16 %v1818, %v1817
        %v1824 = vpack.c.bf16 %v1820, %v1819
        %v1825 = vpack.c.bf16 %v1822, %v1821
        %1829 = vrot.lane.b32.xlu0 %v1443, 112
        %v1830 = vpop.permute.xlu0 %1829
        %1831 = vrot.lane.b32.xlu0 %v1444, 112
        %v1832 = vpop.permute.xlu0 %1831
        %1833 = vrot.lane.b32.xlu0 %v1445, 112
        %v1834 = vpop.permute.xlu0 %1833
        %v1839 = vsel %vm1531, %v1823, 0
        %v1842 = vsel %vm1531, %v1824, 0
        %v1845 = vsel %vm1531, %v1825, 0
        %1847 = vmatprep.subr.bf16.mxu0 0
        %1848 = vmatpush1.bf16.msra.mxu0 %v1830
        %1849 = vmatprep.subr.bf16.mxu0 0
        %1850 = vmatpush1.bf16.msra.mxu0 %v1832
        %1851 = vmatprep.subr.bf16.mxu0 0
        %1852 = vmatpush1.bf16.msra.mxu0 %v1834
        %1853 = vmatprep.subr.bf16.mxu0 0
        %1854 = vmatpush1.bf16.msra.mxu0 0
        %1855 = vmatprep.subr.bf16.mxu0 0
        %1856 = vmatpush1.bf16.msra.mxu0 0
        %1857 = vmatprep.subr.bf16.mxu0 0
        %1858 = vmatpush1.bf16.msra.mxu0 0
        %1859 = vmatprep.subr.bf16.mxu0 0
        %1860 = vmatpush1.bf16.msra.mxu0 0
        %1861 = vmatprep.subr.bf16.mxu0 0
        %1862 = vmatpush1.bf16.msra.mxu0 0
        %1863 = vmatprep.subr.bf16.mxu0 0
        %1864 = vmatpush1.bf16.msra.mxu0 0
        %1865 = vmatprep.subr.bf16.mxu0 0
        %1866 = vmatpush1.bf16.msra.mxu0 0
        %1867 = vmatprep.subr.bf16.mxu0 0
        %1868 = vmatpush1.bf16.msra.mxu0 0
        %1869 = vmatprep.subr.bf16.mxu0 0
        %1870 = vmatpush1.bf16.msra.mxu0 0
        %1871 = vmatprep.subr.bf16.mxu0 0
        %1872 = vmatpush1.bf16.msra.mxu0 0
        %1873 = vmatprep.subr.bf16.mxu0 0
        %1874 = vmatpush1.bf16.msra.mxu0 0
        %1875 = vmatprep.subr.bf16.mxu0 0
        %1876 = vmatpush1.bf16.msra.mxu0 0
        %1877 = vmatprep.subr.bf16.mxu0 0
        %1878 = vmatpush1.bf16.msra.mxu0 0
        %1879 = vmatprep.mubr.bf16.mxu0 0
        %1880 = vmatmul.mubr.bf16.gmra.mrb[0].mxu0 %v1839
        %v1881 = vpop.f32.mrb[0].mxu0
        %v1882 = vadd.f32 0.0, %v1881
        %v1883 = vpop.f32.mrb[0].mxu0
        %v1884 = vpop.f32.mrb[0].mxu0
        %v1885 = vadd.f32 0.0, %v1884
        %v1886 = vpop.f32.mrb[0].mxu0
        %1887 = vmatprep.mubr.bf16.mxu0 0
        %1888 = vmatmul.mubr.bf16.gmra.mrb[0].mxu0 %v1842
        %v1889 = vpop.f32.mrb[0].mxu0
        %v1890 = vadd.f32 0.0, %v1889
        %v1891 = vpop.f32.mrb[0].mxu0
        %v1892 = vpop.f32.mrb[0].mxu0
        %v1893 = vadd.f32 0.0, %v1892
        %v1894 = vpop.f32.mrb[0].mxu0
        %1895 = vmatprep.mubr.bf16.mxu0 0
        %1896 = vmatmul.mubr.bf16.gmra.mrb[0].mxu0 %v1845
        %v1897 = vpop.f32.mrb[0].mxu0
        %v1898 = vadd.f32 0.0, %v1897
        %v1899 = vpop.f32.mrb[0].mxu0
        %v1900 = vpop.f32.mrb[0].mxu0
        %v1901 = vadd.f32 0.0, %v1900
        %v1902 = vpop.f32.mrb[0].mxu0
        %1903 = vdwg.mxu0
        %1904 = vrot.lane.b32.xlu0 %v1437, 96
        %v1905 = vpop.permute.xlu0 %1904
        %1906 = vrot.lane.b32.xlu0 %v1438, 96
        %v1907 = vpop.permute.xlu0 %1906
        %1908 = vrot.lane.b32.xlu0 %v1439, 96
        %v1909 = vpop.permute.xlu0 %1908
        %1910 = vrot.lane.b32.xlu0 %v1440, 32
        %v1911 = vpop.permute.xlu0 %1910
        %1912 = vrot.lane.b32.xlu0 %v1441, 32
        %v1913 = vpop.permute.xlu0 %1912
        %1914 = vrot.lane.b32.xlu0 %v1442, 32
        %v1915 = vpop.permute.xlu0 %1914
        %v1917 = vsel %vm1455, %v1905, 0
        %v1920 = vsel %vm1455, %v1907, 0
        %v1923 = vsel %vm1455, %v1909, 0
        %v1926 = vsel %vm1455, %v1911, 0
        %v1929 = vsel %vm1455, %v1913, 0
        %v1932 = vsel %vm1455, %v1915, 0
        %1934 = vmatprep.subr.bf16.mxu0 0
        %1935 = vmatpush1.bf16.xpose.msra.mxu0 %v1926
        %1936 = vmatprep.subr.bf16.mxu0 0
        %1937 = vmatpush1.bf16.xpose.msra.mxu0 %v1929
        %1938 = vmatprep.subr.bf16.mxu0 0
        %1939 = vmatpush1.bf16.xpose.msra.mxu0 %v1932
        %1940 = vmatprep.subr.bf16.mxu0 0
        %1941 = vmatpush1.bf16.xpose.msra.mxu0 0
        %1942 = vmatprep.subr.bf16.mxu0 0
        %1943 = vmatpush1.bf16.xpose.msra.mxu0 0
        %1944 = vmatprep.subr.bf16.mxu0 0
        %1945 = vmatpush1.bf16.xpose.msra.mxu0 0
        %1946 = vmatprep.subr.bf16.mxu0 0
        %1947 = vmatpush1.bf16.xpose.msra.mxu0 0
        %1948 = vmatprep.subr.bf16.mxu0 0
        %1949 = vmatpush1.bf16.xpose.msra.mxu0 0
        %1950 = vmatprep.subr.bf16.mxu0 0
        %1951 = vmatpush1.bf16.xpose.msra.mxu0 0
        %1952 = vmatprep.subr.bf16.mxu0 0
        %1953 = vmatpush1.bf16.xpose.msra.mxu0 0
        %1954 = vmatprep.subr.bf16.mxu0 0
        %1955 = vmatpush1.bf16.xpose.msra.mxu0 0
        %1956 = vmatprep.subr.bf16.mxu0 0
        %1957 = vmatpush1.bf16.xpose.msra.mxu0 0
        %1958 = vmatprep.subr.bf16.mxu0 0
        %1959 = vmatpush1.bf16.xpose.msra.mxu0 0
        %1960 = vmatprep.subr.bf16.mxu0 0
        %1961 = vmatpush1.bf16.xpose.msra.mxu0 0
        %1962 = vmatprep.subr.bf16.mxu0 0
        %1963 = vmatpush1.bf16.xpose.msra.mxu0 0
        %1964 = vmatprep.subr.bf16.mxu0 0
        %1965 = vmatpush1.bf16.xpose.msra.mxu0 0
        %1966 = vmatprep.mubr.bf16.mxu0 0
        %1967 = vmatmul.mubr.bf16.gmra.mrb[0].mxu0 %v1917
        %v1968 = vpop.f32.mrb[0].mxu0
        %v1969 = vadd.f32 %v1425, %v1968
        %v1970 = vpop.f32.mrb[0].mxu0
        %v1971 = vpop.f32.mrb[0].mxu0
        %v1972 = vadd.f32 %v1426, %v1971
        %v1973 = vpop.f32.mrb[0].mxu0
        %1974 = vmatprep.mubr.bf16.mxu0 0
        %1975 = vmatmul.mubr.bf16.gmra.mrb[0].mxu0 %v1920
        %v1976 = vpop.f32.mrb[0].mxu0
        %v1977 = vadd.f32 %v1427, %v1976
        %v1978 = vpop.f32.mrb[0].mxu0
        %v1979 = vpop.f32.mrb[0].mxu0
        %v1980 = vadd.f32 %v1428, %v1979
        %v1981 = vpop.f32.mrb[0].mxu0
        %1982 = vmatprep.mubr.bf16.mxu0 0
        %1983 = vmatmul.mubr.bf16.gmra.mrb[0].mxu0 %v1923
        %v1984 = vpop.f32.mrb[0].mxu0
        %v1985 = vadd.f32 %v1429, %v1984
        %v1986 = vpop.f32.mrb[0].mxu0
        %v1987 = vpop.f32.mrb[0].mxu0
        %v1988 = vadd.f32 %v1430, %v1987
        %v1989 = vpop.f32.mrb[0].mxu0
        %1990 = vdwg.mxu0
        %v1991 = vsel %vm1531, %v1969, -inf
        %1992 = vmax.xlane.f32.xlu0 %v1991
        %v1993 = vpop.xlane.xlu0 %1992
        %v1994 = vsel %vm1531, %v1972, -inf
        %1995 = vmax.xlane.f32.xlu0 %v1994
        %v1996 = vpop.xlane.xlu0 %1995
        %v1997 = vsel %vm1531, %v1977, -inf
        %1998 = vmax.xlane.f32.xlu0 %v1997
        %v1999 = vpop.xlane.xlu0 %1998
        %v2000 = vsel %vm1531, %v1980, -inf
        %2001 = vmax.xlane.f32.xlu0 %v2000
        %v2002 = vpop.xlane.xlu0 %2001
        %v2003 = vsel %vm1531, %v1985, -inf
        %2004 = vmax.xlane.f32.xlu0 %v2003
        %v2005 = vpop.xlane.xlu0 %2004
        %v2006 = vsel %vm1531, %v1988, -inf
        %2007 = vmax.xlane.f32.xlu0 %v2006
        %v2008 = vpop.xlane.xlu0 %2007
        %v2009 = vsub.f32 %v1969, %v1993
        %v2010 = vsub.f32 %v1972, %v1996
        %v2011 = vsub.f32 %v1977, %v1999
        %v2012 = vsub.f32 %v1980, %v2002
        %v2013 = vsub.f32 %v1985, %v2005
        %v2014 = vsub.f32 %v1988, %v2008
        %v2015 = vmul.f32 %v2009, 1.442695
        %v2016 = vpow.pop %v2015
        %v2017 = vmul.f32 %v2010, 1.442695
        %v2018 = vpow.pop %v2017
        %v2019 = vmul.f32 %v2011, 1.442695
        %v2020 = vpow.pop %v2019
        %v2021 = vmul.f32 %v2012, 1.442695
        %v2022 = vpow.pop %v2021
        %v2023 = vmul.f32 %v2013, 1.442695
        %v2024 = vpow.pop %v2023
        %v2025 = vmul.f32 %v2014, 1.442695
        %v2026 = vpow.pop %v2025
        %v2027 = vsel %vm1531, %v2016, 0.0
        %2028 = vadd.xlane.f32.xlu0 %v2027
        %v2029 = vpop.xlane.xlu0 %2028
        %v2030 = vsel %vm1531, %v2018, 0.0
        %2031 = vadd.xlane.f32.xlu0 %v2030
        %v2032 = vpop.xlane.xlu0 %2031
        %v2033 = vsel %vm1531, %v2020, 0.0
        %2034 = vadd.xlane.f32.xlu0 %v2033
        %v2035 = vpop.xlane.xlu0 %2034
        %v2036 = vsel %vm1531, %v2022, 0.0
        %2037 = vadd.xlane.f32.xlu0 %v2036
        %v2038 = vpop.xlane.xlu0 %2037
        %v2039 = vsel %vm1531, %v2024, 0.0
        %2040 = vadd.xlane.f32.xlu0 %v2039
        %v2041 = vpop.xlane.xlu0 %2040
        %v2042 = vsel %vm1531, %v2026, 0.0
        %2043 = vadd.xlane.f32.xlu0 %v2042
        %v2044 = vpop.xlane.xlu0 %2043
        %v2045 = vrcp.pop %v2029
        %v2046 = vrcp.pop %v2032
        %v2047 = vrcp.pop %v2035
        %v2048 = vrcp.pop %v2038
        %v2049 = vrcp.pop %v2041
        %v2050 = vrcp.pop %v2044
        %v2051 = vmul.f32 %v2016, %v2045
        %v2052 = vmul.f32 %v2018, %v2046
        %v2053 = vmul.f32 %v2020, %v2047
        %v2054 = vmul.f32 %v2022, %v2048
        %v2055 = vmul.f32 %v2024, %v2049
        %v2056 = vmul.f32 %v2026, %v2050
        %v2057 = vpack.c.bf16 %v2052, %v2051
        %v2058 = vpack.c.bf16 %v2054, %v2053
        %v2059 = vpack.c.bf16 %v2056, %v2055
        %2060 = vrot.lane.b32.xlu0 %v1443, 96
        %v2061 = vpop.permute.xlu0 %2060
        %2062 = vrot.lane.b32.xlu0 %v1444, 96
        %v2063 = vpop.permute.xlu0 %2062
        %2064 = vrot.lane.b32.xlu0 %v1445, 96
        %v2065 = vpop.permute.xlu0 %2064
        %v2070 = vsel %vm1531, %v2057, 0
        %v2073 = vsel %vm1531, %v2058, 0
        %v2076 = vsel %vm1531, %v2059, 0
        %2078 = vmatprep.subr.bf16.mxu0 0
        %2079 = vmatpush1.bf16.msra.mxu0 %v2061
        %2080 = vmatprep.subr.bf16.mxu0 0
        %2081 = vmatpush1.bf16.msra.mxu0 %v2063
        %2082 = vmatprep.subr.bf16.mxu0 0
        %2083 = vmatpush1.bf16.msra.mxu0 %v2065
        %2084 = vmatprep.subr.bf16.mxu0 0
        %2085 = vmatpush1.bf16.msra.mxu0 0
        %2086 = vmatprep.subr.bf16.mxu0 0
        %2087 = vmatpush1.bf16.msra.mxu0 0
        %2088 = vmatprep.subr.bf16.mxu0 0
        %2089 = vmatpush1.bf16.msra.mxu0 0
        %2090 = vmatprep.subr.bf16.mxu0 0
        %2091 = vmatpush1.bf16.msra.mxu0 0
        %2092 = vmatprep.subr.bf16.mxu0 0
        %2093 = vmatpush1.bf16.msra.mxu0 0
        %2094 = vmatprep.subr.bf16.mxu0 0
        %2095 = vmatpush1.bf16.msra.mxu0 0
        %2096 = vmatprep.subr.bf16.mxu0 0
        %2097 = vmatpush1.bf16.msra.mxu0 0
        %2098 = vmatprep.subr.bf16.mxu0 0
        %2099 = vmatpush1.bf16.msra.mxu0 0
        %2100 = vmatprep.subr.bf16.mxu0 0
        %2101 = vmatpush1.bf16.msra.mxu0 0
        %2102 = vmatprep.subr.bf16.mxu0 0
        %2103 = vmatpush1.bf16.msra.mxu0 0
        %2104 = vmatprep.subr.bf16.mxu0 0
        %2105 = vmatpush1.bf16.msra.mxu0 0
        %2106 = vmatprep.subr.bf16.mxu0 0
        %2107 = vmatpush1.bf16.msra.mxu0 0
        %2108 = vmatprep.subr.bf16.mxu0 0
        %2109 = vmatpush1.bf16.msra.mxu0 0
        %2110 = vmatprep.mubr.bf16.mxu0 0
        %2111 = vmatmul.mubr.bf16.gmra.mrb[0].mxu0 %v2070
        %v2112 = vpop.f32.mrb[0].mxu0
        %v2113 = vadd.f32 0.0, %v2112
        %v2114 = vpop.f32.mrb[0].mxu0
        %v2115 = vpop.f32.mrb[0].mxu0
        %v2116 = vadd.f32 0.0, %v2115
        %v2117 = vpop.f32.mrb[0].mxu0
        %2118 = vmatprep.mubr.bf16.mxu0 0
        %2119 = vmatmul.mubr.bf16.gmra.mrb[0].mxu0 %v2073
        %v2120 = vpop.f32.mrb[0].mxu0
        %v2121 = vadd.f32 0.0, %v2120
        %v2122 = vpop.f32.mrb[0].mxu0
        %v2123 = vpop.f32.mrb[0].mxu0
        %v2124 = vadd.f32 0.0, %v2123
        %v2125 = vpop.f32.mrb[0].mxu0
        %2126 = vmatprep.mubr.bf16.mxu0 0
        %2127 = vmatmul.mubr.bf16.gmra.mrb[0].mxu0 %v2076
        %v2128 = vpop.f32.mrb[0].mxu0
        %v2129 = vadd.f32 0.0, %v2128
        %v2130 = vpop.f32.mrb[0].mxu0
        %v2131 = vpop.f32.mrb[0].mxu0
        %v2132 = vadd.f32 0.0, %v2131
        %v2133 = vpop.f32.mrb[0].mxu0
        %2134 = vdwg.mxu0
        %2135 = vrot.lane.b32.xlu0 %v1437, 80
        %v2136 = vpop.permute.xlu0 %2135
        %2137 = vrot.lane.b32.xlu0 %v1438, 80
        %v2138 = vpop.permute.xlu0 %2137
        %2139 = vrot.lane.b32.xlu0 %v1439, 80
        %v2140 = vpop.permute.xlu0 %2139
        %2141 = vrot.lane.b32.xlu0 %v1440, 16
        %v2142 = vpop.permute.xlu0 %2141
        %2143 = vrot.lane.b32.xlu0 %v1441, 16
        %v2144 = vpop.permute.xlu0 %2143
        %2145 = vrot.lane.b32.xlu0 %v1442, 16
        %v2146 = vpop.permute.xlu0 %2145
        %v2148 = vsel %vm1455, %v2136, 0
        %v2151 = vsel %vm1455, %v2138, 0
        %v2154 = vsel %vm1455, %v2140, 0
        %v2157 = vsel %vm1455, %v2142, 0
        %v2160 = vsel %vm1455, %v2144, 0
        %v2163 = vsel %vm1455, %v2146, 0
        %2165 = vmatprep.subr.bf16.mxu0 0
        %2166 = vmatpush1.bf16.xpose.msra.mxu0 %v2157
        %2167 = vmatprep.subr.bf16.mxu0 0
        %2168 = vmatpush1.bf16.xpose.msra.mxu0 %v2160
        %2169 = vmatprep.subr.bf16.mxu0 0
        %2170 = vmatpush1.bf16.xpose.msra.mxu0 %v2163
        %2171 = vmatprep.subr.bf16.mxu0 0
        %2172 = vmatpush1.bf16.xpose.msra.mxu0 0
        %2173 = vmatprep.subr.bf16.mxu0 0
        %2174 = vmatpush1.bf16.xpose.msra.mxu0 0
        %2175 = vmatprep.subr.bf16.mxu0 0
        %2176 = vmatpush1.bf16.xpose.msra.mxu0 0
        %2177 = vmatprep.subr.bf16.mxu0 0
        %2178 = vmatpush1.bf16.xpose.msra.mxu0 0
        %2179 = vmatprep.subr.bf16.mxu0 0
        %2180 = vmatpush1.bf16.xpose.msra.mxu0 0
        %2181 = vmatprep.subr.bf16.mxu0 0
        %2182 = vmatpush1.bf16.xpose.msra.mxu0 0
        %2183 = vmatprep.subr.bf16.mxu0 0
        %2184 = vmatpush1.bf16.xpose.msra.mxu0 0
        %2185 = vmatprep.subr.bf16.mxu0 0
        %2186 = vmatpush1.bf16.xpose.msra.mxu0 0
        %2187 = vmatprep.subr.bf16.mxu0 0
        %2188 = vmatpush1.bf16.xpose.msra.mxu0 0
        %2189 = vmatprep.subr.bf16.mxu0 0
        %2190 = vmatpush1.bf16.xpose.msra.mxu0 0
        %2191 = vmatprep.subr.bf16.mxu0 0
        %2192 = vmatpush1.bf16.xpose.msra.mxu0 0
        %2193 = vmatprep.subr.bf16.mxu0 0
        %2194 = vmatpush1.bf16.xpose.msra.mxu0 0
        %2195 = vmatprep.subr.bf16.mxu0 0
        %2196 = vmatpush1.bf16.xpose.msra.mxu0 0
        %2197 = vmatprep.mubr.bf16.mxu0 0
        %2198 = vmatmul.mubr.bf16.gmra.mrb[0].mxu0 %v2148
        %v2199 = vpop.f32.mrb[0].mxu0
        %v2200 = vadd.f32 %v1425, %v2199
        %v2201 = vpop.f32.mrb[0].mxu0
        %v2202 = vpop.f32.mrb[0].mxu0
        %v2203 = vadd.f32 %v1426, %v2202
        %v2204 = vpop.f32.mrb[0].mxu0
        %2205 = vmatprep.mubr.bf16.mxu0 0
        %2206 = vmatmul.mubr.bf16.gmra.mrb[0].mxu0 %v2151
        %v2207 = vpop.f32.mrb[0].mxu0
        %v2208 = vadd.f32 %v1427, %v2207
        %v2209 = vpop.f32.mrb[0].mxu0
        %v2210 = vpop.f32.mrb[0].mxu0
        %v2211 = vadd.f32 %v1428, %v2210
        %v2212 = vpop.f32.mrb[0].mxu0
        %2213 = vmatprep.mubr.bf16.mxu0 0
        %2214 = vmatmul.mubr.bf16.gmra.mrb[0].mxu0 %v2154
        %v2215 = vpop.f32.mrb[0].mxu0
        %v2216 = vadd.f32 %v1429, %v2215
        %v2217 = vpop.f32.mrb[0].mxu0
        %v2218 = vpop.f32.mrb[0].mxu0
        %v2219 = vadd.f32 %v1430, %v2218
        %v2220 = vpop.f32.mrb[0].mxu0
        %2221 = vdwg.mxu0
        %v2222 = vsel %vm1531, %v2200, -inf
        %2223 = vmax.xlane.f32.xlu0 %v2222
        %v2224 = vpop.xlane.xlu0 %2223
        %v2225 = vsel %vm1531, %v2203, -inf
        %2226 = vmax.xlane.f32.xlu0 %v2225
        %v2227 = vpop.xlane.xlu0 %2226
        %v2228 = vsel %vm1531, %v2208, -inf
        %2229 = vmax.xlane.f32.xlu0 %v2228
        %v2230 = vpop.xlane.xlu0 %2229
        %v2231 = vsel %vm1531, %v2211, -inf
        %2232 = vmax.xlane.f32.xlu0 %v2231
        %v2233 = vpop.xlane.xlu0 %2232
        %v2234 = vsel %vm1531, %v2216, -inf
        %2235 = vmax.xlane.f32.xlu0 %v2234
        %v2236 = vpop.xlane.xlu0 %2235
        %v2237 = vsel %vm1531, %v2219, -inf
        %2238 = vmax.xlane.f32.xlu0 %v2237
        %v2239 = vpop.xlane.xlu0 %2238
        %v2240 = vsub.f32 %v2200, %v2224
        %v2241 = vsub.f32 %v2203, %v2227
        %v2242 = vsub.f32 %v2208, %v2230
        %v2243 = vsub.f32 %v2211, %v2233
        %v2244 = vsub.f32 %v2216, %v2236
        %v2245 = vsub.f32 %v2219, %v2239
        %v2246 = vmul.f32 %v2240, 1.442695
        %v2247 = vpow.pop %v2246
        %v2248 = vmul.f32 %v2241, 1.442695
        %v2249 = vpow.pop %v2248
        %v2250 = vmul.f32 %v2242, 1.442695
        %v2251 = vpow.pop %v2250
        %v2252 = vmul.f32 %v2243, 1.442695
        %v2253 = vpow.pop %v2252
        %v2254 = vmul.f32 %v2244, 1.442695
        %v2255 = vpow.pop %v2254
        %v2256 = vmul.f32 %v2245, 1.442695
        %v2257 = vpow.pop %v2256
        %v2258 = vsel %vm1531, %v2247, 0.0
        %2259 = vadd.xlane.f32.xlu0 %v2258
        %v2260 = vpop.xlane.xlu0 %2259
        %v2261 = vsel %vm1531, %v2249, 0.0
        %2262 = vadd.xlane.f32.xlu0 %v2261
        %v2263 = vpop.xlane.xlu0 %2262
        %v2264 = vsel %vm1531, %v2251, 0.0
        %2265 = vadd.xlane.f32.xlu0 %v2264
        %v2266 = vpop.xlane.xlu0 %2265
        %v2267 = vsel %vm1531, %v2253, 0.0
        %2268 = vadd.xlane.f32.xlu0 %v2267
        %v2269 = vpop.xlane.xlu0 %2268
        %v2270 = vsel %vm1531, %v2255, 0.0
        %2271 = vadd.xlane.f32.xlu0 %v2270
        %v2272 = vpop.xlane.xlu0 %2271
        %v2273 = vsel %vm1531, %v2257, 0.0
        %2274 = vadd.xlane.f32.xlu0 %v2273
        %v2275 = vpop.xlane.xlu0 %2274
        %v2276 = vrcp.pop %v2260
        %v2277 = vrcp.pop %v2263
        %v2278 = vrcp.pop %v2266
        %v2279 = vrcp.pop %v2269
        %v2280 = vrcp.pop %v2272
        %v2281 = vrcp.pop %v2275
        %v2282 = vmul.f32 %v2247, %v2276
        %v2283 = vmul.f32 %v2249, %v2277
        %v2284 = vmul.f32 %v2251, %v2278
        %v2285 = vmul.f32 %v2253, %v2279
        %v2286 = vmul.f32 %v2255, %v2280
        %v2287 = vmul.f32 %v2257, %v2281
        %v2288 = vpack.c.bf16 %v2283, %v2282
        %v2289 = vpack.c.bf16 %v2285, %v2284
        %v2290 = vpack.c.bf16 %v2287, %v2286
        %2291 = vrot.lane.b32.xlu0 %v1443, 80
        %v2292 = vpop.permute.xlu0 %2291
        %2293 = vrot.lane.b32.xlu0 %v1444, 80
        %v2294 = vpop.permute.xlu0 %2293
        %2295 = vrot.lane.b32.xlu0 %v1445, 80
        %v2296 = vpop.permute.xlu0 %2295
        %v2301 = vsel %vm1531, %v2288, 0
        %v2304 = vsel %vm1531, %v2289, 0
        %v2307 = vsel %vm1531, %v2290, 0
        %2309 = vmatprep.subr.bf16.mxu0 0
        %2310 = vmatpush1.bf16.msra.mxu0 %v2292
        %2311 = vmatprep.subr.bf16.mxu0 0
        %2312 = vmatpush1.bf16.msra.mxu0 %v2294
        %2313 = vmatprep.subr.bf16.mxu0 0
        %2314 = vmatpush1.bf16.msra.mxu0 %v2296
        %2315 = vmatprep.subr.bf16.mxu0 0
        %2316 = vmatpush1.bf16.msra.mxu0 0
        %2317 = vmatprep.subr.bf16.mxu0 0
        %2318 = vmatpush1.bf16.msra.mxu0 0
        %2319 = vmatprep.subr.bf16.mxu0 0
        %2320 = vmatpush1.bf16.msra.mxu0 0
        %2321 = vmatprep.subr.bf16.mxu0 0
        %2322 = vmatpush1.bf16.msra.mxu0 0
        %2323 = vmatprep.subr.bf16.mxu0 0
        %2324 = vmatpush1.bf16.msra.mxu0 0
        %2325 = vmatprep.subr.bf16.mxu0 0
        %2326 = vmatpush1.bf16.msra.mxu0 0
        %2327 = vmatprep.subr.bf16.mxu0 0
        %2328 = vmatpush1.bf16.msra.mxu0 0
        %2329 = vmatprep.subr.bf16.mxu0 0
        %2330 = vmatpush1.bf16.msra.mxu0 0
        %2331 = vmatprep.subr.bf16.mxu0 0
        %2332 = vmatpush1.bf16.msra.mxu0 0
        %2333 = vmatprep.subr.bf16.mxu0 0
        %2334 = vmatpush1.bf16.msra.mxu0 0
        %2335 = vmatprep.subr.bf16.mxu0 0
        %2336 = vmatpush1.bf16.msra.mxu0 0
        %2337 = vmatprep.subr.bf16.mxu0 0
        %2338 = vmatpush1.bf16.msra.mxu0 0
        %2339 = vmatprep.subr.bf16.mxu0 0
        %2340 = vmatpush1.bf16.msra.mxu0 0
        %2341 = vmatprep.mubr.bf16.mxu0 0
        %2342 = vmatmul.mubr.bf16.gmra.mrb[0].mxu0 %v2301
        %v2343 = vpop.f32.mrb[0].mxu0
        %v2344 = vadd.f32 0.0, %v2343
        %v2345 = vpop.f32.mrb[0].mxu0
        %v2346 = vpop.f32.mrb[0].mxu0
        %v2347 = vadd.f32 0.0, %v2346
        %v2348 = vpop.f32.mrb[0].mxu0
        %2349 = vmatprep.mubr.bf16.mxu0 0
        %2350 = vmatmul.mubr.bf16.gmra.mrb[0].mxu0 %v2304
        %v2351 = vpop.f32.mrb[0].mxu0
        %v2352 = vadd.f32 0.0, %v2351
        %v2353 = vpop.f32.mrb[0].mxu0
        %v2354 = vpop.f32.mrb[0].mxu0
        %v2355 = vadd.f32 0.0, %v2354
        %v2356 = vpop.f32.mrb[0].mxu0
        %2357 = vmatprep.mubr.bf16.mxu0 0
        %2358 = vmatmul.mubr.bf16.gmra.mrb[0].mxu0 %v2307
        %v2359 = vpop.f32.mrb[0].mxu0
        %v2360 = vadd.f32 0.0, %v2359
        %v2361 = vpop.f32.mrb[0].mxu0
        %v2362 = vpop.f32.mrb[0].mxu0
        %v2363 = vadd.f32 0.0, %v2362
        %v2364 = vpop.f32.mrb[0].mxu0
        %2365 = vdwg.mxu0
        %2372 = vrot.lane.b32.xlu0 %v1882, 16
        %v2373 = vpop.permute.xlu0 %2372
        %2374 = vrot.lane.b32.xlu0 %v1885, 16
        %v2375 = vpop.permute.xlu0 %2374
        %2376 = vrot.lane.b32.xlu0 %v1890, 16
        %v2377 = vpop.permute.xlu0 %2376
        %2378 = vrot.lane.b32.xlu0 %v1893, 16
        %v2379 = vpop.permute.xlu0 %2378
        %2380 = vrot.lane.b32.xlu0 %v1898, 16
        %v2381 = vpop.permute.xlu0 %2380
        %2382 = vrot.lane.b32.xlu0 %v1901, 16
        %v2383 = vpop.permute.xlu0 %2382
        %2396 = vrot.lane.b32.xlu0 %v2113, 32
        %v2397 = vpop.permute.xlu0 %2396
        %2398 = vrot.lane.b32.xlu0 %v2116, 32
        %v2399 = vpop.permute.xlu0 %2398
        %2400 = vrot.lane.b32.xlu0 %v2121, 32
        %v2401 = vpop.permute.xlu0 %2400
        %2402 = vrot.lane.b32.xlu0 %v2124, 32
        %v2403 = vpop.permute.xlu0 %2402
        %2404 = vrot.lane.b32.xlu0 %v2129, 32
        %v2405 = vpop.permute.xlu0 %2404
        %2406 = vrot.lane.b32.xlu0 %v2132, 32
        %v2407 = vpop.permute.xlu0 %2406
        %2420 = vrot.lane.b32.xlu0 %v2344, 48
        %v2421 = vpop.permute.xlu0 %2420
        %2422 = vrot.lane.b32.xlu0 %v2347, 48
        %v2423 = vpop.permute.xlu0 %2422
        %2424 = vrot.lane.b32.xlu0 %v2352, 48
        %v2425 = vpop.permute.xlu0 %2424
        %2426 = vrot.lane.b32.xlu0 %v2355, 48
        %v2427 = vpop.permute.xlu0 %2426
        %2428 = vrot.lane.b32.xlu0 %v2360, 48
        %v2429 = vpop.permute.xlu0 %2428
        %2430 = vrot.lane.b32.xlu0 %v2363, 48
        %v2431 = vpop.permute.xlu0 %2430
        %v2438 = vsel %vm1455, %v1645, %v2373
        %v2439 = vsel %vm1455, %v1648, %v2375
        %v2440 = vsel %vm1455, %v1653, %v2377
        %v2441 = vsel %vm1455, %v1656, %v2379
        %v2442 = vsel %vm1455, %v1661, %v2381
        %v2443 = vsel %vm1455, %v1664, %v2383
        %vm2444 = vcmask 261120
        %v2445 = vsel %vm2444, %v2438, %v2397
        %v2446 = vsel %vm2444, %v2439, %v2399
        %v2447 = vsel %vm2444, %v2440, %v2401
        %v2448 = vsel %vm2444, %v2441, %v2403
        %v2449 = vsel %vm2444, %v2442, %v2405
        %v2450 = vsel %vm2444, %v2443, %v2407
        %v2451 = vsel %vm1531, %v2445, %v2421
        %v2452 = vsel %vm1531, %v2446, %v2423
        %v2453 = vsel %vm1531, %v2447, %v2425
        %v2454 = vsel %vm1531, %v2448, %v2427
        %v2455 = vsel %vm1531, %v2449, %v2429
        %v2456 = vsel %vm1531, %v2450, %v2431
        %v2457 = vld [vmem:[%s1009] sm:$0xf]
        %v2458 = vld [vmem:[%s1009 + $0x4] sm:$0xf]
        %v2459 = vld [vmem:[%s1009 + $0x8] sm:$0xf]
        %v2460 = vld [vmem:[%s1009 + $0xc] sm:$0xf]
        %v2461 = vld [vmem:[%s1009 + $0x10] sm:$0xf]
        %v2462 = vld [vmem:[%s1009 + $0x14] sm:$0xf]
        %v2463 = vld [vmem:[%s1009 + $0x18] sm:$0xf]
        %v2464 = vld [vmem:[%s1009 + $0x1c] sm:$0xf]
        %v2465 = vpack.c.bf16 %v2452, %v2451
        %v2466 = vpack.c.bf16 %v2454, %v2453
        %v2467 = vpack.c.bf16 %v2456, %v2455
        %v2468 = vld [vmem:[%s1012] sm:$0x1]
        %v2470 = vlaneseq
        %v2471 = vshrl.u32 %v2470, 7
        %v2472 = vsub.s32 0, %v2471
        %v2473 = vrot.slane %v2468, %v2472
        %v2483 = vunpack.c.l.b16 %v2457
        %v2484 = vunpack.c.l.b16 %v2458
        %v2485 = vunpack.c.l.b16 %v2459
        %v2486 = vunpack.c.l.b16 %v2460
        %v2487 = vunpack.c.l.b16 %v2461
        %v2488 = vunpack.c.l.b16 %v2462
        %v2489 = vunpack.c.l.b16 %v2463
        %v2490 = vunpack.c.l.b16 %v2464
        %v2491 = vpack.c.b16 %v2484, %v2483
        %v2492 = vpack.c.b16 %v2486, %v2485
        %v2493 = vpack.c.b16 %v2488, %v2487
        %v2494 = vpack.c.b16 %v2490, %v2489
        %v2500 = vsel %vm1186, %v2465, 0
        %v2503 = vsel %vm1186, %v2466, 0
        %v2506 = vsel %vm1186, %v2467, 0
        %2508 = vmatprep.subr.bf16.mxu0 0
        %2509 = vmatpush1.bf16.msra.mxu0 %v2491
        %2510 = vmatprep.subr.bf16.mxu0 0
        %2511 = vmatpush1.bf16.msra.mxu0 %v2492
        %2512 = vmatprep.subr.bf16.mxu0 0
        %2513 = vmatpush1.bf16.msra.mxu0 %v2493
        %2514 = vmatprep.subr.bf16.mxu0 0
        %2515 = vmatpush1.bf16.msra.mxu0 %v2494
        %2516 = vmatprep.subr.bf16.mxu0 0
        %2517 = vmatpush1.bf16.msra.mxu0 0
        %2518 = vmatprep.subr.bf16.mxu0 0
        %2519 = vmatpush1.bf16.msra.mxu0 0
        %2520 = vmatprep.subr.bf16.mxu0 0
        %2521 = vmatpush1.bf16.msra.mxu0 0
        %2522 = vmatprep.subr.bf16.mxu0 0
        %2523 = vmatpush1.bf16.msra.mxu0 0
        %2524 = vmatprep.subr.bf16.mxu0 0
        %2525 = vmatpush1.bf16.msra.mxu0 0
        %2526 = vmatprep.subr.bf16.mxu0 0
        %2527 = vmatpush1.bf16.msra.mxu0 0
        %2528 = vmatprep.subr.bf16.mxu0 0
        %2529 = vmatpush1.bf16.msra.mxu0 0
        %2530 = vmatprep.subr.bf16.mxu0 0
        %2531 = vmatpush1.bf16.msra.mxu0 0
        %2532 = vmatprep.subr.bf16.mxu0 0
        %2533 = vmatpush1.bf16.msra.mxu0 0
        %2534 = vmatprep.subr.bf16.mxu0 0
        %2535 = vmatpush1.bf16.msra.mxu0 0
        %2536 = vmatprep.subr.bf16.mxu0 0
        %2537 = vmatpush1.bf16.msra.mxu0 0
        %2538 = vmatprep.subr.bf16.mxu0 0
        %2539 = vmatpush1.bf16.msra.mxu0 0
        %2540 = vmatprep.mubr.bf16.mxu0 0
        %2541 = vmatmul.mubr.bf16.gmra.mrb[0].mxu0 %v2500
        %v2542 = vpop.f32.mrb[0].mxu0
        %v2543 = vadd.f32 %v2473, %v2542
        %v2544 = vpop.f32.mrb[0].mxu0
        %v2545 = vpop.f32.mrb[0].mxu0
        %v2546 = vadd.f32 %v2473, %v2545
        %v2547 = vpop.f32.mrb[0].mxu0
        %2548 = vmatprep.mubr.bf16.mxu0 0
        %2549 = vmatmul.mubr.bf16.gmra.mrb[0].mxu0 %v2503
        %v2550 = vpop.f32.mrb[0].mxu0
        %v2551 = vadd.f32 %v2473, %v2550
        %v2552 = vpop.f32.mrb[0].mxu0
        %v2553 = vpop.f32.mrb[0].mxu0
        %v2554 = vadd.f32 %v2473, %v2553
        %v2555 = vpop.f32.mrb[0].mxu0
        %2556 = vmatprep.mubr.bf16.mxu0 0
        %2557 = vmatmul.mubr.bf16.gmra.mrb[0].mxu0 %v2506
        %v2558 = vpop.f32.mrb[0].mxu0
        %v2559 = vadd.f32 %v2473, %v2558
        %v2560 = vpop.f32.mrb[0].mxu0
        %v2561 = vpop.f32.mrb[0].mxu0
        %v2562 = vadd.f32 %v2473, %v2561
        %v2563 = vpop.f32.mrb[0].mxu0
        %2564 = vdwg.mxu0
        %v2565 = vadd.f32 %v1178, %v2543
        %v2566 = vadd.f32 %v1179, %v2546
        %v2567 = vadd.f32 %v1180, %v2551
        %v2568 = vadd.f32 %v1181, %v2554
        %v2569 = vadd.f32 %v1182, %v2559
        %v2570 = vadd.f32 %v1183, %v2562
        %v2571 = vld [vmem:[%s1015] sm:$0x1]
        %v2572 = vld [vmem:[%s1018] sm:$0x1]
        %v2573 = vsel %vm1186, %v2565, 0.0
        %2574 = vadd.xlane.f32.xlu0 %v2573
        %v2575 = vpop.xlane.xlu0 %2574
        %v2576 = vsel %vm1186, %v2566, 0.0
        %2577 = vadd.xlane.f32.xlu0 %v2576
        %v2578 = vpop.xlane.xlu0 %2577
        %v2579 = vsel %vm1186, %v2567, 0.0
        %2580 = vadd.xlane.f32.xlu0 %v2579
        %v2581 = vpop.xlane.xlu0 %2580
        %v2582 = vsel %vm1186, %v2568, 0.0
        %2583 = vadd.xlane.f32.xlu0 %v2582
        %v2584 = vpop.xlane.xlu0 %2583
        %v2585 = vsel %vm1186, %v2569, 0.0
        %2586 = vadd.xlane.f32.xlu0 %v2585
        %v2587 = vpop.xlane.xlu0 %2586
        %v2588 = vsel %vm1186, %v2570, 0.0
        %2589 = vadd.xlane.f32.xlu0 %v2588
        %v2590 = vpop.xlane.xlu0 %2589
        %v2591 = vmul.f32 %v2575, %v1205
        %v2592 = vmul.f32 %v2578, %v1205
        %v2593 = vmul.f32 %v2581, %v1205
        %v2594 = vmul.f32 %v2584, %v1205
        %v2595 = vmul.f32 %v2587, %v1205
        %v2596 = vmul.f32 %v2590, %v1205
        %v2597 = vsub.f32 %v2565, %v2591
        %v2598 = vsub.f32 %v2566, %v2592
        %v2599 = vsub.f32 %v2567, %v2593
        %v2600 = vsub.f32 %v2568, %v2594
        %v2601 = vsub.f32 %v2569, %v2595
        %v2602 = vsub.f32 %v2570, %v2596
        %v2603 = vmul.f32 %v2597, %v2597
        %v2604 = vmul.f32 %v2598, %v2598
        %v2605 = vmul.f32 %v2599, %v2599
        %v2606 = vmul.f32 %v2600, %v2600
        %v2607 = vmul.f32 %v2601, %v2601
        %v2608 = vmul.f32 %v2602, %v2602
        %v2609 = vsel %vm1186, %v2603, 0.0
        %2610 = vadd.xlane.f32.xlu0 %v2609
        %v2611 = vpop.xlane.xlu0 %2610
        %v2612 = vsel %vm1186, %v2604, 0.0
        %2613 = vadd.xlane.f32.xlu0 %v2612
        %v2614 = vpop.xlane.xlu0 %2613
        %v2615 = vsel %vm1186, %v2605, 0.0
        %2616 = vadd.xlane.f32.xlu0 %v2615
        %v2617 = vpop.xlane.xlu0 %2616
        %v2618 = vsel %vm1186, %v2606, 0.0
        %2619 = vadd.xlane.f32.xlu0 %v2618
        %v2620 = vpop.xlane.xlu0 %2619
        %v2621 = vsel %vm1186, %v2607, 0.0
        %2622 = vadd.xlane.f32.xlu0 %v2621
        %v2623 = vpop.xlane.xlu0 %2622
        %v2624 = vsel %vm1186, %v2608, 0.0
        %2625 = vadd.xlane.f32.xlu0 %v2624
        %v2626 = vpop.xlane.xlu0 %2625
        %v2627 = vmul.f32 %v2611, %v1205
        %v2628 = vmul.f32 %v2614, %v1205
        %v2629 = vmul.f32 %v2617, %v1205
        %v2630 = vmul.f32 %v2620, %v1205
        %v2631 = vmul.f32 %v2623, %v1205
        %v2632 = vmul.f32 %v2626, %v1205
        %v2633 = vadd.f32 %v2627, 1e-06
        %v2634 = vadd.f32 %v2628, 1e-06
        %v2635 = vadd.f32 %v2629, 1e-06
        %v2636 = vadd.f32 %v2630, 1e-06
        %v2637 = vadd.f32 %v2631, 1e-06
        %v2638 = vadd.f32 %v2632, 1e-06
        %v2639 = vrsqrt.pop %v2633
        %v2640 = vrsqrt.pop %v2634
        %v2641 = vrsqrt.pop %v2635
        %v2642 = vrsqrt.pop %v2636
        %v2643 = vrsqrt.pop %v2637
        %v2644 = vrsqrt.pop %v2638
        %v2645 = vmul.f32 %v2597, %v2639
        %v2646 = vmul.f32 %v2598, %v2640
        %v2647 = vmul.f32 %v2599, %v2641
        %v2648 = vmul.f32 %v2600, %v2642
        %v2649 = vmul.f32 %v2601, %v2643
        %v2650 = vmul.f32 %v2602, %v2644
        %v2652 = vlaneseq
        %v2653 = vshrl.u32 %v2652, 7
        %v2654 = vsub.s32 0, %v2653
        %v2655 = vrot.slane %v2571, %v2654
        %v2657 = vmul.f32 %v2645, %v2655
        %v2658 = vmul.f32 %v2646, %v2655
        %v2659 = vmul.f32 %v2647, %v2655
        %v2660 = vmul.f32 %v2648, %v2655
        %v2661 = vmul.f32 %v2649, %v2655
        %v2662 = vmul.f32 %v2650, %v2655
        %v2664 = vlaneseq
        %v2665 = vshrl.u32 %v2664, 7
        %v2666 = vsub.s32 0, %v2665
        %v2667 = vrot.slane %v2572, %v2666
        %v2669 = vadd.f32 %v2657, %v2667
        %v2670 = vadd.f32 %v2658, %v2667
        %v2671 = vadd.f32 %v2659, %v2667
        %v2672 = vadd.f32 %v2660, %v2667
        %v2673 = vadd.f32 %v2661, %v2667
        %v2674 = vadd.f32 %v2662, %v2667
        %v2675 = vld [vmem:[%s1023] sm:$0xff]
        %v2676 = vld [vmem:[%s1023 + $0x8] sm:$0xff]
        %v2677 = vld [vmem:[%s1023 + $0x10] sm:$0xff]
        %v2678 = vld [vmem:[%s1023 + $0x18] sm:$0xff]
        %v2679 = vld [vmem:[%s1023 + $0x20] sm:$0xff]
        %v2680 = vld [vmem:[%s1023 + $0x28] sm:$0xff]
        %v2681 = vld [vmem:[%s1023 + $0x30] sm:$0xff]
        %v2682 = vld [vmem:[%s1023 + $0x38] sm:$0xff]
        %v2683 = vpack.c.bf16 %v2670, %v2669
        %v2684 = vpack.c.bf16 %v2672, %v2671
        %v2685 = vpack.c.bf16 %v2674, %v2673
        %v2686 = vld [vmem:[%s1027] sm:$0x3]
        %v2688 = vlaneseq
        %v2689 = vshrl.u32 %v2688, 7
        %v2690 = vsub.s32 0, %v2689
        %v2691 = vrot.slane %v2686, %v2690
        %v2692 = vlaneseq
        %v2693 = vshrl.u32 %v2692, 7
        %v2694 = vsub.s32 1, %v2693
        %v2695 = vrot.slane %v2686, %v2694
        %v2706 = vunpack.c.l.b16 %v2675
        %v2707 = vunpack.c.h.b16 %v2675
        %v2708 = vunpack.c.l.b16 %v2676
        %v2709 = vunpack.c.h.b16 %v2676
        %v2710 = vunpack.c.l.b16 %v2677
        %v2711 = vunpack.c.h.b16 %v2677
        %v2712 = vunpack.c.l.b16 %v2678
        %v2713 = vunpack.c.h.b16 %v2678
        %v2714 = vunpack.c.l.b16 %v2679
        %v2715 = vunpack.c.h.b16 %v2679
        %v2716 = vunpack.c.l.b16 %v2680
        %v2717 = vunpack.c.h.b16 %v2680
        %v2718 = vunpack.c.l.b16 %v2681
        %v2719 = vunpack.c.h.b16 %v2681
        %v2720 = vunpack.c.l.b16 %v2682
        %v2721 = vunpack.c.h.b16 %v2682
        %v2722 = vpack.c.b16 %v2708, %v2706
        %v2723 = vpack.c.b16 %v2709, %v2707
        %v2724 = vpack.c.b16 %v2712, %v2710
        %v2725 = vpack.c.b16 %v2713, %v2711
        %v2726 = vpack.c.b16 %v2716, %v2714
        %v2727 = vpack.c.b16 %v2717, %v2715
        %v2728 = vpack.c.b16 %v2720, %v2718
        %v2729 = vpack.c.b16 %v2721, %v2719
        %v2739 = vsel %vm1186, %v2683, 0
        %v2742 = vsel %vm1186, %v2684, 0
        %v2745 = vsel %vm1186, %v2685, 0
        %2747 = vmatprep.subr.bf16.mxu0 %v2723
        %2748 = vmatpush1.bf16.msra.mxu0 %v2722
        %2749 = vmatprep.subr.bf16.mxu0 %v2725
        %2750 = vmatpush1.bf16.msra.mxu0 %v2724
        %2751 = vmatprep.subr.bf16.mxu0 %v2727
        %2752 = vmatpush1.bf16.msra.mxu0 %v2726
        %2753 = vmatprep.subr.bf16.mxu0 %v2729
        %2754 = vmatpush1.bf16.msra.mxu0 %v2728
        %2755 = vmatprep.subr.bf16.mxu0 0
        %2756 = vmatpush1.bf16.msra.mxu0 0
        %2757 = vmatprep.subr.bf16.mxu0 0
        %2758 = vmatpush1.bf16.msra.mxu0 0
        %2759 = vmatprep.subr.bf16.mxu0 0
        %2760 = vmatpush1.bf16.msra.mxu0 0
        %2761 = vmatprep.subr.bf16.mxu0 0
        %2762 = vmatpush1.bf16.msra.mxu0 0
        %2763 = vmatprep.subr.bf16.mxu0 0
        %2764 = vmatpush1.bf16.msra.mxu0 0
        %2765 = vmatprep.subr.bf16.mxu0 0
        %2766 = vmatpush1.bf16.msra.mxu0 0
        %2767 = vmatprep.subr.bf16.mxu0 0
        %2768 = vmatpush1.bf16.msra.mxu0 0
        %2769 = vmatprep.subr.bf16.mxu0 0
        %2770 = vmatpush1.bf16.msra.mxu0 0
        %2771 = vmatprep.subr.bf16.mxu0 0
        %2772 = vmatpush1.bf16.msra.mxu0 0
        %2773 = vmatprep.subr.bf16.mxu0 0
        %2774 = vmatpush1.bf16.msra.mxu0 0
        %2775 = vmatprep.subr.bf16.mxu0 0
        %2776 = vmatpush1.bf16.msra.mxu0 0
        %2777 = vmatprep.subr.bf16.mxu0 0
        %2778 = vmatpush1.bf16.msra.mxu0 0
        %2779 = vmatprep.mubr.bf16.mxu0 0
        %2780 = vmatmul.mubr.bf16.gmra.mrb[0].mxu0 %v2739
        %v2781 = vpop.f32.mrb[0].mxu0
        %v2782 = vadd.f32 %v2691, %v2781
        %v2783 = vpop.f32.mrb[0].mxu0
        %v2784 = vadd.f32 %v2695, %v2783
        %v2785 = vpop.f32.mrb[0].mxu0
        %v2786 = vadd.f32 %v2691, %v2785
        %v2787 = vpop.f32.mrb[0].mxu0
        %v2788 = vadd.f32 %v2695, %v2787
        %2789 = vmatprep.mubr.bf16.mxu0 0
        %2790 = vmatmul.mubr.bf16.gmra.mrb[0].mxu0 %v2742
        %v2791 = vpop.f32.mrb[0].mxu0
        %v2792 = vadd.f32 %v2691, %v2791
        %v2793 = vpop.f32.mrb[0].mxu0
        %v2794 = vadd.f32 %v2695, %v2793
        %v2795 = vpop.f32.mrb[0].mxu0
        %v2796 = vadd.f32 %v2691, %v2795
        %v2797 = vpop.f32.mrb[0].mxu0
        %v2798 = vadd.f32 %v2695, %v2797
        %2799 = vmatprep.mubr.bf16.mxu0 0
        %2800 = vmatmul.mubr.bf16.gmra.mrb[0].mxu0 %v2745
        %v2801 = vpop.f32.mrb[0].mxu0
        %v2802 = vadd.f32 %v2691, %v2801
        %v2803 = vpop.f32.mrb[0].mxu0
        %v2804 = vadd.f32 %v2695, %v2803
        %v2805 = vpop.f32.mrb[0].mxu0
        %v2806 = vadd.f32 %v2691, %v2805
        %v2807 = vpop.f32.mrb[0].mxu0
        %v2808 = vadd.f32 %v2695, %v2807
        %2809 = vdwg.mxu0
        %v2810 = vmul.f32 %v2782, %v2782
        %v2811 = vmul.f32 %v2784, %v2784
        %v2812 = vmul.f32 %v2786, %v2786
        %v2813 = vmul.f32 %v2788, %v2788
        %v2814 = vmul.f32 %v2792, %v2792
        %v2815 = vmul.f32 %v2794, %v2794
        %v2816 = vmul.f32 %v2796, %v2796
        %v2817 = vmul.f32 %v2798, %v2798
        %v2818 = vmul.f32 %v2802, %v2802
        %v2819 = vmul.f32 %v2804, %v2804
        %v2820 = vmul.f32 %v2806, %v2806
        %v2821 = vmul.f32 %v2808, %v2808
        %v2822 = vmul.f32 %v2782, %v2810
        %v2823 = vmul.f32 %v2784, %v2811
        %v2824 = vmul.f32 %v2786, %v2812
        %v2825 = vmul.f32 %v2788, %v2813
        %v2826 = vmul.f32 %v2792, %v2814
        %v2827 = vmul.f32 %v2794, %v2815
        %v2828 = vmul.f32 %v2796, %v2816
        %v2829 = vmul.f32 %v2798, %v2817
        %v2830 = vmul.f32 %v2802, %v2818
        %v2831 = vmul.f32 %v2804, %v2819
        %v2832 = vmul.f32 %v2806, %v2820
        %v2833 = vmul.f32 %v2808, %v2821
        %v2834 = vmul.f32 %v2822, 0.044715
        %v2835 = vmul.f32 %v2823, 0.044715
        %v2836 = vmul.f32 %v2824, 0.044715
        %v2837 = vmul.f32 %v2825, 0.044715
        %v2838 = vmul.f32 %v2826, 0.044715
        %v2839 = vmul.f32 %v2827, 0.044715
        %v2840 = vmul.f32 %v2828, 0.044715
        %v2841 = vmul.f32 %v2829, 0.044715
        %v2842 = vmul.f32 %v2830, 0.044715
        %v2843 = vmul.f32 %v2831, 0.044715
        %v2844 = vmul.f32 %v2832, 0.044715
        %v2845 = vmul.f32 %v2833, 0.044715
        %v2846 = vadd.f32 %v2782, %v2834
        %v2847 = vadd.f32 %v2784, %v2835
        %v2848 = vadd.f32 %v2786, %v2836
        %v2849 = vadd.f32 %v2788, %v2837
        %v2850 = vadd.f32 %v2792, %v2838
        %v2851 = vadd.f32 %v2794, %v2839
        %v2852 = vadd.f32 %v2796, %v2840
        %v2853 = vadd.f32 %v2798, %v2841
        %v2854 = vadd.f32 %v2802, %v2842
        %v2855 = vadd.f32 %v2804, %v2843
        %v2856 = vadd.f32 %v2806, %v2844
        %v2857 = vadd.f32 %v2808, %v2845
        %v2858 = vmul.f32 %v2846, 0.7978846
        %v2859 = vmul.f32 %v2847, 0.7978846
        %v2860 = vmul.f32 %v2848, 0.7978846
        %v2861 = vmul.f32 %v2849, 0.7978846
        %v2862 = vmul.f32 %v2850, 0.7978846
        %v2863 = vmul.f32 %v2851, 0.7978846
        %v2864 = vmul.f32 %v2852, 0.7978846
        %v2865 = vmul.f32 %v2853, 0.7978846
        %v2866 = vmul.f32 %v2854, 0.7978846
        %v2867 = vmul.f32 %v2855, 0.7978846
        %v2868 = vmul.f32 %v2856, 0.7978846
        %v2869 = vmul.f32 %v2857, 0.7978846
        %v2870 = vtanh.pop %v2858
        %v2871 = vtanh.pop %v2859
        %v2872 = vtanh.pop %v2860
        %v2873 = vtanh.pop %v2861
        %v2874 = vtanh.pop %v2862
        %v2875 = vtanh.pop %v2863
        %v2876 = vtanh.pop %v2864
        %v2877 = vtanh.pop %v2865
        %v2878 = vtanh.pop %v2866
        %v2879 = vtanh.pop %v2867
        %v2880 = vtanh.pop %v2868
        %v2881 = vtanh.pop %v2869
        %v2882 = vadd.f32 %v2870, 1.0
        %v2883 = vadd.f32 %v2871, 1.0
        %v2884 = vadd.f32 %v2872, 1.0
        %v2885 = vadd.f32 %v2873, 1.0
        %v2886 = vadd.f32 %v2874, 1.0
        %v2887 = vadd.f32 %v2875, 1.0
        %v2888 = vadd.f32 %v2876, 1.0
        %v2889 = vadd.f32 %v2877, 1.0
        %v2890 = vadd.f32 %v2878, 1.0
        %v2891 = vadd.f32 %v2879, 1.0
        %v2892 = vadd.f32 %v2880, 1.0
        %v2893 = vadd.f32 %v2881, 1.0
        %v2894 = vmul.f32 %v2882, 0.5
        %v2895 = vmul.f32 %v2883, 0.5
        %v2896 = vmul.f32 %v2884, 0.5
        %v2897 = vmul.f32 %v2885, 0.5
        %v2898 = vmul.f32 %v2886, 0.5
        %v2899 = vmul.f32 %v2887, 0.5
        %v2900 = vmul.f32 %v2888, 0.5
        %v2901 = vmul.f32 %v2889, 0.5
        %v2902 = vmul.f32 %v2890, 0.5
        %v2903 = vmul.f32 %v2891, 0.5
        %v2904 = vmul.f32 %v2892, 0.5
        %v2905 = vmul.f32 %v2893, 0.5
        %v2906 = vmul.f32 %v2782, %v2894
        %v2907 = vmul.f32 %v2784, %v2895
        %v2908 = vmul.f32 %v2786, %v2896
        %v2909 = vmul.f32 %v2788, %v2897
        %v2910 = vmul.f32 %v2792, %v2898
        %v2911 = vmul.f32 %v2794, %v2899
        %v2912 = vmul.f32 %v2796, %v2900
        %v2913 = vmul.f32 %v2798, %v2901
        %v2914 = vmul.f32 %v2802, %v2902
        %v2915 = vmul.f32 %v2804, %v2903
        %v2916 = vmul.f32 %v2806, %v2904
        %v2917 = vmul.f32 %v2808, %v2905
        %v2918 = vld [vmem:[%s1032] sm:$0xf]
        %v2919 = vld [vmem:[%s1032 + $0x4] sm:$0xf]
        %v2920 = vld [vmem:[%s1032 + $0x8] sm:$0xf]
        %v2921 = vld [vmem:[%s1032 + $0xc] sm:$0xf]
        %v2922 = vld [vmem:[%s1032 + $0x10] sm:$0xf]
        %v2923 = vld [vmem:[%s1032 + $0x14] sm:$0xf]
        %v2924 = vld [vmem:[%s1032 + $0x18] sm:$0xf]
        %v2925 = vld [vmem:[%s1032 + $0x1c] sm:$0xf]
        %v2926 = vld [vmem:[%s1032 + $0x20] sm:$0xf]
        %v2927 = vld [vmem:[%s1032 + $0x24] sm:$0xf]
        %v2928 = vld [vmem:[%s1032 + $0x28] sm:$0xf]
        %v2929 = vld [vmem:[%s1032 + $0x2c] sm:$0xf]
        %v2930 = vld [vmem:[%s1032 + $0x30] sm:$0xf]
        %v2931 = vld [vmem:[%s1032 + $0x34] sm:$0xf]
        %v2932 = vld [vmem:[%s1032 + $0x38] sm:$0xf]
        %v2933 = vld [vmem:[%s1032 + $0x3c] sm:$0xf]
        %v2934 = vld [vmem:[%s1032 + $0x40] sm:$0xf]
        %v2935 = vld [vmem:[%s1032 + $0x44] sm:$0xf]
        %v2936 = vld [vmem:[%s1032 + $0x48] sm:$0xf]
        %v2937 = vld [vmem:[%s1032 + $0x4c] sm:$0xf]
        %v2938 = vld [vmem:[%s1032 + $0x50] sm:$0xf]
        %v2939 = vld [vmem:[%s1032 + $0x54] sm:$0xf]
        %v2940 = vld [vmem:[%s1032 + $0x58] sm:$0xf]
        %v2941 = vld [vmem:[%s1032 + $0x5c] sm:$0xf]
        %v2942 = vld [vmem:[%s1032 + $0x60] sm:$0xf]
        %v2943 = vld [vmem:[%s1032 + $0x64] sm:$0xf]
        %v2944 = vld [vmem:[%s1032 + $0x68] sm:$0xf]
        %v2945 = vld [vmem:[%s1032 + $0x6c] sm:$0xf]
        %v2946 = vld [vmem:[%s1032 + $0x70] sm:$0xf]
        %v2947 = vld [vmem:[%s1032 + $0x74] sm:$0xf]
        %v2948 = vld [vmem:[%s1032 + $0x78] sm:$0xf]
        %v2949 = vld [vmem:[%s1032 + $0x7c] sm:$0xf]
        %v2950 = vpack.c.bf16 %v2908, %v2906
        %v2951 = vpack.c.bf16 %v2909, %v2907
        %v2952 = vpack.c.bf16 %v2912, %v2910
        %v2953 = vpack.c.bf16 %v2913, %v2911
        %v2954 = vpack.c.bf16 %v2916, %v2914
        %v2955 = vpack.c.bf16 %v2917, %v2915
        %v2956 = vld [vmem:[%s1035] sm:$0x1]
        %v2958 = vlaneseq
        %v2959 = vshrl.u32 %v2958, 7
        %v2960 = vsub.s32 0, %v2959
        %v2961 = vrot.slane %v2956, %v2960
        %v2995 = vunpack.c.l.b16 %v2918
        %v2996 = vunpack.c.l.b16 %v2919
        %v2997 = vunpack.c.l.b16 %v2920
        %v2998 = vunpack.c.l.b16 %v2921
        %v2999 = vunpack.c.l.b16 %v2922
        %v3000 = vunpack.c.l.b16 %v2923
        %v3001 = vunpack.c.l.b16 %v2924
        %v3002 = vunpack.c.l.b16 %v2925
        %v3003 = vunpack.c.l.b16 %v2926
        %v3004 = vunpack.c.l.b16 %v2927
        %v3005 = vunpack.c.l.b16 %v2928
        %v3006 = vunpack.c.l.b16 %v2929
        %v3007 = vunpack.c.l.b16 %v2930
        %v3008 = vunpack.c.l.b16 %v2931
        %v3009 = vunpack.c.l.b16 %v2932
        %v3010 = vunpack.c.l.b16 %v2933
        %v3011 = vunpack.c.l.b16 %v2934
        %v3012 = vunpack.c.l.b16 %v2935
        %v3013 = vunpack.c.l.b16 %v2936
        %v3014 = vunpack.c.l.b16 %v2937
        %v3015 = vunpack.c.l.b16 %v2938
        %v3016 = vunpack.c.l.b16 %v2939
        %v3017 = vunpack.c.l.b16 %v2940
        %v3018 = vunpack.c.l.b16 %v2941
        %v3019 = vunpack.c.l.b16 %v2942
        %v3020 = vunpack.c.l.b16 %v2943
        %v3021 = vunpack.c.l.b16 %v2944
        %v3022 = vunpack.c.l.b16 %v2945
        %v3023 = vunpack.c.l.b16 %v2946
        %v3024 = vunpack.c.l.b16 %v2947
        %v3025 = vunpack.c.l.b16 %v2948
        %v3026 = vunpack.c.l.b16 %v2949
        %v3027 = vpack.c.b16 %v2996, %v2995
        %v3028 = vpack.c.b16 %v2998, %v2997
        %v3029 = vpack.c.b16 %v3000, %v2999
        %v3030 = vpack.c.b16 %v3002, %v3001
        %v3031 = vpack.c.b16 %v3004, %v3003
        %v3032 = vpack.c.b16 %v3006, %v3005
        %v3033 = vpack.c.b16 %v3008, %v3007
        %v3034 = vpack.c.b16 %v3010, %v3009
        %v3035 = vpack.c.b16 %v3012, %v3011
        %v3036 = vpack.c.b16 %v3014, %v3013
        %v3037 = vpack.c.b16 %v3016, %v3015
        %v3038 = vpack.c.b16 %v3018, %v3017
        %v3039 = vpack.c.b16 %v3020, %v3019
        %v3040 = vpack.c.b16 %v3022, %v3021
        %v3041 = vpack.c.b16 %v3024, %v3023
        %v3042 = vpack.c.b16 %v3026, %v3025
        %3059 = vmatprep.subr.bf16.mxu0 0
        %3060 = vmatpush1.bf16.msra.mxu0 %v3027
        %3061 = vmatprep.subr.bf16.mxu0 0
        %3062 = vmatpush1.bf16.msra.mxu0 %v3028
        %3063 = vmatprep.subr.bf16.mxu0 0
        %3064 = vmatpush1.bf16.msra.mxu0 %v3029
        %3065 = vmatprep.subr.bf16.mxu0 0
        %3066 = vmatpush1.bf16.msra.mxu0 %v3030
        %3067 = vmatprep.subr.bf16.mxu0 0
        %3068 = vmatpush1.bf16.msra.mxu0 %v3031
        %3069 = vmatprep.subr.bf16.mxu0 0
        %3070 = vmatpush1.bf16.msra.mxu0 %v3032
        %3071 = vmatprep.subr.bf16.mxu0 0
        %3072 = vmatpush1.bf16.msra.mxu0 %v3033
        %3073 = vmatprep.subr.bf16.mxu0 0
        %3074 = vmatpush1.bf16.msra.mxu0 %v3034
        %3075 = vmatprep.subr.bf16.mxu0 0
        %3076 = vmatpush1.bf16.msra.mxu0 %v3035
        %3077 = vmatprep.subr.bf16.mxu0 0
        %3078 = vmatpush1.bf16.msra.mxu0 %v3036
        %3079 = vmatprep.subr.bf16.mxu0 0
        %3080 = vmatpush1.bf16.msra.mxu0 %v3037
        %3081 = vmatprep.subr.bf16.mxu0 0
        %3082 = vmatpush1.bf16.msra.mxu0 %v3038
        %3083 = vmatprep.subr.bf16.mxu0 0
        %3084 = vmatpush1.bf16.msra.mxu0 %v3039
        %3085 = vmatprep.subr.bf16.mxu0 0
        %3086 = vmatpush1.bf16.msra.mxu0 %v3040
        %3087 = vmatprep.subr.bf16.mxu0 0
        %3088 = vmatpush1.bf16.msra.mxu0 %v3041
        %3089 = vmatprep.subr.bf16.mxu0 0
        %3090 = vmatpush1.bf16.msra.mxu0 %v3042
        %3091 = vmatprep.mubr.bf16.mxu0 %v2951
        %3092 = vmatmul.mubr.bf16.gmra.mrb[0].mxu0 %v2950
        %v3093 = vpop.f32.mrb[0].mxu0
        %v3094 = vadd.f32 %v2961, %v3093
        %v3095 = vpop.f32.mrb[0].mxu0
        %v3096 = vpop.f32.mrb[0].mxu0
        %v3097 = vadd.f32 %v2961, %v3096
        %v3098 = vpop.f32.mrb[0].mxu0
        %3099 = vmatprep.mubr.bf16.mxu0 %v2953
        %3100 = vmatmul.mubr.bf16.gmra.mrb[0].mxu0 %v2952
        %v3101 = vpop.f32.mrb[0].mxu0
        %v3102 = vadd.f32 %v2961, %v3101
        %v3103 = vpop.f32.mrb[0].mxu0
        %v3104 = vpop.f32.mrb[0].mxu0
        %v3105 = vadd.f32 %v2961, %v3104
        %v3106 = vpop.f32.mrb[0].mxu0
        %3107 = vmatprep.mubr.bf16.mxu0 %v2955
        %3108 = vmatmul.mubr.bf16.gmra.mrb[0].mxu0 %v2954
        %v3109 = vpop.f32.mrb[0].mxu0
        %v3110 = vadd.f32 %v2961, %v3109
        %v3111 = vpop.f32.mrb[0].mxu0
        %v3112 = vpop.f32.mrb[0].mxu0
        %v3113 = vadd.f32 %v2961, %v3112
        %v3114 = vpop.f32.mrb[0].mxu0
        %3115 = vdwg.mxu0
        %v3116 = vld [vmem:[%s1040] sm:$0xf]
        %v3117 = vld [vmem:[%s1040 + $0x4] sm:$0xf]
        %v3118 = vld [vmem:[%s1040 + $0x8] sm:$0xf]
        %v3119 = vld [vmem:[%s1040 + $0xc] sm:$0xf]
        %v3120 = vld [vmem:[%s1040 + $0x10] sm:$0xf]
        %v3121 = vld [vmem:[%s1040 + $0x14] sm:$0xf]
        %v3122 = vld [vmem:[%s1040 + $0x18] sm:$0xf]
        %v3123 = vld [vmem:[%s1040 + $0x1c] sm:$0xf]
        %v3124 = vpack.c.bf16 %v3097, %v3094
        %v3125 = vpack.c.bf16 %v3105, %v3102
        %v3126 = vpack.c.bf16 %v3113, %v3110
        %v3127 = vld [vmem:[%s1043] sm:$0x1]
        %v3129 = vlaneseq
        %v3130 = vshrl.u32 %v3129, 7
        %v3131 = vsub.s32 0, %v3130
        %v3132 = vrot.slane %v3127, %v3131
        %v3142 = vunpack.c.l.b16 %v3116
        %v3143 = vunpack.c.l.b16 %v3117
        %v3144 = vunpack.c.l.b16 %v3118
        %v3145 = vunpack.c.l.b16 %v3119
        %v3146 = vunpack.c.l.b16 %v3120
        %v3147 = vunpack.c.l.b16 %v3121
        %v3148 = vunpack.c.l.b16 %v3122
        %v3149 = vunpack.c.l.b16 %v3123
        %v3150 = vpack.c.b16 %v3143, %v3142
        %v3151 = vpack.c.b16 %v3145, %v3144
        %v3152 = vpack.c.b16 %v3147, %v3146
        %v3153 = vpack.c.b16 %v3149, %v3148
        %v3159 = vsel %vm1186, %v3124, 0
        %v3162 = vsel %vm1186, %v3125, 0
        %v3165 = vsel %vm1186, %v3126, 0
        %3167 = vmatprep.subr.bf16.mxu0 0
        %3168 = vmatpush1.bf16.msra.mxu0 %v3150
        %3169 = vmatprep.subr.bf16.mxu0 0
        %3170 = vmatpush1.bf16.msra.mxu0 %v3151
        %3171 = vmatprep.subr.bf16.mxu0 0
        %3172 = vmatpush1.bf16.msra.mxu0 %v3152
        %3173 = vmatprep.subr.bf16.mxu0 0
        %3174 = vmatpush1.bf16.msra.mxu0 %v3153
        %3175 = vmatprep.subr.bf16.mxu0 0
        %3176 = vmatpush1.bf16.msra.mxu0 0
        %3177 = vmatprep.subr.bf16.mxu0 0
        %3178 = vmatpush1.bf16.msra.mxu0 0
        %3179 = vmatprep.subr.bf16.mxu0 0
        %3180 = vmatpush1.bf16.msra.mxu0 0
        %3181 = vmatprep.subr.bf16.mxu0 0
        %3182 = vmatpush1.bf16.msra.mxu0 0
        %3183 = vmatprep.subr.bf16.mxu0 0
        %3184 = vmatpush1.bf16.msra.mxu0 0
        %3185 = vmatprep.subr.bf16.mxu0 0
        %3186 = vmatpush1.bf16.msra.mxu0 0
        %3187 = vmatprep.subr.bf16.mxu0 0
        %3188 = vmatpush1.bf16.msra.mxu0 0
        %3189 = vmatprep.subr.bf16.mxu0 0
        %3190 = vmatpush1.bf16.msra.mxu0 0
        %3191 = vmatprep.subr.bf16.mxu0 0
        %3192 = vmatpush1.bf16.msra.mxu0 0
        %3193 = vmatprep.subr.bf16.mxu0 0
        %3194 = vmatpush1.bf16.msra.mxu0 0
        %3195 = vmatprep.subr.bf16.mxu0 0
        %3196 = vmatpush1.bf16.msra.mxu0 0
        %3197 = vmatprep.subr.bf16.mxu0 0
        %3198 = vmatpush1.bf16.msra.mxu0 0
        %3199 = vmatprep.mubr.bf16.mxu0 0
        %3200 = vmatmul.mubr.bf16.gmra.mrb[0].mxu0 %v3159
        %v3201 = vpop.f32.mrb[0].mxu0
        %v3202 = vadd.f32 %v3132, %v3201
        %v3203 = vpop.f32.mrb[0].mxu0
        %v3204 = vpop.f32.mrb[0].mxu0
        %v3205 = vadd.f32 %v3132, %v3204
        %v3206 = vpop.f32.mrb[0].mxu0
        %3207 = vmatprep.mubr.bf16.mxu0 0
        %3208 = vmatmul.mubr.bf16.gmra.mrb[0].mxu0 %v3162
        %v3209 = vpop.f32.mrb[0].mxu0
        %v3210 = vadd.f32 %v3132, %v3209
        %v3211 = vpop.f32.mrb[0].mxu0
        %v3212 = vpop.f32.mrb[0].mxu0
        %v3213 = vadd.f32 %v3132, %v3212
        %v3214 = vpop.f32.mrb[0].mxu0
        %3215 = vmatprep.mubr.bf16.mxu0 0
        %3216 = vmatmul.mubr.bf16.gmra.mrb[0].mxu0 %v3165
        %v3217 = vpop.f32.mrb[0].mxu0
        %v3218 = vadd.f32 %v3132, %v3217
        %v3219 = vpop.f32.mrb[0].mxu0
        %v3220 = vpop.f32.mrb[0].mxu0
        %v3221 = vadd.f32 %v3132, %v3220
        %v3222 = vpop.f32.mrb[0].mxu0
        %3223 = vdwg.mxu0
        %v3224 = vmax.f32 %v3202, 0.0
        %v3225 = vmax.f32 %v3205, 0.0
        %v3226 = vmax.f32 %v3210, 0.0
        %v3227 = vmax.f32 %v3213, 0.0
        %v3228 = vmax.f32 %v3218, 0.0
        %v3229 = vmax.f32 %v3221, 0.0
        %v3230 = vld [vmem:[%s1048] sm:$0xf]
        %v3231 = vld [vmem:[%s1048 + $0x4] sm:$0xf]
        %v3232 = vpack.c.bf16 %v3225, %v3224
        %v3233 = vpack.c.bf16 %v3227, %v3226
        %v3234 = vpack.c.bf16 %v3229, %v3228
        %v3235 = vld [vmem:[%s1051] sm:$0x1]
        %v3237 = vlaneseq
        %v3238 = vshrl.u32 %v3237, 7
        %v3239 = vsub.s32 0, %v3238
        %v3240 = vrot.slane %v3235, %v3239
        %v3244 = vunpack.c.l.b16 %v3230
        %v3245 = vunpack.c.l.b16 %v3231
        %v3246 = vpack.c.b16 %v3245, %v3244
        %v3249 = vsel %vm1455, %v3232, 0
        %v3252 = vsel %vm1455, %v3233, 0
        %v3255 = vsel %vm1455, %v3234, 0
        %3257 = vmatprep.subr.bf16.mxu0 0
        %3258 = vmatpush1.bf16.msra.mxu0 %v3246
        %3259 = vmatprep.subr.bf16.mxu0 0
        %3260 = vmatpush1.bf16.msra.mxu0 0
        %3261 = vmatprep.subr.bf16.mxu0 0
        %3262 = vmatpush1.bf16.msra.mxu0 0
        %3263 = vmatprep.subr.bf16.mxu0 0
        %3264 = vmatpush1.bf16.msra.mxu0 0
        %3265 = vmatprep.subr.bf16.mxu0 0
        %3266 = vmatpush1.bf16.msra.mxu0 0
        %3267 = vmatprep.subr.bf16.mxu0 0
        %3268 = vmatpush1.bf16.msra.mxu0 0
        %3269 = vmatprep.subr.bf16.mxu0 0
        %3270 = vmatpush1.bf16.msra.mxu0 0
        %3271 = vmatprep.subr.bf16.mxu0 0
        %3272 = vmatpush1.bf16.msra.mxu0 0
        %3273 = vmatprep.subr.bf16.mxu0 0
        %3274 = vmatpush1.bf16.msra.mxu0 0
        %3275 = vmatprep.subr.bf16.mxu0 0
        %3276 = vmatpush1.bf16.msra.mxu0 0
        %3277 = vmatprep.subr.bf16.mxu0 0
        %3278 = vmatpush1.bf16.msra.mxu0 0
        %3279 = vmatprep.subr.bf16.mxu0 0
        %3280 = vmatpush1.bf16.msra.mxu0 0
        %3281 = vmatprep.subr.bf16.mxu0 0
        %3282 = vmatpush1.bf16.msra.mxu0 0
        %3283 = vmatprep.subr.bf16.mxu0 0
        %3284 = vmatpush1.bf16.msra.mxu0 0
        %3285 = vmatprep.subr.bf16.mxu0 0
        %3286 = vmatpush1.bf16.msra.mxu0 0
        %3287 = vmatprep.subr.bf16.mxu0 0
        %3288 = vmatpush1.bf16.msra.mxu0 0
        %3289 = vmatprep.mubr.bf16.mxu0 0
        %3290 = vmatmul.mubr.bf16.gmra.mrb[0].mxu0 %v3249
        %v3291 = vpop.f32.mrb[0].mxu0
        %v3292 = vadd.f32 %v3240, %v3291
        %v3293 = vpop.f32.mrb[0].mxu0
        %v3294 = vpop.f32.mrb[0].mxu0
        %v3295 = vadd.f32 %v3240, %v3294
        %v3296 = vpop.f32.mrb[0].mxu0
        %3297 = vmatprep.mubr.bf16.mxu0 0
        %3298 = vmatmul.mubr.bf16.gmra.mrb[0].mxu0 %v3252
        %v3299 = vpop.f32.mrb[0].mxu0
        %v3300 = vadd.f32 %v3240, %v3299
        %v3301 = vpop.f32.mrb[0].mxu0
        %v3302 = vpop.f32.mrb[0].mxu0
        %v3303 = vadd.f32 %v3240, %v3302
        %v3304 = vpop.f32.mrb[0].mxu0
        %3305 = vmatprep.mubr.bf16.mxu0 0
        %3306 = vmatmul.mubr.bf16.gmra.mrb[0].mxu0 %v3255
        %v3307 = vpop.f32.mrb[0].mxu0
        %v3308 = vadd.f32 %v3240, %v3307
        %v3309 = vpop.f32.mrb[0].mxu0
        %v3310 = vpop.f32.mrb[0].mxu0
        %v3311 = vadd.f32 %v3240, %v3310
        %v3312 = vpop.f32.mrb[0].mxu0
        %3313 = vdwg.mxu0
        %v3314 = vmul.f32 %v3292, 0.1
        %v3315 = vmul.f32 %v3295, 0.1
        %v3316 = vmul.f32 %v3300, 0.1
        %v3317 = vmul.f32 %v3303, 0.1
        %v3318 = vmul.f32 %v3308, 0.1
        %v3319 = vmul.f32 %v3311, 0.1
        %v3320 = vadd.f32 %v2565, %v3094
        %v3321 = vadd.f32 %v2566, %v3097
        %v3322 = vadd.f32 %v2567, %v3102
        %v3323 = vadd.f32 %v2568, %v3105
        %v3324 = vadd.f32 %v2569, %v3110
        %v3325 = vadd.f32 %v2570, %v3113
        %v3326 = vadd.f32 %v3320, %v3314
        %v3327 = vadd.f32 %v3321, %v3315
        %v3328 = vadd.f32 %v3322, %v3316
        %v3329 = vadd.f32 %v3323, %v3317
        %v3330 = vadd.f32 %v3324, %v3318
        %v3331 = vadd.f32 %v3325, %v3319
        %3332 = vst.msk [vmem:[#allocation2] sm:$0xff] %vm1186, %v3326
        %3333 = vst.msk [vmem:[#allocation2 + $0x8] sm:$0xff] %vm1186, %v3327
        %3334 = vst.msk [vmem:[#allocation2 + $0x10] sm:$0xff] %vm1186, %v3328
        %3335 = vst.msk [vmem:[#allocation2 + $0x18] sm:$0xff] %vm1186, %v3329
        %3336 = vst.msk [vmem:[#allocation2 + $0x20] sm:$0xff] %vm1186, %v3330
        %3337 = vst.msk [vmem:[#allocation2 + $0x28] sm:$0xff] %vm1186, %v3331
        %p3338 = scmp.eq.s32.totalorder %s43, 1
        // Predicated region
        $region129: #{mote_net_forward.1} parent=123 // pred_check
          %p3339 = pneg %p3338
        $region130: #{mote_net_forward.1} parent=123 // pred_check_branch
          %3341 = sbr.rel (%p3339) target = $region132
        $region131: #{mote_net_forward.1} parent=123 // pred_region
          %v3342 = vld [vmem:[%s22] sm:$0x1]
          %v3343 = vld [vmem:[%s23] sm:$0x1]
          %v3346 = vrot.slane %v3329, 7
          %vm3347 = vcmask 1041409
          %v3348 = vsel %vm3347, %v3346, %v3326
          %vm3350 = vcmask 517120
          %v3351 = vsel %vm3350, %v3348, 0.0
          %3352 = vadd.xlane.f32.xlu0 %v3351
          %v3353 = vpop.xlane.xlu0 %3352
          %v3354 = vmul.f32 %v3353, %v1205
          %v3356 = vrot.slane %v3354, 1
          %v3359 = vsub.f32 %v3326, %v3354
          %v3360 = vsub.f32 %v3329, %v3356
          %v3361 = vmul.f32 %v3359, %v3359
          %v3362 = vmul.f32 %v3360, %v3360
          %v3365 = vrot.slane %v3362, 7
          %v3366 = vsel %vm3347, %v3365, %v3361
          %v3368 = vsel %vm3350, %v3366, 0.0
          %3369 = vadd.xlane.f32.xlu0 %v3368
          %v3370 = vpop.xlane.xlu0 %3369
          %v3371 = vmul.f32 %v3370, %v1205
          %v3372 = vadd.f32 %v3371, 1e-06
          %v3373 = vrsqrt.pop %v3372
          %v3375 = vrot.slane %v3373, 1
          %v3378 = vmul.f32 %v3359, %v3373
          %v3379 = vmul.f32 %v3360, %v3375
          %v3381 = vlaneseq
          %v3382 = vshrl.u32 %v3381, 7
          %v3383 = vsub.s32 0, %v3382
          %v3384 = vrot.slane %v3342, %v3383
          %v3386 = vmul.f32 %v3378, %v3384
          %v3387 = vmul.f32 %v3379, %v3384
          %v3389 = vlaneseq
          %v3390 = vshrl.u32 %v3389, 7
          %v3391 = vsub.s32 0, %v3390
          %v3392 = vrot.slane %v3343, %v3391
          %v3394 = vadd.f32 %v3386, %v3392
          %v3395 = vadd.f32 %v3387, %v3392
          %v3398 = vrot.slane %v3395, 7
          %v3399 = vsel %vm3347, %v3398, %v3394
          %3401 = vst.msk [vmem:[#allocation4] sm:$0x3] %vm3350, %v3399
          %v3402 = vmul.f32 %v3394, %v3394
          %v3403 = vmul.f32 %v3395, %v3395
          %v3406 = vrot.slane %v3403, 7
          %v3407 = vsel %vm3347, %v3406, %v3402
          %v3409 = vsel %vm3350, %v3407, 0.0
          %3410 = vadd.xlane.f32.xlu0 %v3409
          %v3411 = vpop.xlane.xlu0 %3410
          %v3412 = vmax.f32 %v3411, 1e-24
          %v3413 = vrsqrt.pop %v3412
          %v3415 = vrot.slane %v3413, 1
          %v3418 = vmul.f32 %v3394, %v3413
          %v3419 = vmul.f32 %v3395, %v3415
          %v3420 = vld [vmem:[%s24] sm:$0xff]
          %v3421 = vld [vmem:[%s24 + $0x8] sm:$0xff]
          %v3422 = vld [vmem:[%s24 + $0x10] sm:$0xff]
          %v3423 = vld [vmem:[%s24 + $0x18] sm:$0xff]
          %v3424 = vld [vmem:[%s24 + $0x20] sm:$0xff]
          %v3425 = vld [vmem:[%s24 + $0x28] sm:$0xff]
          %v3426 = vld [vmem:[%s24 + $0x30] sm:$0xff]
          %v3427 = vld [vmem:[%s24 + $0x38] sm:$0xff]
          %v3428 = vld [vmem:[%s24 + $0x40] sm:$0xff]
          %v3429 = vld [vmem:[%s24 + $0x48] sm:$0xff]
          %v3430 = vld [vmem:[%s24 + $0x50] sm:$0xff]
          %v3431 = vld [vmem:[%s24 + $0x58] sm:$0xff]
          %v3432 = vld [vmem:[%s24 + $0x60] sm:$0xff]
          %v3433 = vld [vmem:[%s24 + $0x68] sm:$0xff]
          %v3434 = vld [vmem:[%s24 + $0x70] sm:$0xff]
          %v3435 = vld [vmem:[%s24 + $0x78] sm:$0xff]
          %v3436 = vmul.f32 %v3420, %v3420
          %v3437 = vmul.f32 %v3421, %v3421
          %v3438 = vmul.f32 %v3422, %v3422
          %v3439 = vmul.f32 %v3423, %v3423
          %v3440 = vmul.f32 %v3424, %v3424
          %v3441 = vmul.f32 %v3425, %v3425
          %v3442 = vmul.f32 %v3426, %v3426
          %v3443 = vmul.f32 %v3427, %v3427
          %v3444 = vmul.f32 %v3428, %v3428
          %v3445 = vmul.f32 %v3429, %v3429
          %v3446 = vmul.f32 %v3430, %v3430
          %v3447 = vmul.f32 %v3431, %v3431
          %v3448 = vmul.f32 %v3432, %v3432
          %v3449 = vmul.f32 %v3433, %v3433
          %v3450 = vmul.f32 %v3434, %v3434
          %v3451 = vmul.f32 %v3435, %v3435
          %v3452 = vsel %vm1186, %v3436, 0.0
          %3453 = vadd.xlane.f32.xlu0 %v3452
          %v3454 = vpop.xlane.xlu0 %3453
          %v3455 = vsel %vm1186, %v3437, 0.0
          %3456 = vadd.xlane.f32.xlu0 %v3455
          %v3457 = vpop.xlane.xlu0 %3456
          %v3458 = vsel %vm1186, %v3438, 0.0
          %3459 = vadd.xlane.f32.xlu0 %v3458
          %v3460 = vpop.xlane.xlu0 %3459
          %v3461 = vsel %vm1186, %v3439, 0.0
          %3462 = vadd.xlane.f32.xlu0 %v3461
          %v3463 = vpop.xlane.xlu0 %3462
          %v3464 = vsel %vm1186, %v3440, 0.0
          %3465 = vadd.xlane.f32.xlu0 %v3464
          %v3466 = vpop.xlane.xlu0 %3465
          %v3467 = vsel %vm1186, %v3441, 0.0
          %3468 = vadd.xlane.f32.xlu0 %v3467
          %v3469 = vpop.xlane.xlu0 %3468
          %v3470 = vsel %vm1186, %v3442, 0.0
          %3471 = vadd.xlane.f32.xlu0 %v3470
          %v3472 = vpop.xlane.xlu0 %3471
          %v3473 = vsel %vm1186, %v3443, 0.0
          %3474 = vadd.xlane.f32.xlu0 %v3473
          %v3475 = vpop.xlane.xlu0 %3474
          %v3476 = vsel %vm1186, %v3444, 0.0
          %3477 = vadd.xlane.f32.xlu0 %v3476
          %v3478 = vpop.xlane.xlu0 %3477
          %v3479 = vsel %vm1186, %v3445, 0.0
          %3480 = vadd.xlane.f32.xlu0 %v3479
          %v3481 = vpop.xlane.xlu0 %3480
          %v3482 = vsel %vm1186, %v3446, 0.0
          %3483 = vadd.xlane.f32.xlu0 %v3482
          %v3484 = vpop.xlane.xlu0 %3483
          %v3485 = vsel %vm1186, %v3447, 0.0
          %3486 = vadd.xlane.f32.xlu0 %v3485
          %v3487 = vpop.xlane.xlu0 %3486
          %v3488 = vsel %vm1186, %v3448, 0.0
          %3489 = vadd.xlane.f32.xlu0 %v3488
          %v3490 = vpop.xlane.xlu0 %3489
          %v3491 = vsel %vm1186, %v3449, 0.0
          %3492 = vadd.xlane.f32.xlu0 %v3491
          %v3493 = vpop.xlane.xlu0 %3492
          %v3494 = vsel %vm1186, %v3450, 0.0
          %3495 = vadd.xlane.f32.xlu0 %v3494
          %v3496 = vpop.xlane.xlu0 %3495
          %v3497 = vsel %vm1186, %v3451, 0.0
          %3498 = vadd.xlane.f32.xlu0 %v3497
          %v3499 = vpop.xlane.xlu0 %3498
          %v3500 = vmax.f32 %v3454, 1e-24
          %v3501 = vmax.f32 %v3457, 1e-24
          %v3502 = vmax.f32 %v3460, 1e-24
          %v3503 = vmax.f32 %v3463, 1e-24
          %v3504 = vmax.f32 %v3466, 1e-24
          %v3505 = vmax.f32 %v3469, 1e-24
          %v3506 = vmax.f32 %v3472, 1e-24
          %v3507 = vmax.f32 %v3475, 1e-24
          %v3508 = vmax.f32 %v3478, 1e-24
          %v3509 = vmax.f32 %v3481, 1e-24
          %v3510 = vmax.f32 %v3484, 1e-24
          %v3511 = vmax.f32 %v3487, 1e-24
          %v3512 = vmax.f32 %v3490, 1e-24
          %v3513 = vmax.f32 %v3493, 1e-24
          %v3514 = vmax.f32 %v3496, 1e-24
          %v3515 = vmax.f32 %v3499, 1e-24
          %v3516 = vrsqrt.pop %v3500
          %v3517 = vrsqrt.pop %v3501
          %v3518 = vrsqrt.pop %v3502
          %v3519 = vrsqrt.pop %v3503
          %v3520 = vrsqrt.pop %v3504
          %v3521 = vrsqrt.pop %v3505
          %v3522 = vrsqrt.pop %v3506
          %v3523 = vrsqrt.pop %v3507
          %v3524 = vrsqrt.pop %v3508
          %v3525 = vrsqrt.pop %v3509
          %v3526 = vrsqrt.pop %v3510
          %v3527 = vrsqrt.pop %v3511
          %v3528 = vrsqrt.pop %v3512
          %v3529 = vrsqrt.pop %v3513
          %v3530 = vrsqrt.pop %v3514
          %v3531 = vrsqrt.pop %v3515
          %v3532 = vmul.f32 %v3420, %v3516
          %v3533 = vmul.f32 %v3421, %v3517
          %v3534 = vmul.f32 %v3422, %v3518
          %v3535 = vmul.f32 %v3423, %v3519
          %v3536 = vmul.f32 %v3424, %v3520
          %v3537 = vmul.f32 %v3425, %v3521
          %v3538 = vmul.f32 %v3426, %v3522
          %v3539 = vmul.f32 %v3427, %v3523
          %v3540 = vmul.f32 %v3428, %v3524
          %v3541 = vmul.f32 %v3429, %v3525
          %v3542 = vmul.f32 %v3430, %v3526
          %v3543 = vmul.f32 %v3431, %v3527
          %v3544 = vmul.f32 %v3432, %v3528
          %v3545 = vmul.f32 %v3433, %v3529
          %v3546 = vmul.f32 %v3434, %v3530
          %v3547 = vmul.f32 %v3435, %v3531
          %v3550 = vrot.slane %v3419, 7
          %v3551 = vsel %vm3347, %v3550, %v3418
          %v3552 = vsel %vm1186, %v3551, 0
          %v3555 = vsel %vm1186, %v3532, 0
          %v3558 = vsel %vm1186, %v3533, 0
          %v3561 = vsel %vm1186, %v3534, 0
          %v3564 = vsel %vm1186, %v3535, 0
          %v3567 = vsel %vm1186, %v3536, 0
          %v3570 = vsel %vm1186, %v3537, 0
          %v3573 = vsel %vm1186, %v3538, 0
          %v3576 = vsel %vm1186, %v3539, 0
          %v3579 = vsel %vm1186, %v3540, 0
          %v3582 = vsel %vm1186, %v3541, 0
          %v3585 = vsel %vm1186, %v3542, 0
          %v3588 = vsel %vm1186, %v3543, 0
          %v3591 = vsel %vm1186, %v3544, 0
          %v3594 = vsel %vm1186, %v3545, 0
          %v3597 = vsel %vm1186, %v3546, 0
          %v3600 = vsel %vm1186, %v3547, 0
          %3602 = vmatprep.subr.mxu0 0.0
          %3603 = vmatpush1.xpose.msra.mxu0 %v3555
          %3604 = vmatprep.subr.mxu0 0.0
          %3605 = vmatpush1.xpose.msra.mxu0 %v3558
          %3606 = vmatprep.subr.mxu0 0.0
          %3607 = vmatpush1.xpose.msra.mxu0 %v3561
          %3608 = vmatprep.subr.mxu0 0.0
          %3609 = vmatpush1.xpose.msra.mxu0 %v3564
          %3610 = vmatprep.subr.mxu0 0.0
          %3611 = vmatpush1.xpose.msra.mxu0 %v3567
          %3612 = vmatprep.subr.mxu0 0.0
          %3613 = vmatpush1.xpose.msra.mxu0 %v3570
          %3614 = vmatprep.subr.mxu0 0.0
          %3615 = vmatpush1.xpose.msra.mxu0 %v3573
          %3616 = vmatprep.subr.mxu0 0.0
          %3617 = vmatpush1.xpose.msra.mxu0 %v3576
          %3618 = vmatprep.subr.mxu0 0.0
          %3619 = vmatpush1.xpose.msra.mxu0 %v3579
          %3620 = vmatprep.subr.mxu0 0.0
          %3621 = vmatpush1.xpose.msra.mxu0 %v3582
          %3622 = vmatprep.subr.mxu0 0.0
          %3623 = vmatpush1.xpose.msra.mxu0 %v3585
          %3624 = vmatprep.subr.mxu0 0.0
          %3625 = vmatpush1.xpose.msra.mxu0 %v3588
          %3626 = vmatprep.subr.mxu0 0.0
          %3627 = vmatpush1.xpose.msra.mxu0 %v3591
          %3628 = vmatprep.subr.mxu0 0.0
          %3629 = vmatpush1.xpose.msra.mxu0 %v3594
          %3630 = vmatprep.subr.mxu0 0.0
          %3631 = vmatpush1.xpose.msra.mxu0 %v3597
          %3632 = vmatprep.subr.mxu0 0.0
          %3633 = vmatpush1.xpose.msra.mxu0 %v3600
          %3634 = vmatprep.subr.mxu0 0.0
          %3635 = vmatpush1.xpose.msra.mxu0 0.0
          %3636 = vmatprep.subr.mxu0 0.0
          %3637 = vmatpush1.xpose.msra.mxu0 0.0
          %3638 = vmatprep.subr.mxu0 0.0
          %3639 = vmatpush1.xpose.msra.mxu0 0.0
          %3640 = vmatprep.subr.mxu0 0.0
          %3641 = vmatpush1.xpose.msra.mxu0 0.0
          %3642 = vmatprep.subr.mxu0 0.0
          %3643 = vmatpush1.xpose.msra.mxu0 0.0
          %3644 = vmatprep.subr.mxu0 0.0
          %3645 = vmatpush1.xpose.msra.mxu0 0.0
          %3646 = vmatprep.subr.mxu0 0.0
          %3647 = vmatpush1.xpose.msra.mxu0 0.0
          %3648 = vmatprep.subr.mxu0 0.0
          %3649 = vmatpush1.xpose.msra.mxu0 0.0
          %3650 = vmatprep.subr.mxu0 0.0
          %3651 = vmatpush1.xpose.msra.mxu0 0.0
          %3652 = vmatprep.subr.mxu0 0.0
          %3653 = vmatpush1.xpose.msra.mxu0 0.0
          %3654 = vmatprep.subr.mxu0 0.0
          %3655 = vmatpush1.xpose.msra.mxu0 0.0
          %3656 = vmatprep.subr.mxu0 0.0
          %3657 = vmatpush1.xpose.msra.mxu0 0.0
          %3658 = vmatprep.subr.mxu0 0.0
          %3659 = vmatpush1.xpose.msra.mxu0 0.0
          %3660 = vmatprep.subr.mxu0 0.0
          %3661 = vmatpush1.xpose.msra.mxu0 0.0
          %3662 = vmatprep.subr.mxu0 0.0
          %3663 = vmatpush1.xpose.msra.mxu0 0.0
          %3664 = vmatprep.subr.mxu0 0.0
          %3665 = vmatpush1.xpose.msra.mxu0 0.0
          %3666 = vmatprep.mubr.f32.mxu0 0.0
          %3667 = vmatmul.mubr.f32.gmra.mrb[0].mxu0 %v3552
          %v3668 = vpop.f32.mrb[0].mxu0
          %v3669 = vadd.f32 0.0, %v3668
          %v3670 = vpop.f32.mrb[0].mxu0
          %3671 = vdwg.mxu0
          %v3672 = vld [vmem:[#allocation3] sm:$0x1]
          %v3674 = vlaneseq
          %v3675 = vshrl.u32 %v3674, 7
          %v3676 = vsub.s32 0, %v3675
          %v3677 = vrot.slane %v3672, %v3676
          %3678 = vset.pattern.permute.xlu0 0
          %3679 = vperm.xlu0 %3678, %v3677
          %v3680 = vpop.permute.xlu0 %3679
          %v3682 = vmul.f32 %v3669, %v3680
          %3683 = vst [vmem:[#allocation6] sm:$0x3] %v3682
        $region132: #{mote_net_forward.1} parent=123 // pred_fallthru
          _
        // Predicated region
        $region133: #{mote_net_forward.1} parent=123 // pred_check
          %p3684 = pneg %p682
        $region134: #{mote_net_forward.1} parent=123 // pred_check_branch
          %3686 = sbr.rel (%p3684) target = $region136
        $region135: #{mote_net_forward.1} parent=123 // pred_region
          %s3688 = ssub.s32 32, 32
          %3689 = vsyncadd [#allocation5], %s3688
          %s3691 = sshll.u32 [#allocation4], 4
          %s3692 = int_to_ptr.vmem [resolvable:$true] %s3691
          %3694 = dma.vmem_to_hbm [thread:$0]  %s3692, 32, %s26, [#allocation5]
        $region136: #{mote_net_forward.1} parent=123 // pred_fallthru
          _
        // Predicated region
        $region137: #{mote_net_forward.1} parent=123 // pred_check
          %p3695 = pneg %p703
        $region138: #{mote_net_forward.1} parent=123 // pred_check_branch
          %3697 = sbr.rel (%p3695) target = $region140
        $region139: #{mote_net_forward.1} parent=123 // pred_region
          %s3699 = ssub.s32 32, 32
          %3700 = vsyncadd [#allocation7], %s3699
          %s3702 = sshll.u32 [#allocation6], 4
          %s3703 = int_to_ptr.vmem [resolvable:$true] %s3702
          %3705 = dma.vmem_to_hbm [thread:$0]  %s3703, 32, %s27, [#allocation7]
        $region140: #{mote_net_forward.1} parent=123 // pred_fallthru
          _
        // Predicated region
        $region141: #{mote_net_forward.1} parent=123 // pred_check
          %p3706 = pneg %p682
        $region142: #{mote_net_forward.1} parent=123 // pred_check_branch
          %3708 = sbr.rel (%p3706) target = $region144
        $region143: #{mote_net_forward.1} parent=123 // pred_region
          %3709 = dma.done [#allocation5], 32
        $region144: #{mote_net_forward.1} parent=123 // pred_fallthru
          _
        // Predicated region
        $region145: #{mote_net_forward.1} parent=123 // pred_check
          %p3710 = pneg %p703
        $region146: #{mote_net_forward.1} parent=123 // pred_check_branch
          %3712 = sbr.rel (%p3710) target = $region148
        $region147: #{mote_net_forward.1} parent=123 // pred_region
          %3713 = dma.done [#allocation7], 32
        $region148: #{mote_net_forward.1} parent=123 // pred_fallthru
          _
      $region124: #{mote_net_forward.1} parent=5 // pred_fallthru
        _
      %p3714 = scmp.le.s32.totalorder 2, %s38
      // Predicated region
      $region149: #{mote_net_forward.1} parent=5 // pred_check
        %p3715 = pneg %p3714
      $region150: #{mote_net_forward.1} parent=5 // pred_check_branch
        %3717 = sbr.rel (%p3715) target = $region152
      $region151: #{mote_net_forward.1} parent=5 // pred_region
        %s3718 = ssub.s32 %s38, 2
      $region152: #{mote_net_forward.1} parent=5 // pred_fallthru
        _
    $region6: #{mote_net_forward.1} parent=1 // loop_footer
      %s42 = sadd.s32 1, %s38
    $region7: #{mote_net_forward.1} parent=1 // loop_footer_branch
      %37 = sbr.rel target = $region3
    $region8: #{mote_net_forward.1} parent=1 // loop_exit
      _
    %3719 = vsyncpa [#allocation5], 1
    %s3720 = scalar_lea.sflag [#allocation5], 1
    %3721 = vsyncpa %s3720, 1
    %3722 = vsyncpa [#allocation7], 1

</llo_original>
